<compile_context>
chip_gen: v6e
topology: v6e:2x2x1
jax: 0.10.0
libtpu: 0.0.40
codegen_flags: <defaults>
</compile_context>

<pallas_src>
import functools

import jax
import jax.numpy as jnp
from jax.experimental import pallas as pl
from jax.experimental.pallas import tpu as pltpu

EPS = 1e-5
KSIZE = 7
PAD = 3
TM = 256                      # M-tile rows (multiple of 8; VMEM-safe on v7x too)
TK_LARGE = 512                # K tile for large-K layers (multiple of 128)
VMEM_LIMIT = 48 * 1024 * 1024  # explicit scoped-VMEM budget (fits v7x's 64 MiB)


def _round_up(x, m):
    return (x + m - 1) // m * m


# ---------------------------------------------------------------------------
# Pallas kernel A: tiled matmul with f32 accumulation in the output block and
# per-M-tile channel sum / sum-of-squares for decoupled BatchNorm statistics.
# ---------------------------------------------------------------------------
def matmul_stats_kernel(a_ref, b_ref, o_ref, stats_ref):
    k = pl.program_id(1)

    @pl.when(k == 0)
    def _():
        o_ref[...] = jnp.zeros_like(o_ref)

    o_ref[...] += jnp.dot(a_ref[...], b_ref[...],
                          preferred_element_type=jnp.float32)

    @pl.when(k == pl.num_programs(1) - 1)
    def _():
        y = o_ref[...]                                     # (tm, Cp) f32
        stats_ref[0:1, :] = jnp.sum(y, axis=0, keepdims=True)
        stats_ref[1:2, :] = jnp.sum(y * y, axis=0, keepdims=True)
        stats_ref[2:8, :] = jnp.zeros((6, y.shape[1]), jnp.float32)


# ---------------------------------------------------------------------------
# Pallas kernel B: fused BatchNorm apply (+ optional ReLU), bf16 output.
# ---------------------------------------------------------------------------
def bn_act_kernel(y_ref, scale_ref, shift_ref, o_ref, *, apply_relu):
    out = y_ref[...] * scale_ref[...] + shift_ref[...]      # f32 math
    if apply_relu:
        out = jnp.maximum(out, 0.0)
    o_ref[...] = out.astype(o_ref.dtype)


# ---------------------------------------------------------------------------
# One conv7x7x7 -> BN (train stats) -> optional ReLU stage
# ---------------------------------------------------------------------------
def conv7_bn_act(x, w, gamma, beta, *, stride, apply_relu):
    """x: (N, D, H, W, Cin) float.  w: PyTorch layout (Cout, Cin, 7, 7, 7)."""
    N, D, H, W, Cin = x.shape
    Cout = w.shape[0]
    Do = (D + 2 * PAD - KSIZE) // stride + 1
    Ho = (H + 2 * PAD - KSIZE) // stride + 1
    Wo = (W + 2 * PAD - KSIZE) // stride + 1

    # ---- im2col (JAX glue), kept in bf16 ------------------------------------
    xb = x.astype(jnp.bfloat16)
    xp = jnp.pad(xb, ((0, 0), (PAD, PAD), (PAD, PAD), (PAD, PAD), (0, 0)))
    cols = []
    for kd in range(KSIZE):
        for kh in range(KSIZE):
            for kw in range(KSIZE):
                cols.append(xp[:, kd:kd + (Do - 1) * stride + 1:stride,
                                  kh:kh + (Ho - 1) * stride + 1:stride,
                                  kw:kw + (Wo - 1) * stride + 1:stride, :])
    patches = jnp.stack(cols, axis=4)            # (N, Do, Ho, Wo, 343, Cin)

    M = N * Do * Ho * Wo
    K = (KSIZE ** 3) * Cin
    A = patches.reshape(M, K)
    # weights -> (kd,kh,kw,cin,cout) -> (K, Cout), matching the patch K order
    B = jnp.transpose(w, (2, 3, 4, 1, 0)).reshape(K, Cout).astype(jnp.bfloat16)

    # ---- tiling --------------------------------------------------------------
    tm = min(TM, _round_up(M, 8))
    Mp = _round_up(M, tm)
    Kp0 = _round_up(K, 128)
    tk = Kp0 if Kp0 <= 1024 else TK_LARGE        # single K step for small-K layers
    Kp = _round_up(K, tk)
    Cp = _round_up(Cout, 128)
    n_mt = Mp // tm
    n_kt = Kp // tk

    A = jnp.pad(A, ((0, Mp - M), (0, Kp - K)))
    B = jnp.pad(B, ((0, Kp - K), (0, Cp - Cout)))

    conv_out, stats = pl.pallas_call(
        matmul_stats_kernel,
        out_shape=(jax.ShapeDtypeStruct((Mp, Cp), jnp.float32),
                   jax.ShapeDtypeStruct((n_mt * 8, Cp), jnp.float32)),
        grid_spec=pltpu.PrefetchScalarGridSpec(
            num_scalar_prefetch=0,
            grid=(n_mt, n_kt),
            in_specs=[
                pl.BlockSpec((tm, tk), lambda m, k: (m, k)),
                pl.BlockSpec((tk, Cp), lambda m, k: (k, 0)),
            ],
            out_specs=[
                pl.BlockSpec((tm, Cp), lambda m, k: (m, 0)),
                pl.BlockSpec((8, Cp), lambda m, k: (m, 0)),
            ],
        ),
        compiler_params=pltpu.CompilerParams(
            dimension_semantics=("parallel", "arbitrary"),
            vmem_limit_bytes=VMEM_LIMIT),
        cost_estimate=pl.CostEstimate(
            flops=2 * Mp * Kp * Cp,
            transcendentals=0,
            bytes_accessed=Mp * Kp * 2 + n_mt * Kp * Cp * 2
                           + Mp * Cp * 4 + n_mt * 8 * Cp * 4),
    )(A, B)

    # ---- global batch statistics (train-mode BN: biased variance) -----------
    stats = stats.reshape(n_mt, 8, Cp)
    col_sum = jnp.sum(stats[:, 0, :], axis=0)
    col_sq = jnp.sum(stats[:, 1, :], axis=0)
    mean = col_sum / M                            # zero-padded rows contribute 0
    var = jnp.maximum(col_sq / M - mean * mean, 0.0)
    g = jnp.pad(gamma.astype(jnp.float32), (0, Cp - Cout))
    b = jnp.pad(beta.astype(jnp.float32), (0, Cp - Cout))
    inv = jax.lax.rsqrt(var + EPS)
    scale = (g * inv).reshape(1, Cp)
    shift = (b - mean * g * inv).reshape(1, Cp)

    # ---- BN apply + ReLU (mem-bound pass, lane-dense bf16 output) ------------
    act = pl.pallas_call(
        functools.partial(bn_act_kernel, apply_relu=apply_relu),
        out_shape=jax.ShapeDtypeStruct((Mp, Cp), jnp.bfloat16),
        grid_spec=pltpu.PrefetchScalarGridSpec(
            num_scalar_prefetch=0,
            grid=(n_mt,),
            in_specs=[
                pl.BlockSpec((tm, Cp), lambda m: (m, 0)),
                pl.BlockSpec((1, Cp), lambda m: (0, 0)),
                pl.BlockSpec((1, Cp), lambda m: (0, 0)),
            ],
            out_specs=pl.BlockSpec((tm, Cp), lambda m: (m, 0)),
        ),
        compiler_params=pltpu.CompilerParams(
            dimension_semantics=("parallel",),
            vmem_limit_bytes=VMEM_LIMIT),
        cost_estimate=pl.CostEstimate(
            flops=2 * Mp * Cp,
            transcendentals=0,
            bytes_accessed=Mp * Cp * 4 + Mp * Cp * 2 + 2 * Cp * 4),
    )(conv_out, scale, shift)

    return act[:M, :Cout].reshape(N, Do, Ho, Wo, Cout)


# ---------------------------------------------------------------------------
# Parameters (deterministic; shapes follow the module's __init__)
# ---------------------------------------------------------------------------
def init_params(key, in_planes, num_blocks):
    def conv_w(k, cin, cout):
        fan_in = cin * KSIZE ** 3
        return (jax.random.normal(k, (cout, cin, KSIZE, KSIZE, KSIZE), jnp.float32)
                / jnp.sqrt(jnp.float32(fan_in)))

    keys = iter(jax.random.split(key, 64))
    params = {
        'conv1_w': conv_w(next(keys), in_planes, 64),
        'bn1_g': jnp.ones((64,), jnp.float32),     # PyTorch BN default init
        'bn1_b': jnp.zeros((64,), jnp.float32),
        'layers': [],
    }
    specs = [(64, 128, num_blocks[0]), (128, 128, num_blocks[1]),
             (128, 128, num_blocks[2])]
    for cin, cout, nb in specs:
        blocks = []
        c = cin
        for _ in range(nb):
            blocks.append({
                'w1': conv_w(next(keys), c, cout),
                'g1': jnp.ones((cout,), jnp.float32),
                'b1': jnp.zeros((cout,), jnp.float32),
                'w2': conv_w(next(keys), cout, cout),
                'g2': jnp.ones((cout,), jnp.float32),
                'b2': jnp.zeros((cout,), jnp.float32),
            })
            c = cout
        params['layers'].append(blocks)
    return params


# ---------------------------------------------------------------------------
# Forward pass (mirrors LargeVoxelResNet.forward; the PyTorch "blocks" are
# plain nn.Sequential without skip connections, so no residual adds)
# ---------------------------------------------------------------------------
def forward(params, x, *, num_blocks):
    x = jnp.transpose(x, (0, 2, 3, 4, 1))                  # NCDHW -> NDHWC

    # stem: conv1 -> bn1 -> relu
    x = conv7_bn_act(x, params['conv1_w'], params['bn1_g'], params['bn1_b'],
                     stride=1, apply_relu=True)

    layer_strides = (2, 2, 1)
    for li, (nb, stride0) in enumerate(zip(num_blocks, layer_strides)):
        for bi in range(nb):
            blk = params['layers'][li][bi]
            s = stride0 if bi == 0 else 1
            # block = conv(stride s) -> bn -> relu -> conv(stride 1) -> bn
            x = conv7_bn_act(x, blk['w1'], blk['g1'], blk['b1'],
                             stride=s, apply_relu=True)
            x = conv7_bn_act(x, blk['w2'], blk['g2'], blk['b2'],
                             stride=1, apply_relu=False)

    return jnp.transpose(x, (0, 4, 1, 2, 3)).astype(jnp.float32)   # -> NCDHW


if __name__ == "__main__":
    key = jax.random.PRNGKey(0)
    kp, kx = jax.random.split(key)

    in_planes = 2
    num_blocks = (1, 1, 1)
    params = init_params(kp, in_planes, num_blocks)

    # small NCDHW input: batch=1, channels=2, 8x8x8 voxels
    x = jax.random.normal(kx, (1, in_planes, 8, 8, 8), jnp.float32)

    fwd = jax.jit(functools.partial(forward, num_blocks=num_blocks))
    out = fwd(params, x)
    jax.block_until_ready(out)

    assert out.shape == (1, 128, 2, 2, 2), out.shape
    assert jnp.all(jnp.isfinite(out))
    print("KERNEL_OK")
</pallas_src>

<mosaic_0001>
module attributes {stable_mosaic.version = 11 : i64} {
  func.func @matmul_stats_kernel(%arg0: i32, %arg1: i32, %arg2: memref<256x768xbf16, #tpu.memory_space<vmem>>, %arg3: memref<768x128xbf16, #tpu.memory_space<vmem>>, %arg4: memref<256x128xf32, #tpu.memory_space<vmem>>, %arg5: memref<8x128xf32, #tpu.memory_space<vmem>>) attributes {dimension_semantics = [#tpu.dimension_semantics<parallel>, #tpu.dimension_semantics<arbitrary>], iteration_bounds = array<i64: 2, 1>, scalar_prefetch = 0 : i64, scratch_operands = 0 : i64, tpu.core_type = #tpu.core_type<tc>, window_params = [{transform_indices = @transform_0, window_bounds = array<i64: 256, 768>}, {transform_indices = @transform_1, window_bounds = array<i64: 768, 128>}, {transform_indices = @transform_2, window_bounds = array<i64: 256, 128>}, {transform_indices = @transform_3, window_bounds = array<i64: 8, 128>}]} {
    %c0_i32 = arith.constant 0 : i32
    %0 = arith.cmpi eq, %arg1, %c0_i32 : i32
    %1 = arith.extui %0 : i1 to i32
    %c0_i32_0 = arith.constant 0 : i32
    %2 = arith.cmpi ne, %1, %c0_i32_0 : i32
    scf.if %2 {
      %cst_10 = arith.constant 0.000000e+00 : f32
      %12 = vector.broadcast %cst_10 : f32 to vector<256x128xf32>
      %c0_11 = arith.constant 0 : index
      %c0_12 = arith.constant 0 : index
      %13 = vector.load %arg4[%c0_11, %c0_12] : memref<256x128xf32, #tpu.memory_space<vmem>>, vector<256x128xf32>
      tpu.vector_store %arg4[%c0_11, %c0_12], %12 {strides = array<i32>} : memref<256x128xf32, #tpu.memory_space<vmem>>, vector<256x128xf32>,
    } else {
    }
    %c0 = arith.constant 0 : index
    %c0_1 = arith.constant 0 : index
    %3 = vector.load %arg4[%c0, %c0_1] : memref<256x128xf32, #tpu.memory_space<vmem>>, vector<256x128xf32>
    %c0_2 = arith.constant 0 : index
    %c0_3 = arith.constant 0 : index
    %4 = vector.load %arg2[%c0_2, %c0_3] : memref<256x768xbf16, #tpu.memory_space<vmem>>, vector<256x768xbf16>
    %c0_4 = arith.constant 0 : index
    %c0_5 = arith.constant 0 : index
    %5 = vector.load %arg3[%c0_4, %c0_5] : memref<768x128xbf16, #tpu.memory_space<vmem>>, vector<768x128xbf16>
    %cst = arith.constant dense<0.000000e+00> : vector<256x128xf32>
    %6 = tpu.matmul %4, %5, %cst {dimension_numbers = #tpu.dot_dimension_numbers<[1], [0], [0], [1], [0, 0, 1, 1], [], []>} : vector<256x768xbf16>, vector<768x128xbf16>, vector<256x128xf32> -> vector<256x128xf32>
    %7 = arith.addf %3, %6 : vector<256x128xf32>
    %c0_6 = arith.constant 0 : index
    %c0_7 = arith.constant 0 : index
    %8 = vector.load %arg4[%c0_6, %c0_7] : memref<256x128xf32, #tpu.memory_space<vmem>>, vector<256x128xf32>
    tpu.vector_store %arg4[%c0_6, %c0_7], %7 {strides = array<i32>} : memref<256x128xf32, #tpu.memory_space<vmem>>, vector<256x128xf32>,
    %c0_i32_8 = arith.constant 0 : i32
    %9 = arith.cmpi eq, %arg1, %c0_i32_8 : i32
    %10 = arith.extui %9 : i1 to i32
    %c0_i32_9 = arith.constant 0 : i32
    %11 = arith.cmpi ne, %10, %c0_i32_9 : i32
    scf.if %11 {
      %c0_10 = arith.constant 0 : index
      %c0_11 = arith.constant 0 : index
      %12 = vector.load %arg4[%c0_10, %c0_11] : memref<256x128xf32, #tpu.memory_space<vmem>>, vector<256x128xf32>
      %cst_12 = arith.constant dense<0.000000e+00> : vector<128xf32>
      %13 = vector.multi_reduction <add>, %12, %cst_12 [0] : vector<256x128xf32> to vector<128xf32>
      %14 = vector.shape_cast %13 : vector<128xf32> to vector<1x128xf32>
      %c0_13 = arith.constant 0 : index
      %c0_14 = arith.constant 0 : index
      %15 = vector.load %arg5[%c0_13, %c0_14] : memref<8x128xf32, #tpu.memory_space<vmem>>, vector<1x128xf32>
      tpu.vector_store %arg5[%c0_13, %c0_14], %14 {strides = array<i32>} : memref<8x128xf32, #tpu.memory_space<vmem>>, vector<1x128xf32>,
      %16 = arith.mulf %12, %12 : vector<256x128xf32>
      %cst_15 = arith.constant dense<0.000000e+00> : vector<128xf32>
      %17 = vector.multi_reduction <add>, %16, %cst_15 [0] : vector<256x128xf32> to vector<128xf32>
      %18 = vector.shape_cast %17 : vector<128xf32> to vector<1x128xf32>
      %c1 = arith.constant 1 : index
      %c0_16 = arith.constant 0 : index
      %19 = vector.load %arg5[%c1, %c0_16] : memref<8x128xf32, #tpu.memory_space<vmem>>, vector<1x128xf32>
      tpu.vector_store %arg5[%c1, %c0_16], %18 {strides = array<i32>} : memref<8x128xf32, #tpu.memory_space<vmem>>, vector<1x128xf32>,
      %cst_17 = arith.constant 0.000000e+00 : f32
      %20 = vector.broadcast %cst_17 : f32 to vector<6x128xf32>
      %c2 = arith.constant 2 : index
      %c0_18 = arith.constant 0 : index
      %21 = vector.load %arg5[%c2, %c0_18] : memref<8x128xf32, #tpu.memory_space<vmem>>, vector<6x128xf32>
      tpu.vector_store %arg5[%c2, %c0_18], %20 {strides = array<i32>} : memref<8x128xf32, #tpu.memory_space<vmem>>, vector<6x128xf32>,
    } else {
    }
    return
  }
  func.func @transform_0(%arg0: i32, %arg1: i32) -> (i32, i32) {
    %c0_i32 = arith.constant 0 : i32
    return %arg0, %arg1 : i32, i32
  }
  func.func @transform_1(%arg0: i32, %arg1: i32) -> (i32, i32) {
    %c0_i32 = arith.constant 0 : i32
    %c0_i32_0 = arith.constant 0 : i32
    return %arg1, %c0_i32 : i32, i32
  }
  func.func @transform_2(%arg0: i32, %arg1: i32) -> (i32, i32) {
    %c0_i32 = arith.constant 0 : i32
    %c0_i32_0 = arith.constant 0 : i32
    return %arg0, %c0_i32 : i32, i32
  }
  func.func @transform_3(%arg0: i32, %arg1: i32) -> (i32, i32) {
    %c0_i32 = arith.constant 0 : i32
    %c0_i32_0 = arith.constant 0 : i32
    return %arg0, %c0_i32 : i32, i32
  }
}

module attributes {stable_mosaic.version = 11 : i64} {
  func.func @bn_act_kernel(%arg0: i32, %arg1: memref<256x128xf32, #tpu.memory_space<vmem>>, %arg2: memref<1x128xf32, #tpu.memory_space<vmem>>, %arg3: memref<1x128xf32, #tpu.memory_space<vmem>>, %arg4: memref<256x128xbf16, #tpu.memory_space<vmem>>) attributes {dimension_semantics = [#tpu.dimension_semantics<parallel>], iteration_bounds = array<i64: 2>, scalar_prefetch = 0 : i64, scratch_operands = 0 : i64, tpu.core_type = #tpu.core_type<tc>, window_params = [{transform_indices = @transform_0, window_bounds = array<i64: 256, 128>}, {pipeline_mode = #tpu.pipeline_mode<synchronous>, transform_indices = @transform_1, window_bounds = array<i64: 1, 128>}, {pipeline_mode = #tpu.pipeline_mode<synchronous>, transform_indices = @transform_2, window_bounds = array<i64: 1, 128>}, {transform_indices = @transform_3, window_bounds = array<i64: 256, 128>}]} {
    %c0 = arith.constant 0 : index
    %c0_0 = arith.constant 0 : index
    %0 = vector.load %arg1[%c0, %c0_0] : memref<256x128xf32, #tpu.memory_space<vmem>>, vector<256x128xf32>
    %c0_1 = arith.constant 0 : index
    %c0_2 = arith.constant 0 : index
    %1 = vector.load %arg2[%c0_1, %c0_2] : memref<1x128xf32, #tpu.memory_space<vmem>>, vector<1x128xf32>
    %2 = vector.broadcast %1 : vector<1x128xf32> to vector<256x128xf32>
    %3 = arith.mulf %0, %2 : vector<256x128xf32>
    %c0_3 = arith.constant 0 : index
    %c0_4 = arith.constant 0 : index
    %4 = vector.load %arg3[%c0_3, %c0_4] : memref<1x128xf32, #tpu.memory_space<vmem>>, vector<1x128xf32>
    %5 = vector.broadcast %4 : vector<1x128xf32> to vector<256x128xf32>
    %6 = arith.addf %3, %5 : vector<256x128xf32>
    %cst = arith.constant 0.000000e+00 : f32
    %7 = vector.broadcast %cst : f32 to vector<256x128xf32>
    %8 = arith.maximumf %6, %7 : vector<256x128xf32>
    %9 = arith.truncf %8 : vector<256x128xf32> to vector<256x128xbf16>
    %c0_5 = arith.constant 0 : index
    %c0_6 = arith.constant 0 : index
    %10 = vector.load %arg4[%c0_5, %c0_6] : memref<256x128xbf16, #tpu.memory_space<vmem>>, vector<256x128xbf16>
    tpu.vector_store %arg4[%c0_5, %c0_6], %9 {strides = array<i32>} : memref<256x128xbf16, #tpu.memory_space<vmem>>, vector<256x128xbf16>,
    return
  }
  func.func @transform_0(%arg0: i32) -> (i32, i32) {
    %c0_i32 = arith.constant 0 : i32
    %c0_i32_0 = arith.constant 0 : i32
    return %arg0, %c0_i32 : i32, i32
  }
  func.func @transform_1(%arg0: i32) -> (i32, i32) {
    %c0_i32 = arith.constant 0 : i32
    %c0_i32_0 = arith.constant 0 : i32
    %c0_i32_1 = arith.constant 0 : i32
    return %c0_i32, %c0_i32_0 : i32, i32
  }
  func.func @transform_2(%arg0: i32) -> (i32, i32) {
    %c0_i32 = arith.constant 0 : i32
    %c0_i32_0 = arith.constant 0 : i32
    %c0_i32_1 = arith.constant 0 : i32
    return %c0_i32, %c0_i32_0 : i32, i32
  }
  func.func @transform_3(%arg0: i32) -> (i32, i32) {
    %c0_i32 = arith.constant 0 : i32
    %c0_i32_0 = arith.constant 0 : i32
    return %arg0, %c0_i32 : i32, i32
  }
}

module attributes {stable_mosaic.version = 11 : i64} {
  func.func @matmul_stats_kernel(%arg0: i32, %arg1: i32, %arg2: memref<64x512xbf16, #tpu.memory_space<vmem>>, %arg3: memref<512x128xbf16, #tpu.memory_space<vmem>>, %arg4: memref<64x128xf32, #tpu.memory_space<vmem>>, %arg5: memref<8x128xf32, #tpu.memory_space<vmem>>) attributes {dimension_semantics = [#tpu.dimension_semantics<parallel>, #tpu.dimension_semantics<arbitrary>], iteration_bounds = array<i64: 1, 43>, scalar_prefetch = 0 : i64, scratch_operands = 0 : i64, tpu.core_type = #tpu.core_type<tc>, window_params = [{transform_indices = @transform_0, window_bounds = array<i64: 64, 512>}, {transform_indices = @transform_1, window_bounds = array<i64: 512, 128>}, {transform_indices = @transform_2, window_bounds = array<i64: 64, 128>}, {transform_indices = @transform_3, window_bounds = array<i64: 8, 128>}]} {
    %c0_i32 = arith.constant 0 : i32
    %0 = arith.cmpi eq, %arg1, %c0_i32 : i32
    %1 = arith.extui %0 : i1 to i32
    %c0_i32_0 = arith.constant 0 : i32
    %2 = arith.cmpi ne, %1, %c0_i32_0 : i32
    scf.if %2 {
      %cst_9 = arith.constant 0.000000e+00 : f32
      %12 = vector.broadcast %cst_9 : f32 to vector<64x128xf32>
      %c0_10 = arith.constant 0 : index
      %c0_11 = arith.constant 0 : index
      %13 = vector.load %arg4[%c0_10, %c0_11] : memref<64x128xf32, #tpu.memory_space<vmem>>, vector<64x128xf32>
      tpu.vector_store %arg4[%c0_10, %c0_11], %12 {strides = array<i32>} : memref<64x128xf32, #tpu.memory_space<vmem>>, vector<64x128xf32>,
    } else {
    }
    %c0 = arith.constant 0 : index
    %c0_1 = arith.constant 0 : index
    %3 = vector.load %arg4[%c0, %c0_1] : memref<64x128xf32, #tpu.memory_space<vmem>>, vector<64x128xf32>
    %c0_2 = arith.constant 0 : index
    %c0_3 = arith.constant 0 : index
    %4 = vector.load %arg2[%c0_2, %c0_3] : memref<64x512xbf16, #tpu.memory_space<vmem>>, vector<64x512xbf16>
    %c0_4 = arith.constant 0 : index
    %c0_5 = arith.constant 0 : index
    %5 = vector.load %arg3[%c0_4, %c0_5] : memref<512x128xbf16, #tpu.memory_space<vmem>>, vector<512x128xbf16>
    %cst = arith.constant dense<0.000000e+00> : vector<64x128xf32>
    %6 = tpu.matmul %4, %5, %cst {dimension_numbers = #tpu.dot_dimension_numbers<[1], [0], [0], [1], [0, 0, 1, 1], [], []>} : vector<64x512xbf16>, vector<512x128xbf16>, vector<64x128xf32> -> vector<64x128xf32>
    %7 = arith.addf %3, %6 : vector<64x128xf32>
    %c0_6 = arith.constant 0 : index
    %c0_7 = arith.constant 0 : index
    %8 = vector.load %arg4[%c0_6, %c0_7] : memref<64x128xf32, #tpu.memory_space<vmem>>, vector<64x128xf32>
    tpu.vector_store %arg4[%c0_6, %c0_7], %7 {strides = array<i32>} : memref<64x128xf32, #tpu.memory_space<vmem>>, vector<64x128xf32>,
    %c42_i32 = arith.constant 42 : i32
    %9 = arith.cmpi eq, %arg1, %c42_i32 : i32
    %10 = arith.extui %9 : i1 to i32
    %c0_i32_8 = arith.constant 0 : i32
    %11 = arith.cmpi ne, %10, %c0_i32_8 : i32
    scf.if %11 {
      %c0_9 = arith.constant 0 : index
      %c0_10 = arith.constant 0 : index
      %12 = vector.load %arg4[%c0_9, %c0_10] : memref<64x128xf32, #tpu.memory_space<vmem>>, vector<64x128xf32>
      %cst_11 = arith.constant dense<0.000000e+00> : vector<128xf32>
      %13 = vector.multi_reduction <add>, %12, %cst_11 [0] : vector<64x128xf32> to vector<128xf32>
      %14 = vector.shape_cast %13 : vector<128xf32> to vector<1x128xf32>
      %c0_12 = arith.constant 0 : index
      %c0_13 = arith.constant 0 : index
      %15 = vector.load %arg5[%c0_12, %c0_13] : memref<8x128xf32, #tpu.memory_space<vmem>>, vector<1x128xf32>
      tpu.vector_store %arg5[%c0_12, %c0_13], %14 {strides = array<i32>} : memref<8x128xf32, #tpu.memory_space<vmem>>, vector<1x128xf32>,
      %16 = arith.mulf %12, %12 : vector<64x128xf32>
      %cst_14 = arith.constant dense<0.000000e+00> : vector<128xf32>
      %17 = vector.multi_reduction <add>, %16, %cst_14 [0] : vector<64x128xf32> to vector<128xf32>
      %18 = vector.shape_cast %17 : vector<128xf32> to vector<1x128xf32>
      %c1 = arith.constant 1 : index
      %c0_15 = arith.constant 0 : index
      %19 = vector.load %arg5[%c1, %c0_15] : memref<8x128xf32, #tpu.memory_space<vmem>>, vector<1x128xf32>
      tpu.vector_store %arg5[%c1, %c0_15], %18 {strides = array<i32>} : memref<8x128xf32, #tpu.memory_space<vmem>>, vector<1x128xf32>,
      %cst_16 = arith.constant 0.000000e+00 : f32
      %20 = vector.broadcast %cst_16 : f32 to vector<6x128xf32>
      %c2 = arith.constant 2 : index
      %c0_17 = arith.constant 0 : index
      %21 = vector.load %arg5[%c2, %c0_17] : memref<8x128xf32, #tpu.memory_space<vmem>>, vector<6x128xf32>
      tpu.vector_store %arg5[%c2, %c0_17], %20 {strides = array<i32>} : memref<8x128xf32, #tpu.memory_space<vmem>>, vector<6x128xf32>,
    } else {
    }
    return
  }
  func.func @transform_0(%arg0: i32, %arg1: i32) -> (i32, i32) {
    %c0_i32 = arith.constant 0 : i32
    return %arg0, %arg1 : i32, i32
  }
  func.func @transform_1(%arg0: i32, %arg1: i32) -> (i32, i32) {
    %c0_i32 = arith.constant 0 : i32
    %c0_i32_0 = arith.constant 0 : i32
    return %arg1, %c0_i32 : i32, i32
  }
  func.func @transform_2(%arg0: i32, %arg1: i32) -> (i32, i32) {
    %c0_i32 = arith.constant 0 : i32
    %c0_i32_0 = arith.constant 0 : i32
    return %arg0, %c0_i32 : i32, i32
  }
  func.func @transform_3(%arg0: i32, %arg1: i32) -> (i32, i32) {
    %c0_i32 = arith.constant 0 : i32
    %c0_i32_0 = arith.constant 0 : i32
    return %arg0, %c0_i32 : i32, i32
  }
}

module attributes {stable_mosaic.version = 11 : i64} {
  func.func @bn_act_kernel(%arg0: i32, %arg1: memref<64x128xf32, #tpu.memory_space<vmem>>, %arg2: memref<1x128xf32, #tpu.memory_space<vmem>>, %arg3: memref<1x128xf32, #tpu.memory_space<vmem>>, %arg4: memref<64x128xbf16, #tpu.memory_space<vmem>>) attributes {dimension_semantics = [#tpu.dimension_semantics<parallel>], iteration_bounds = array<i64: 1>, scalar_prefetch = 0 : i64, scratch_operands = 0 : i64, tpu.core_type = #tpu.core_type<tc>, window_params = [{transform_indices = @transform_0, window_bounds = array<i64: 64, 128>}, {pipeline_mode = #tpu.pipeline_mode<synchronous>, transform_indices = @transform_1, window_bounds = array<i64: 1, 128>}, {pipeline_mode = #tpu.pipeline_mode<synchronous>, transform_indices = @transform_2, window_bounds = array<i64: 1, 128>}, {transform_indices = @transform_3, window_bounds = array<i64: 64, 128>}]} {
    %c0 = arith.constant 0 : index
    %c0_0 = arith.constant 0 : index
    %0 = vector.load %arg1[%c0, %c0_0] : memref<64x128xf32, #tpu.memory_space<vmem>>, vector<64x128xf32>
    %c0_1 = arith.constant 0 : index
    %c0_2 = arith.constant 0 : index
    %1 = vector.load %arg2[%c0_1, %c0_2] : memref<1x128xf32, #tpu.memory_space<vmem>>, vector<1x128xf32>
    %2 = vector.broadcast %1 : vector<1x128xf32> to vector<64x128xf32>
    %3 = arith.mulf %0, %2 : vector<64x128xf32>
    %c0_3 = arith.constant 0 : index
    %c0_4 = arith.constant 0 : index
    %4 = vector.load %arg3[%c0_3, %c0_4] : memref<1x128xf32, #tpu.memory_space<vmem>>, vector<1x128xf32>
    %5 = vector.broadcast %4 : vector<1x128xf32> to vector<64x128xf32>
    %6 = arith.addf %3, %5 : vector<64x128xf32>
    %cst = arith.constant 0.000000e+00 : f32
    %7 = vector.broadcast %cst : f32 to vector<64x128xf32>
    %8 = arith.maximumf %6, %7 : vector<64x128xf32>
    %9 = arith.truncf %8 : vector<64x128xf32> to vector<64x128xbf16>
    %c0_5 = arith.constant 0 : index
    %c0_6 = arith.constant 0 : index
    %10 = vector.load %arg4[%c0_5, %c0_6] : memref<64x128xbf16, #tpu.memory_space<vmem>>, vector<64x128xbf16>
    tpu.vector_store %arg4[%c0_5, %c0_6], %9 {strides = array<i32>} : memref<64x128xbf16, #tpu.memory_space<vmem>>, vector<64x128xbf16>,
    return
  }
  func.func @transform_0(%arg0: i32) -> (i32, i32) {
    %c0_i32 = arith.constant 0 : i32
    %c0_i32_0 = arith.constant 0 : i32
    return %arg0, %c0_i32 : i32, i32
  }
  func.func @transform_1(%arg0: i32) -> (i32, i32) {
    %c0_i32 = arith.constant 0 : i32
    %c0_i32_0 = arith.constant 0 : i32
    %c0_i32_1 = arith.constant 0 : i32
    return %c0_i32, %c0_i32_0 : i32, i32
  }
  func.func @transform_2(%arg0: i32) -> (i32, i32) {
    %c0_i32 = arith.constant 0 : i32
    %c0_i32_0 = arith.constant 0 : i32
    %c0_i32_1 = arith.constant 0 : i32
    return %c0_i32, %c0_i32_0 : i32, i32
  }
  func.func @transform_3(%arg0: i32) -> (i32, i32) {
    %c0_i32 = arith.constant 0 : i32
    %c0_i32_0 = arith.constant 0 : i32
    return %arg0, %c0_i32 : i32, i32
  }
}

module attributes {stable_mosaic.version = 11 : i64} {
  func.func @matmul_stats_kernel(%arg0: i32, %arg1: i32, %arg2: memref<64x512xbf16, #tpu.memory_space<vmem>>, %arg3: memref<512x128xbf16, #tpu.memory_space<vmem>>, %arg4: memref<64x128xf32, #tpu.memory_space<vmem>>, %arg5: memref<8x128xf32, #tpu.memory_space<vmem>>) attributes {dimension_semantics = [#tpu.dimension_semantics<parallel>, #tpu.dimension_semantics<arbitrary>], iteration_bounds = array<i64: 1, 86>, scalar_prefetch = 0 : i64, scratch_operands = 0 : i64, tpu.core_type = #tpu.core_type<tc>, window_params = [{transform_indices = @transform_0, window_bounds = array<i64: 64, 512>}, {transform_indices = @transform_1, window_bounds = array<i64: 512, 128>}, {transform_indices = @transform_2, window_bounds = array<i64: 64, 128>}, {transform_indices = @transform_3, window_bounds = array<i64: 8, 128>}]} {
    %c0_i32 = arith.constant 0 : i32
    %0 = arith.cmpi eq, %arg1, %c0_i32 : i32
    %1 = arith.extui %0 : i1 to i32
    %c0_i32_0 = arith.constant 0 : i32
    %2 = arith.cmpi ne, %1, %c0_i32_0 : i32
    scf.if %2 {
      %cst_9 = arith.constant 0.000000e+00 : f32
      %12 = vector.broadcast %cst_9 : f32 to vector<64x128xf32>
      %c0_10 = arith.constant 0 : index
      %c0_11 = arith.constant 0 : index
      %13 = vector.load %arg4[%c0_10, %c0_11] : memref<64x128xf32, #tpu.memory_space<vmem>>, vector<64x128xf32>
      tpu.vector_store %arg4[%c0_10, %c0_11], %12 {strides = array<i32>} : memref<64x128xf32, #tpu.memory_space<vmem>>, vector<64x128xf32>,
    } else {
    }
    %c0 = arith.constant 0 : index
    %c0_1 = arith.constant 0 : index
    %3 = vector.load %arg4[%c0, %c0_1] : memref<64x128xf32, #tpu.memory_space<vmem>>, vector<64x128xf32>
    %c0_2 = arith.constant 0 : index
    %c0_3 = arith.constant 0 : index
    %4 = vector.load %arg2[%c0_2, %c0_3] : memref<64x512xbf16, #tpu.memory_space<vmem>>, vector<64x512xbf16>
    %c0_4 = arith.constant 0 : index
    %c0_5 = arith.constant 0 : index
    %5 = vector.load %arg3[%c0_4, %c0_5] : memref<512x128xbf16, #tpu.memory_space<vmem>>, vector<512x128xbf16>
    %cst = arith.constant dense<0.000000e+00> : vector<64x128xf32>
    %6 = tpu.matmul %4, %5, %cst {dimension_numbers = #tpu.dot_dimension_numbers<[1], [0], [0], [1], [0, 0, 1, 1], [], []>} : vector<64x512xbf16>, vector<512x128xbf16>, vector<64x128xf32> -> vector<64x128xf32>
    %7 = arith.addf %3, %6 : vector<64x128xf32>
    %c0_6 = arith.constant 0 : index
    %c0_7 = arith.constant 0 : index
    %8 = vector.load %arg4[%c0_6, %c0_7] : memref<64x128xf32, #tpu.memory_space<vmem>>, vector<64x128xf32>
    tpu.vector_store %arg4[%c0_6, %c0_7], %7 {strides = array<i32>} : memref<64x128xf32, #tpu.memory_space<vmem>>, vector<64x128xf32>,
    %c85_i32 = arith.constant 85 : i32
    %9 = arith.cmpi eq, %arg1, %c85_i32 : i32
    %10 = arith.extui %9 : i1 to i32
    %c0_i32_8 = arith.constant 0 : i32
    %11 = arith.cmpi ne, %10, %c0_i32_8 : i32
    scf.if %11 {
      %c0_9 = arith.constant 0 : index
      %c0_10 = arith.constant 0 : index
      %12 = vector.load %arg4[%c0_9, %c0_10] : memref<64x128xf32, #tpu.memory_space<vmem>>, vector<64x128xf32>
      %cst_11 = arith.constant dense<0.000000e+00> : vector<128xf32>
      %13 = vector.multi_reduction <add>, %12, %cst_11 [0] : vector<64x128xf32> to vector<128xf32>
      %14 = vector.shape_cast %13 : vector<128xf32> to vector<1x128xf32>
      %c0_12 = arith.constant 0 : index
      %c0_13 = arith.constant 0 : index
      %15 = vector.load %arg5[%c0_12, %c0_13] : memref<8x128xf32, #tpu.memory_space<vmem>>, vector<1x128xf32>
      tpu.vector_store %arg5[%c0_12, %c0_13], %14 {strides = array<i32>} : memref<8x128xf32, #tpu.memory_space<vmem>>, vector<1x128xf32>,
      %16 = arith.mulf %12, %12 : vector<64x128xf32>
      %cst_14 = arith.constant dense<0.000000e+00> : vector<128xf32>
      %17 = vector.multi_reduction <add>, %16, %cst_14 [0] : vector<64x128xf32> to vector<128xf32>
      %18 = vector.shape_cast %17 : vector<128xf32> to vector<1x128xf32>
      %c1 = arith.constant 1 : index
      %c0_15 = arith.constant 0 : index
      %19 = vector.load %arg5[%c1, %c0_15] : memref<8x128xf32, #tpu.memory_space<vmem>>, vector<1x128xf32>
      tpu.vector_store %arg5[%c1, %c0_15], %18 {strides = array<i32>} : memref<8x128xf32, #tpu.memory_space<vmem>>, vector<1x128xf32>,
      %cst_16 = arith.constant 0.000000e+00 : f32
      %20 = vector.broadcast %cst_16 : f32 to vector<6x128xf32>
      %c2 = arith.constant 2 : index
      %c0_17 = arith.constant 0 : index
      %21 = vector.load %arg5[%c2, %c0_17] : memref<8x128xf32, #tpu.memory_space<vmem>>, vector<6x128xf32>
      tpu.vector_store %arg5[%c2, %c0_17], %20 {strides = array<i32>} : memref<8x128xf32, #tpu.memory_space<vmem>>, vector<6x128xf32>,
    } else {
    }
    return
  }
  func.func @transform_0(%arg0: i32, %arg1: i32) -> (i32, i32) {
    %c0_i32 = arith.constant 0 : i32
    return %arg0, %arg1 : i32, i32
  }
  func.func @transform_1(%arg0: i32, %arg1: i32) -> (i32, i32) {
    %c0_i32 = arith.constant 0 : i32
    %c0_i32_0 = arith.constant 0 : i32
    return %arg1, %c0_i32 : i32, i32
  }
  func.func @transform_2(%arg0: i32, %arg1: i32) -> (i32, i32) {
    %c0_i32 = arith.constant 0 : i32
    %c0_i32_0 = arith.constant 0 : i32
    return %arg0, %c0_i32 : i32, i32
  }
  func.func @transform_3(%arg0: i32, %arg1: i32) -> (i32, i32) {
    %c0_i32 = arith.constant 0 : i32
    %c0_i32_0 = arith.constant 0 : i32
    return %arg0, %c0_i32 : i32, i32
  }
}

module attributes {stable_mosaic.version = 11 : i64} {
  func.func @bn_act_kernel(%arg0: i32, %arg1: memref<64x128xf32, #tpu.memory_space<vmem>>, %arg2: memref<1x128xf32, #tpu.memory_space<vmem>>, %arg3: memref<1x128xf32, #tpu.memory_space<vmem>>, %arg4: memref<64x128xbf16, #tpu.memory_space<vmem>>) attributes {dimension_semantics = [#tpu.dimension_semantics<parallel>], iteration_bounds = array<i64: 1>, scalar_prefetch = 0 : i64, scratch_operands = 0 : i64, tpu.core_type = #tpu.core_type<tc>, window_params = [{transform_indices = @transform_0, window_bounds = array<i64: 64, 128>}, {pipeline_mode = #tpu.pipeline_mode<synchronous>, transform_indices = @transform_1, window_bounds = array<i64: 1, 128>}, {pipeline_mode = #tpu.pipeline_mode<synchronous>, transform_indices = @transform_2, window_bounds = array<i64: 1, 128>}, {transform_indices = @transform_3, window_bounds = array<i64: 64, 128>}]} {
    %c0 = arith.constant 0 : index
    %c0_0 = arith.constant 0 : index
    %0 = vector.load %arg1[%c0, %c0_0] : memref<64x128xf32, #tpu.memory_space<vmem>>, vector<64x128xf32>
    %c0_1 = arith.constant 0 : index
    %c0_2 = arith.constant 0 : index
    %1 = vector.load %arg2[%c0_1, %c0_2] : memref<1x128xf32, #tpu.memory_space<vmem>>, vector<1x128xf32>
    %2 = vector.broadcast %1 : vector<1x128xf32> to vector<64x128xf32>
    %3 = arith.mulf %0, %2 : vector<64x128xf32>
    %c0_3 = arith.constant 0 : index
    %c0_4 = arith.constant 0 : index
    %4 = vector.load %arg3[%c0_3, %c0_4] : memref<1x128xf32, #tpu.memory_space<vmem>>, vector<1x128xf32>
    %5 = vector.broadcast %4 : vector<1x128xf32> to vector<64x128xf32>
    %6 = arith.addf %3, %5 : vector<64x128xf32>
    %7 = arith.truncf %6 : vector<64x128xf32> to vector<64x128xbf16>
    %c0_5 = arith.constant 0 : index
    %c0_6 = arith.constant 0 : index
    %8 = vector.load %arg4[%c0_5, %c0_6] : memref<64x128xbf16, #tpu.memory_space<vmem>>, vector<64x128xbf16>
    tpu.vector_store %arg4[%c0_5, %c0_6], %7 {strides = array<i32>} : memref<64x128xbf16, #tpu.memory_space<vmem>>, vector<64x128xbf16>,
    return
  }
  func.func @transform_0(%arg0: i32) -> (i32, i32) {
    %c0_i32 = arith.constant 0 : i32
    %c0_i32_0 = arith.constant 0 : i32
    return %arg0, %c0_i32 : i32, i32
  }
  func.func @transform_1(%arg0: i32) -> (i32, i32) {
    %c0_i32 = arith.constant 0 : i32
    %c0_i32_0 = arith.constant 0 : i32
    %c0_i32_1 = arith.constant 0 : i32
    return %c0_i32, %c0_i32_0 : i32, i32
  }
  func.func @transform_2(%arg0: i32) -> (i32, i32) {
    %c0_i32 = arith.constant 0 : i32
    %c0_i32_0 = arith.constant 0 : i32
    %c0_i32_1 = arith.constant 0 : i32
    return %c0_i32, %c0_i32_0 : i32, i32
  }
  func.func @transform_3(%arg0: i32) -> (i32, i32) {
    %c0_i32 = arith.constant 0 : i32
    %c0_i32_0 = arith.constant 0 : i32
    return %arg0, %c0_i32 : i32, i32
  }
}

module attributes {stable_mosaic.version = 11 : i64} {
  func.func @matmul_stats_kernel(%arg0: i32, %arg1: i32, %arg2: memref<8x512xbf16, #tpu.memory_space<vmem>>, %arg3: memref<512x128xbf16, #tpu.memory_space<vmem>>, %arg4: memref<8x128xf32, #tpu.memory_space<vmem>>, %arg5: memref<8x128xf32, #tpu.memory_space<vmem>>) attributes {dimension_semantics = [#tpu.dimension_semantics<parallel>, #tpu.dimension_semantics<arbitrary>], iteration_bounds = array<i64: 1, 86>, scalar_prefetch = 0 : i64, scratch_operands = 0 : i64, tpu.core_type = #tpu.core_type<tc>, window_params = [{transform_indices = @transform_0, window_bounds = array<i64: 8, 512>}, {transform_indices = @transform_1, window_bounds = array<i64: 512, 128>}, {transform_indices = @transform_2, window_bounds = array<i64: 8, 128>}, {transform_indices = @transform_3, window_bounds = array<i64: 8, 128>}]} {
    %c0_i32 = arith.constant 0 : i32
    %0 = arith.cmpi eq, %arg1, %c0_i32 : i32
    %1 = arith.extui %0 : i1 to i32
    %c0_i32_0 = arith.constant 0 : i32
    %2 = arith.cmpi ne, %1, %c0_i32_0 : i32
    scf.if %2 {
      %cst_9 = arith.constant 0.000000e+00 : f32
      %12 = vector.broadcast %cst_9 : f32 to vector<8x128xf32>
      %c0_10 = arith.constant 0 : index
      %c0_11 = arith.constant 0 : index
      %13 = vector.load %arg4[%c0_10, %c0_11] : memref<8x128xf32, #tpu.memory_space<vmem>>, vector<8x128xf32>
      tpu.vector_store %arg4[%c0_10, %c0_11], %12 {strides = array<i32>} : memref<8x128xf32, #tpu.memory_space<vmem>>, vector<8x128xf32>,
    } else {
    }
    %c0 = arith.constant 0 : index
    %c0_1 = arith.constant 0 : index
    %3 = vector.load %arg4[%c0, %c0_1] : memref<8x128xf32, #tpu.memory_space<vmem>>, vector<8x128xf32>
    %c0_2 = arith.constant 0 : index
    %c0_3 = arith.constant 0 : index
    %4 = vector.load %arg2[%c0_2, %c0_3] : memref<8x512xbf16, #tpu.memory_space<vmem>>, vector<8x512xbf16>
    %c0_4 = arith.constant 0 : index
    %c0_5 = arith.constant 0 : index
    %5 = vector.load %arg3[%c0_4, %c0_5] : memref<512x128xbf16, #tpu.memory_space<vmem>>, vector<512x128xbf16>
    %cst = arith.constant dense<0.000000e+00> : vector<8x128xf32>
    %6 = tpu.matmul %4, %5, %cst {dimension_numbers = #tpu.dot_dimension_numbers<[1], [0], [0], [1], [0, 0, 1, 1], [], []>} : vector<8x512xbf16>, vector<512x128xbf16>, vector<8x128xf32> -> vector<8x128xf32>
    %7 = arith.addf %3, %6 : vector<8x128xf32>
    %c0_6 = arith.constant 0 : index
    %c0_7 = arith.constant 0 : index
    %8 = vector.load %arg4[%c0_6, %c0_7] : memref<8x128xf32, #tpu.memory_space<vmem>>, vector<8x128xf32>
    tpu.vector_store %arg4[%c0_6, %c0_7], %7 {strides = array<i32>} : memref<8x128xf32, #tpu.memory_space<vmem>>, vector<8x128xf32>,
    %c85_i32 = arith.constant 85 : i32
    %9 = arith.cmpi eq, %arg1, %c85_i32 : i32
    %10 = arith.extui %9 : i1 to i32
    %c0_i32_8 = arith.constant 0 : i32
    %11 = arith.cmpi ne, %10, %c0_i32_8 : i32
    scf.if %11 {
      %c0_9 = arith.constant 0 : index
      %c0_10 = arith.constant 0 : index
      %12 = vector.load %arg4[%c0_9, %c0_10] : memref<8x128xf32, #tpu.memory_space<vmem>>, vector<8x128xf32>
      %cst_11 = arith.constant dense<0.000000e+00> : vector<128xf32>
      %13 = vector.multi_reduction <add>, %12, %cst_11 [0] : vector<8x128xf32> to vector<128xf32>
      %14 = vector.shape_cast %13 : vector<128xf32> to vector<1x128xf32>
      %c0_12 = arith.constant 0 : index
      %c0_13 = arith.constant 0 : index
      %15 = vector.load %arg5[%c0_12, %c0_13] : memref<8x128xf32, #tpu.memory_space<vmem>>, vector<1x128xf32>
      tpu.vector_store %arg5[%c0_12, %c0_13], %14 {strides = array<i32>} : memref<8x128xf32, #tpu.memory_space<vmem>>, vector<1x128xf32>,
      %16 = arith.mulf %12, %12 : vector<8x128xf32>
      %cst_14 = arith.constant dense<0.000000e+00> : vector<128xf32>
      %17 = vector.multi_reduction <add>, %16, %cst_14 [0] : vector<8x128xf32> to vector<128xf32>
      %18 = vector.shape_cast %17 : vector<128xf32> to vector<1x128xf32>
      %c1 = arith.constant 1 : index
      %c0_15 = arith.constant 0 : index
      %19 = vector.load %arg5[%c1, %c0_15] : memref<8x128xf32, #tpu.memory_space<vmem>>, vector<1x128xf32>
      tpu.vector_store %arg5[%c1, %c0_15], %18 {strides = array<i32>} : memref<8x128xf32, #tpu.memory_space<vmem>>, vector<1x128xf32>,
      %cst_16 = arith.constant 0.000000e+00 : f32
      %20 = vector.broadcast %cst_16 : f32 to vector<6x128xf32>
      %c2 = arith.constant 2 : index
      %c0_17 = arith.constant 0 : index
      %21 = vector.load %arg5[%c2, %c0_17] : memref<8x128xf32, #tpu.memory_space<vmem>>, vector<6x128xf32>
      tpu.vector_store %arg5[%c2, %c0_17], %20 {strides = array<i32>} : memref<8x128xf32, #tpu.memory_space<vmem>>, vector<6x128xf32>,
    } else {
    }
    return
  }
  func.func @transform_0(%arg0: i32, %arg1: i32) -> (i32, i32) {
    %c0_i32 = arith.constant 0 : i32
    return %arg0, %arg1 : i32, i32
  }
  func.func @transform_1(%arg0: i32, %arg1: i32) -> (i32, i32) {
    %c0_i32 = arith.constant 0 : i32
    %c0_i32_0 = arith.constant 0 : i32
    return %arg1, %c0_i32 : i32, i32
  }
  func.func @transform_2(%arg0: i32, %arg1: i32) -> (i32, i32) {
    %c0_i32 = arith.constant 0 : i32
    %c0_i32_0 = arith.constant 0 : i32
    return %arg0, %c0_i32 : i32, i32
  }
  func.func @transform_3(%arg0: i32, %arg1: i32) -> (i32, i32) {
    %c0_i32 = arith.constant 0 : i32
    %c0_i32_0 = arith.constant 0 : i32
    return %arg0, %c0_i32 : i32, i32
  }
}

module attributes {stable_mosaic.version = 11 : i64} {
  func.func @bn_act_kernel(%arg0: i32, %arg1: memref<8x128xf32, #tpu.memory_space<vmem>>, %arg2: memref<1x128xf32, #tpu.memory_space<vmem>>, %arg3: memref<1x128xf32, #tpu.memory_space<vmem>>, %arg4: memref<8x128xbf16, #tpu.memory_space<vmem>>) attributes {dimension_semantics = [#tpu.dimension_semantics<parallel>], iteration_bounds = array<i64: 1>, scalar_prefetch = 0 : i64, scratch_operands = 0 : i64, tpu.core_type = #tpu.core_type<tc>, window_params = [{transform_indices = @transform_0, window_bounds = array<i64: 8, 128>}, {pipeline_mode = #tpu.pipeline_mode<synchronous>, transform_indices = @transform_1, window_bounds = array<i64: 1, 128>}, {pipeline_mode = #tpu.pipeline_mode<synchronous>, transform_indices = @transform_2, window_bounds = array<i64: 1, 128>}, {transform_indices = @transform_3, window_bounds = array<i64: 8, 128>}]} {
    %c0 = arith.constant 0 : index
    %c0_0 = arith.constant 0 : index
    %0 = vector.load %arg1[%c0, %c0_0] : memref<8x128xf32, #tpu.memory_space<vmem>>, vector<8x128xf32>
    %c0_1 = arith.constant 0 : index
    %c0_2 = arith.constant 0 : index
    %1 = vector.load %arg2[%c0_1, %c0_2] : memref<1x128xf32, #tpu.memory_space<vmem>>, vector<1x128xf32>
    %2 = vector.broadcast %1 : vector<1x128xf32> to vector<8x128xf32>
    %3 = arith.mulf %0, %2 : vector<8x128xf32>
    %c0_3 = arith.constant 0 : index
    %c0_4 = arith.constant 0 : index
    %4 = vector.load %arg3[%c0_3, %c0_4] : memref<1x128xf32, #tpu.memory_space<vmem>>, vector<1x128xf32>
    %5 = vector.broadcast %4 : vector<1x128xf32> to vector<8x128xf32>
    %6 = arith.addf %3, %5 : vector<8x128xf32>
    %cst = arith.constant 0.000000e+00 : f32
    %7 = vector.broadcast %cst : f32 to vector<8x128xf32>
    %8 = arith.maximumf %6, %7 : vector<8x128xf32>
    %9 = arith.truncf %8 : vector<8x128xf32> to vector<8x128xbf16>
    %c0_5 = arith.constant 0 : index
    %c0_6 = arith.constant 0 : index
    %10 = vector.load %arg4[%c0_5, %c0_6] : memref<8x128xbf16, #tpu.memory_space<vmem>>, vector<8x128xbf16>
    tpu.vector_store %arg4[%c0_5, %c0_6], %9 {strides = array<i32>} : memref<8x128xbf16, #tpu.memory_space<vmem>>, vector<8x128xbf16>,
    return
  }
  func.func @transform_0(%arg0: i32) -> (i32, i32) {
    %c0_i32 = arith.constant 0 : i32
    %c0_i32_0 = arith.constant 0 : i32
    return %arg0, %c0_i32 : i32, i32
  }
  func.func @transform_1(%arg0: i32) -> (i32, i32) {
    %c0_i32 = arith.constant 0 : i32
    %c0_i32_0 = arith.constant 0 : i32
    %c0_i32_1 = arith.constant 0 : i32
    return %c0_i32, %c0_i32_0 : i32, i32
  }
  func.func @transform_2(%arg0: i32) -> (i32, i32) {
    %c0_i32 = arith.constant 0 : i32
    %c0_i32_0 = arith.constant 0 : i32
    %c0_i32_1 = arith.constant 0 : i32
    return %c0_i32, %c0_i32_0 : i32, i32
  }
  func.func @transform_3(%arg0: i32) -> (i32, i32) {
    %c0_i32 = arith.constant 0 : i32
    %c0_i32_0 = arith.constant 0 : i32
    return %arg0, %c0_i32 : i32, i32
  }
}

module attributes {stable_mosaic.version = 11 : i64} {
  func.func @bn_act_kernel(%arg0: i32, %arg1: memref<8x128xf32, #tpu.memory_space<vmem>>, %arg2: memref<1x128xf32, #tpu.memory_space<vmem>>, %arg3: memref<1x128xf32, #tpu.memory_space<vmem>>, %arg4: memref<8x128xbf16, #tpu.memory_space<vmem>>) attributes {dimension_semantics = [#tpu.dimension_semantics<parallel>], iteration_bounds = array<i64: 1>, scalar_prefetch = 0 : i64, scratch_operands = 0 : i64, tpu.core_type = #tpu.core_type<tc>, window_params = [{transform_indices = @transform_0, window_bounds = array<i64: 8, 128>}, {pipeline_mode = #tpu.pipeline_mode<synchronous>, transform_indices = @transform_1, window_bounds = array<i64: 1, 128>}, {pipeline_mode = #tpu.pipeline_mode<synchronous>, transform_indices = @transform_2, window_bounds = array<i64: 1, 128>}, {transform_indices = @transform_3, window_bounds = array<i64: 8, 128>}]} {
    %c0 = arith.constant 0 : index
    %c0_0 = arith.constant 0 : index
    %0 = vector.load %arg1[%c0, %c0_0] : memref<8x128xf32, #tpu.memory_space<vmem>>, vector<8x128xf32>
    %c0_1 = arith.constant 0 : index
    %c0_2 = arith.constant 0 : index
    %1 = vector.load %arg2[%c0_1, %c0_2] : memref<1x128xf32, #tpu.memory_space<vmem>>, vector<1x128xf32>
    %2 = vector.broadcast %1 : vector<1x128xf32> to vector<8x128xf32>
    %3 = arith.mulf %0, %2 : vector<8x128xf32>
    %c0_3 = arith.constant 0 : index
    %c0_4 = arith.constant 0 : index
    %4 = vector.load %arg3[%c0_3, %c0_4] : memref<1x128xf32, #tpu.memory_space<vmem>>, vector<1x128xf32>
    %5 = vector.broadcast %4 : vector<1x128xf32> to vector<8x128xf32>
    %6 = arith.addf %3, %5 : vector<8x128xf32>
    %7 = arith.truncf %6 : vector<8x128xf32> to vector<8x128xbf16>
    %c0_5 = arith.constant 0 : index
    %c0_6 = arith.constant 0 : index
    %8 = vector.load %arg4[%c0_5, %c0_6] : memref<8x128xbf16, #tpu.memory_space<vmem>>, vector<8x128xbf16>
    tpu.vector_store %arg4[%c0_5, %c0_6], %7 {strides = array<i32>} : memref<8x128xbf16, #tpu.memory_space<vmem>>, vector<8x128xbf16>,
    return
  }
  func.func @transform_0(%arg0: i32) -> (i32, i32) {
    %c0_i32 = arith.constant 0 : i32
    %c0_i32_0 = arith.constant 0 : i32
    return %arg0, %c0_i32 : i32, i32
  }
  func.func @transform_1(%arg0: i32) -> (i32, i32) {
    %c0_i32 = arith.constant 0 : i32
    %c0_i32_0 = arith.constant 0 : i32
    %c0_i32_1 = arith.constant 0 : i32
    return %c0_i32, %c0_i32_0 : i32, i32
  }
  func.func @transform_2(%arg0: i32) -> (i32, i32) {
    %c0_i32 = arith.constant 0 : i32
    %c0_i32_0 = arith.constant 0 : i32
    %c0_i32_1 = arith.constant 0 : i32
    return %c0_i32, %c0_i32_0 : i32, i32
  }
  func.func @transform_3(%arg0: i32) -> (i32, i32) {
    %c0_i32 = arith.constant 0 : i32
    %c0_i32_0 = arith.constant 0 : i32
    return %arg0, %c0_i32 : i32, i32
  }
}

</mosaic_0001>

<llo_original>
// kernel: forward.15
$region0: #{forward.15}
  #allocation0 [shape = 'u32[]', space=smem, size = 0x4, offset = 0x4, fixed_abs, tag = 'smem constant byte address 0x4 - core index']
  #allocation1 [shape = 'u32[144,128]{1,0:T(1,128)}', space=vmem, size = 0x12000, scoped, tag = 'internal scratch']
  %s0 = inlined_call_operand.vmem [shape: f32[512,128], index: 0, kind: input, shape index: {}]
  %s1 = inlined_call_operand.vmem [shape: f32[1,128], index: 1, kind: input, shape index: {}]
  %s2 = inlined_call_operand.vmem [shape: f32[1,128], index: 2, kind: input, shape index: {}]
  %s3 = inlined_call_operand.vmem [shape: bf16[512,128], index: 3, kind: output, shape index: {}]
  %s4 = sld [smem:[#allocation0]]
  $region45: #{forward.15} parent=0
    _
  %s6 = ssub.s32 1, %s4
  %s7 = scalar_select 0, %s6, %s4
  loop: start=0, step=1, limit=4
  $region2: #{forward.15} parent=0 // loop_pre_header
    _
  $region3: #{forward.15} parent=0 // loop_header
    %s9 = sphi 0, %s13
    %p10 = scmp.ge.s32.totalorder %s9, 4
    %s19 = sphi 0, %s21
    %s22 = sphi 0, %s19
    %s23 = sphi 0, %s22
    %s39 = sphi 0, %s23
    %s43 = sphi 0, %s43
    %s45 = sphi 0, %s43
    %s46 = sphi 0, %s45
    %s60 = sphi 0, %s46
    %s64 = sphi 0, %s64
    %s66 = sphi 0, %s64
    %s67 = sphi 0, %s66
    %s81 = sphi 0, %s67
    %s87 = sphi 0, %s89
    %s90 = sphi 0, %s87
    %s91 = sphi 0, %s90
    %s107 = sphi 0, %s91
  $region4: #{forward.15} parent=0 // loop_header_branch
    %12 = sbr.rel (%p10) target = $region8
  $region5: #{forward.15} parent=0 // loop_body
    %s14 = ssub.s32 %s9, 1
    %s15 = ssub.s32 %s9, 2
    %s16 = sadd.s32 %s9, 1
    %s17 = ssub.s32 %s9, %s16
    %p18 = scmp.eq.s32.totalorder %s17, 0
    %s20 = sadd.s32 %s19, 1
    %s21 = scalar_select %p18, %s19, %s20
    %p24 = pneg %p18
    %p25 = scmp.eq.s32.totalorder %s9, 1
    %p26 = por %p24, %p25
    %p27 = scmp.ne.s32.totalorder %s19, %s22
    %p28 = scmp.eq.s32.totalorder %s9, 0
    %p29 = por %p27, %p28
    %p30 = scmp.ne.s32.totalorder %s19, %s22
    %p31 = scmp.eq.s32.totalorder %s14, 1
    %p32 = por %p30, %p31
    %p33 = scmp.ne.s32.totalorder %s22, %s23
    %p34 = scmp.eq.s32.totalorder %s14, 0
    %p35 = por %p33, %p34
    %p36 = scmp.ne.s32.totalorder %s22, %s23
    %p37 = scmp.eq.s32.totalorder %s15, 1
    %p38 = por %p36, %p37
    %p40 = scmp.ne.s32.totalorder %s23, %s39
    %p41 = scmp.eq.s32.totalorder %s15, 0
    %p42 = por %p40, %p41
    %s44 = sadd.s32 %s43, 1
    %p47 = scmp.eq.s32.totalorder %s9, 1
    %p48 = scmp.ne.s32.totalorder %s43, %s45
    %p49 = scmp.eq.s32.totalorder %s9, 0
    %p50 = por %p48, %p49
    %p51 = scmp.ne.s32.totalorder %s43, %s45
    %p52 = scmp.eq.s32.totalorder %s14, 1
    %p53 = por %p51, %p52
    %p54 = scmp.ne.s32.totalorder %s45, %s46
    %p55 = scmp.eq.s32.totalorder %s14, 0
    %p56 = por %p54, %p55
    %p57 = scmp.ne.s32.totalorder %s45, %s46
    %p58 = scmp.eq.s32.totalorder %s15, 1
    %p59 = por %p57, %p58
    %p61 = scmp.ne.s32.totalorder %s46, %s60
    %p62 = scmp.eq.s32.totalorder %s15, 0
    %p63 = por %p61, %p62
    %s65 = sadd.s32 %s64, 1
    %p68 = scmp.eq.s32.totalorder %s9, 1
    %p69 = scmp.ne.s32.totalorder %s64, %s66
    %p70 = scmp.eq.s32.totalorder %s9, 0
    %p71 = por %p69, %p70
    %p72 = scmp.ne.s32.totalorder %s64, %s66
    %p73 = scmp.eq.s32.totalorder %s14, 1
    %p74 = por %p72, %p73
    %p75 = scmp.ne.s32.totalorder %s66, %s67
    %p76 = scmp.eq.s32.totalorder %s14, 0
    %p77 = por %p75, %p76
    %p78 = scmp.ne.s32.totalorder %s66, %s67
    %p79 = scmp.eq.s32.totalorder %s15, 1
    %p80 = por %p78, %p79
    %p82 = scmp.ne.s32.totalorder %s67, %s81
    %p83 = scmp.eq.s32.totalorder %s15, 0
    %p84 = por %p82, %p83
    %s85 = ssub.s32 %s9, %s16
    %p86 = scmp.eq.s32.totalorder %s85, 0
    %s88 = sadd.s32 %s87, 1
    %s89 = scalar_select %p86, %s87, %s88
    %p92 = pneg %p86
    %p93 = scmp.eq.s32.totalorder %s9, 1
    %p94 = por %p92, %p93
    %p95 = scmp.ne.s32.totalorder %s87, %s90
    %p96 = scmp.eq.s32.totalorder %s9, 0
    %p97 = por %p95, %p96
    %p98 = scmp.ne.s32.totalorder %s87, %s90
    %p99 = scmp.eq.s32.totalorder %s14, 1
    %p100 = por %p98, %p99
    %p101 = scmp.ne.s32.totalorder %s90, %s91
    %p102 = scmp.eq.s32.totalorder %s14, 0
    %p103 = por %p101, %p102
    %p104 = scmp.ne.s32.totalorder %s90, %s91
    %p105 = scmp.eq.s32.totalorder %s15, 1
    %p106 = por %p104, %p105
    %p108 = scmp.ne.s32.totalorder %s91, %s107
    %p109 = scmp.eq.s32.totalorder %s15, 0
    %p110 = por %p108, %p109
    %p111 = scmp.le.s32.totalorder 1, %s9
    %p112 = scmp.lt.s32.totalorder %s9, 3
    %p113 = pnand %p111, %p112
    %p114 = pneg %p113
    // Predicated region
    $region9: #{forward.15} parent=5 // pred_check
      _
    $region10: #{forward.15} parent=5 // pred_check_branch
      %116 = sbr.rel (%p113) target = $region12
    $region11: #{forward.15} parent=5 // pred_region
      %s117 = ssub.s32 %s9, 1
      // Predicated region
      $region13: #{forward.15} parent=11 // pred_check
        %p118 = pneg %p56
      $region14: #{forward.15} parent=11 // pred_check_branch
        %120 = sbr.rel (%p118) target = $region16
      $region15: #{forward.15} parent=11 // pred_region
        _
      $region16: #{forward.15} parent=11 // pred_fallthru
        _
      // Predicated region
      $region17: #{forward.15} parent=11 // pred_check
        %p121 = pneg %p77
      $region18: #{forward.15} parent=11 // pred_check_branch
        %123 = sbr.rel (%p121) target = $region20
      $region19: #{forward.15} parent=11 // pred_region
        _
      $region20: #{forward.15} parent=11 // pred_fallthru
        _
    $region12: #{forward.15} parent=5 // pred_fallthru
      _
    %p124 = scmp.lt.s32.totalorder %s9, 2
    // Predicated region
    $region21: #{forward.15} parent=5 // pred_check
      %p125 = pneg %p124
    $region22: #{forward.15} parent=5 // pred_check_branch
      %127 = sbr.rel (%p125) target = $region24
    $region23: #{forward.15} parent=5 // pred_region
      // Predicated region
      $region25: #{forward.15} parent=23 // pred_check
        %p128 = pneg %p29
      $region26: #{forward.15} parent=23 // pred_check_branch
        %130 = sbr.rel (%p128) target = $region28
      $region27: #{forward.15} parent=23 // pred_region
        %s131 = smul.u32 32, %s9
        %p132 = scmp.lt.s32.totalorder %s131, 63
        %s133 = scalar_select %p132, %s131, 63
        %s134 = smul.addr %s133, 8
        %s135 = scalar_lea.vmem %s0, %s134
        %s136 = smul.u32 32, %s9
      $region28: #{forward.15} parent=23 // pred_fallthru
        _
    $region24: #{forward.15} parent=5 // pred_fallthru
      _
    %p137 = scmp.le.s32.totalorder 1, %s9
    %p138 = scmp.lt.s32.totalorder %s9, 3
    %p139 = pnand %p137, %p138
    %p140 = pneg %p139
    // Predicated region
    $region29: #{forward.15} parent=5 // pred_check
      _
    $region30: #{forward.15} parent=5 // pred_check_branch
      %142 = sbr.rel (%p139) target = $region32
    $region31: #{forward.15} parent=5 // pred_region
      %s143 = ssub.s32 %s9, 1
      %s144 = smul.u32 32, %s14
      %p145 = scmp.lt.s32.totalorder %s144, 63
      %s146 = scalar_select %p145, %s144, 63
      %s147 = smul.addr %s146, 8
      %s148 = scalar_lea.vmem %s0, %s147
      %p149 = pneg %p35
      %p150 = pneg %p32
      %p151 = pneg %p56
      %p152 = pneg %p53
      %p153 = pneg %p77
      %p154 = pneg %p74
      %p155 = pneg %p103
      %p156 = pneg %p100
      %s157 = smul.u32 32, %s14
      %p158 = scmp.lt.s32.totalorder %s157, 63
      %s159 = scalar_select %p158, %s157, 63
      %s160 = smul.addr %s159, 4
      %s161 = scalar_lea.vmem %s3, %s160
      %s162 = smul.u32 32, %s14
      %p163 = scmp.lt.s32.totalorder %s162, 63
      %s164 = scalar_select %p163, %s162, 63
      %s165 = smul.addr %s164, 8
      %s166 = scalar_lea.vmem %s0, %s165
      %s167 = smul.u32 32, %s14
      %s168 = smul.u32 32, %s14
      %p169 = scmp.lt.s32.totalorder %s168, 63
      %s170 = scalar_select %p169, %s168, 63
      %s171 = smul.addr %s170, 4
      %s172 = scalar_lea.vmem %s3, %s171
      %s173 = smul.u32 32, %s14
      %v174 = vld [vmem:[%s166] sm:$0xff]
      %v175 = vld [vmem:[%s166 + $0x8] sm:$0xff]
      %v176 = vld [vmem:[%s166 + $0x10] sm:$0xff]
      %v177 = vld [vmem:[%s166 + $0x18] sm:$0xff]
      %v178 = vld [vmem:[%s166 + $0x20] sm:$0xff]
      %v179 = vld [vmem:[%s166 + $0x28] sm:$0xff]
      %v180 = vld [vmem:[%s166 + $0x30] sm:$0xff]
      %v181 = vld [vmem:[%s166 + $0x38] sm:$0xff]
      %v182 = vld [vmem:[%s166 + $0x40] sm:$0xff]
      %v183 = vld [vmem:[%s166 + $0x48] sm:$0xff]
      %v184 = vld [vmem:[%s166 + $0x50] sm:$0xff]
      %v185 = vld [vmem:[%s166 + $0x58] sm:$0xff]
      %v186 = vld [vmem:[%s166 + $0x60] sm:$0xff]
      %v187 = vld [vmem:[%s166 + $0x68] sm:$0xff]
      %v188 = vld [vmem:[%s166 + $0x70] sm:$0xff]
      %v189 = vld [vmem:[%s166 + $0x78] sm:$0xff]
      %v190 = vld [vmem:[%s166 + $0x80] sm:$0xff]
      %v191 = vld [vmem:[%s166 + $0x88] sm:$0xff]
      %v192 = vld [vmem:[%s166 + $0x90] sm:$0xff]
      %v193 = vld [vmem:[%s166 + $0x98] sm:$0xff]
      %v194 = vld [vmem:[%s166 + $0xa0] sm:$0xff]
      %v195 = vld [vmem:[%s166 + $0xa8] sm:$0xff]
      %v196 = vld [vmem:[%s166 + $0xb0] sm:$0xff]
      %v197 = vld [vmem:[%s166 + $0xb8] sm:$0xff]
      %v198 = vld [vmem:[%s166 + $0xc0] sm:$0xff]
      %v199 = vld [vmem:[%s166 + $0xc8] sm:$0xff]
      %v200 = vld [vmem:[%s166 + $0xd0] sm:$0xff]
      %v201 = vld [vmem:[%s166 + $0xd8] sm:$0xff]
      %v202 = vld [vmem:[%s166 + $0xe0] sm:$0xff]
      %v203 = vld [vmem:[%s166 + $0xe8] sm:$0xff]
      %v204 = vld [vmem:[%s166 + $0xf0] sm:$0xff]
      %v205 = vld [vmem:[%s166 + $0xf8] sm:$0xff]
      %v206 = vld [vmem:[%s1] sm:$0x1]
      %v208 = vlaneseq
      %v209 = vshrl.u32 %v208, 7
      %v210 = vsub.s32 0, %v209
      %v211 = vrot.slane %v206, %v210
      %v213 = vmul.f32 %v174, %v211
      %v214 = vmul.f32 %v175, %v211
      %v215 = vmul.f32 %v176, %v211
      %v216 = vmul.f32 %v177, %v211
      %v217 = vmul.f32 %v178, %v211
      %v218 = vmul.f32 %v179, %v211
      %v219 = vmul.f32 %v180, %v211
      %v220 = vmul.f32 %v181, %v211
      %v221 = vmul.f32 %v182, %v211
      %v222 = vmul.f32 %v183, %v211
      %v223 = vmul.f32 %v184, %v211
      %v224 = vmul.f32 %v185, %v211
      %v225 = vmul.f32 %v186, %v211
      %v226 = vmul.f32 %v187, %v211
      %v227 = vmul.f32 %v188, %v211
      %v228 = vmul.f32 %v189, %v211
      %v229 = vmul.f32 %v190, %v211
      %v230 = vmul.f32 %v191, %v211
      %v231 = vmul.f32 %v192, %v211
      %v232 = vmul.f32 %v193, %v211
      %v233 = vmul.f32 %v194, %v211
      %v234 = vmul.f32 %v195, %v211
      %v235 = vmul.f32 %v196, %v211
      %v236 = vmul.f32 %v197, %v211
      %v237 = vmul.f32 %v198, %v211
      %v238 = vmul.f32 %v199, %v211
      %v239 = vmul.f32 %v200, %v211
      %v240 = vmul.f32 %v201, %v211
      %v241 = vmul.f32 %v202, %v211
      %v242 = vmul.f32 %v203, %v211
      %v243 = vmul.f32 %v204, %v211
      %v244 = vmul.f32 %v205, %v211
      %v245 = vld [vmem:[%s2] sm:$0x1]
      %v247 = vlaneseq
      %v248 = vshrl.u32 %v247, 7
      %v249 = vsub.s32 0, %v248
      %v250 = vrot.slane %v245, %v249
      %v252 = vadd.f32 %v213, %v250
      %v253 = vadd.f32 %v214, %v250
      %v254 = vadd.f32 %v215, %v250
      %v255 = vadd.f32 %v216, %v250
      %v256 = vadd.f32 %v217, %v250
      %v257 = vadd.f32 %v218, %v250
      %v258 = vadd.f32 %v219, %v250
      %v259 = vadd.f32 %v220, %v250
      %v260 = vadd.f32 %v221, %v250
      %v261 = vadd.f32 %v222, %v250
      %v262 = vadd.f32 %v223, %v250
      %v263 = vadd.f32 %v224, %v250
      %v264 = vadd.f32 %v225, %v250
      %v265 = vadd.f32 %v226, %v250
      %v266 = vadd.f32 %v227, %v250
      %v267 = vadd.f32 %v228, %v250
      %v268 = vadd.f32 %v229, %v250
      %v269 = vadd.f32 %v230, %v250
      %v270 = vadd.f32 %v231, %v250
      %v271 = vadd.f32 %v232, %v250
      %v272 = vadd.f32 %v233, %v250
      %v273 = vadd.f32 %v234, %v250
      %v274 = vadd.f32 %v235, %v250
      %v275 = vadd.f32 %v236, %v250
      %v276 = vadd.f32 %v237, %v250
      %v277 = vadd.f32 %v238, %v250
      %v278 = vadd.f32 %v239, %v250
      %v279 = vadd.f32 %v240, %v250
      %v280 = vadd.f32 %v241, %v250
      %v281 = vadd.f32 %v242, %v250
      %v282 = vadd.f32 %v243, %v250
      %v283 = vadd.f32 %v244, %v250
      %v284 = vmax.f32 %v252, 0.0
      %v285 = vmax.f32 %v253, 0.0
      %v286 = vmax.f32 %v254, 0.0
      %v287 = vmax.f32 %v255, 0.0
      %v288 = vmax.f32 %v256, 0.0
      %v289 = vmax.f32 %v257, 0.0
      %v290 = vmax.f32 %v258, 0.0
      %v291 = vmax.f32 %v259, 0.0
      %v292 = vmax.f32 %v260, 0.0
      %v293 = vmax.f32 %v261, 0.0
      %v294 = vmax.f32 %v262, 0.0
      %v295 = vmax.f32 %v263, 0.0
      %v296 = vmax.f32 %v264, 0.0
      %v297 = vmax.f32 %v265, 0.0
      %v298 = vmax.f32 %v266, 0.0
      %v299 = vmax.f32 %v267, 0.0
      %v300 = vmax.f32 %v268, 0.0
      %v301 = vmax.f32 %v269, 0.0
      %v302 = vmax.f32 %v270, 0.0
      %v303 = vmax.f32 %v271, 0.0
      %v304 = vmax.f32 %v272, 0.0
      %v305 = vmax.f32 %v273, 0.0
      %v306 = vmax.f32 %v274, 0.0
      %v307 = vmax.f32 %v275, 0.0
      %v308 = vmax.f32 %v276, 0.0
      %v309 = vmax.f32 %v277, 0.0
      %v310 = vmax.f32 %v278, 0.0
      %v311 = vmax.f32 %v279, 0.0
      %v312 = vmax.f32 %v280, 0.0
      %v313 = vmax.f32 %v281, 0.0
      %v314 = vmax.f32 %v282, 0.0
      %v315 = vmax.f32 %v283, 0.0
      %v316 = vpack.c.bf16 %v285, %v284
      %v317 = vpack.c.bf16 %v287, %v286
      %v318 = vpack.c.bf16 %v289, %v288
      %v319 = vpack.c.bf16 %v291, %v290
      %v320 = vpack.c.bf16 %v293, %v292
      %v321 = vpack.c.bf16 %v295, %v294
      %v322 = vpack.c.bf16 %v297, %v296
      %v323 = vpack.c.bf16 %v299, %v298
      %v324 = vpack.c.bf16 %v301, %v300
      %v325 = vpack.c.bf16 %v303, %v302
      %v326 = vpack.c.bf16 %v305, %v304
      %v327 = vpack.c.bf16 %v307, %v306
      %v328 = vpack.c.bf16 %v309, %v308
      %v329 = vpack.c.bf16 %v311, %v310
      %v330 = vpack.c.bf16 %v313, %v312
      %v331 = vpack.c.bf16 %v315, %v314
      %v348 = vunpack.c.l.b16 %v316
      %v349 = vunpack.c.h.b16 %v316
      %v350 = vunpack.c.l.b16 %v317
      %v351 = vunpack.c.h.b16 %v317
      %v352 = vunpack.c.l.b16 %v318
      %v353 = vunpack.c.h.b16 %v318
      %v354 = vunpack.c.l.b16 %v319
      %v355 = vunpack.c.h.b16 %v319
      %v356 = vunpack.c.l.b16 %v320
      %v357 = vunpack.c.h.b16 %v320
      %v358 = vunpack.c.l.b16 %v321
      %v359 = vunpack.c.h.b16 %v321
      %v360 = vunpack.c.l.b16 %v322
      %v361 = vunpack.c.h.b16 %v322
      %v362 = vunpack.c.l.b16 %v323
      %v363 = vunpack.c.h.b16 %v323
      %v364 = vunpack.c.l.b16 %v324
      %v365 = vunpack.c.h.b16 %v324
      %v366 = vunpack.c.l.b16 %v325
      %v367 = vunpack.c.h.b16 %v325
      %v368 = vunpack.c.l.b16 %v326
      %v369 = vunpack.c.h.b16 %v326
      %v370 = vunpack.c.l.b16 %v327
      %v371 = vunpack.c.h.b16 %v327
      %v372 = vunpack.c.l.b16 %v328
      %v373 = vunpack.c.h.b16 %v328
      %v374 = vunpack.c.l.b16 %v329
      %v375 = vunpack.c.h.b16 %v329
      %v376 = vunpack.c.l.b16 %v330
      %v377 = vunpack.c.h.b16 %v330
      %v378 = vunpack.c.l.b16 %v331
      %v379 = vunpack.c.h.b16 %v331
      %v380 = vpack.c.b16 %v348, %v348
      %v381 = vpack.c.b16 %v349, %v349
      %v382 = vpack.c.b16 %v350, %v350
      %v383 = vpack.c.b16 %v351, %v351
      %v384 = vpack.c.b16 %v352, %v352
      %v385 = vpack.c.b16 %v353, %v353
      %v386 = vpack.c.b16 %v354, %v354
      %v387 = vpack.c.b16 %v355, %v355
      %v388 = vpack.c.b16 %v356, %v356
      %v389 = vpack.c.b16 %v357, %v357
      %v390 = vpack.c.b16 %v358, %v358
      %v391 = vpack.c.b16 %v359, %v359
      %v392 = vpack.c.b16 %v360, %v360
      %v393 = vpack.c.b16 %v361, %v361
      %v394 = vpack.c.b16 %v362, %v362
      %v395 = vpack.c.b16 %v363, %v363
      %v396 = vpack.c.b16 %v364, %v364
      %v397 = vpack.c.b16 %v365, %v365
      %v398 = vpack.c.b16 %v366, %v366
      %v399 = vpack.c.b16 %v367, %v367
      %v400 = vpack.c.b16 %v368, %v368
      %v401 = vpack.c.b16 %v369, %v369
      %v402 = vpack.c.b16 %v370, %v370
      %v403 = vpack.c.b16 %v371, %v371
      %v404 = vpack.c.b16 %v372, %v372
      %v405 = vpack.c.b16 %v373, %v373
      %v406 = vpack.c.b16 %v374, %v374
      %v407 = vpack.c.b16 %v375, %v375
      %v408 = vpack.c.b16 %v376, %v376
      %v409 = vpack.c.b16 %v377, %v377
      %v410 = vpack.c.b16 %v378, %v378
      %v411 = vpack.c.b16 %v379, %v379
      %444 = vst [vmem:[%s172] sm:$0xf] %v380
      %445 = vst [vmem:[%s172 + $0x4] sm:$0xf] %v381
      %446 = vst [vmem:[%s172 + $0x8] sm:$0xf] %v382
      %447 = vst [vmem:[%s172 + $0xc] sm:$0xf] %v383
      %448 = vst [vmem:[%s172 + $0x10] sm:$0xf] %v384
      %449 = vst [vmem:[%s172 + $0x14] sm:$0xf] %v385
      %450 = vst [vmem:[%s172 + $0x18] sm:$0xf] %v386
      %451 = vst [vmem:[%s172 + $0x1c] sm:$0xf] %v387
      %452 = vst [vmem:[%s172 + $0x20] sm:$0xf] %v388
      %453 = vst [vmem:[%s172 + $0x24] sm:$0xf] %v389
      %454 = vst [vmem:[%s172 + $0x28] sm:$0xf] %v390
      %455 = vst [vmem:[%s172 + $0x2c] sm:$0xf] %v391
      %456 = vst [vmem:[%s172 + $0x30] sm:$0xf] %v392
      %457 = vst [vmem:[%s172 + $0x34] sm:$0xf] %v393
      %458 = vst [vmem:[%s172 + $0x38] sm:$0xf] %v394
      %459 = vst [vmem:[%s172 + $0x3c] sm:$0xf] %v395
      %460 = vst [vmem:[%s172 + $0x40] sm:$0xf] %v396
      %461 = vst [vmem:[%s172 + $0x44] sm:$0xf] %v397
      %462 = vst [vmem:[%s172 + $0x48] sm:$0xf] %v398
      %463 = vst [vmem:[%s172 + $0x4c] sm:$0xf] %v399
      %464 = vst [vmem:[%s172 + $0x50] sm:$0xf] %v400
      %465 = vst [vmem:[%s172 + $0x54] sm:$0xf] %v401
      %466 = vst [vmem:[%s172 + $0x58] sm:$0xf] %v402
      %467 = vst [vmem:[%s172 + $0x5c] sm:$0xf] %v403
      %468 = vst [vmem:[%s172 + $0x60] sm:$0xf] %v404
      %469 = vst [vmem:[%s172 + $0x64] sm:$0xf] %v405
      %470 = vst [vmem:[%s172 + $0x68] sm:$0xf] %v406
      %471 = vst [vmem:[%s172 + $0x6c] sm:$0xf] %v407
      %472 = vst [vmem:[%s172 + $0x70] sm:$0xf] %v408
      %473 = vst [vmem:[%s172 + $0x74] sm:$0xf] %v409
      %474 = vst [vmem:[%s172 + $0x78] sm:$0xf] %v410
      %475 = vst [vmem:[%s172 + $0x7c] sm:$0xf] %v411
      %s476 = smul.u32 32, %s14
      %p477 = scmp.lt.s32.totalorder %s476, 63
      %s478 = scalar_select %p477, %s476, 63
      %s479 = smul.addr %s478, 4
      %s480 = scalar_lea.vmem %s3, %s479
      // Predicated region
      $region33: #{forward.15} parent=31 // pred_check
        %p481 = pneg %p100
      $region34: #{forward.15} parent=31 // pred_check_branch
        %483 = sbr.rel (%p481) target = $region36
      $region35: #{forward.15} parent=31 // pred_region
        %s484 = smul.u32 32, %s14
      $region36: #{forward.15} parent=31 // pred_fallthru
        _
    $region32: #{forward.15} parent=5 // pred_fallthru
      _
    %p485 = scmp.le.s32.totalorder 2, %s9
    // Predicated region
    $region37: #{forward.15} parent=5 // pred_check
      %p486 = pneg %p485
    $region38: #{forward.15} parent=5 // pred_check_branch
      %488 = sbr.rel (%p486) target = $region40
    $region39: #{forward.15} parent=5 // pred_region
      %s489 = ssub.s32 %s9, 2
      // Predicated region
      $region41: #{forward.15} parent=39 // pred_check
        %p490 = pneg %p106
      $region42: #{forward.15} parent=39 // pred_check_branch
        %492 = sbr.rel (%p490) target = $region44
      $region43: #{forward.15} parent=39 // pred_region
        %s493 = smul.u32 32, %s15
        %p494 = scmp.lt.s32.totalorder %s493, 63
        %s495 = scalar_select %p494, %s493, 63
        %s496 = smul.addr %s495, 4
        %s497 = scalar_lea.vmem %s3, %s496
      $region44: #{forward.15} parent=39 // pred_fallthru
        _
    $region40: #{forward.15} parent=5 // pred_fallthru
      _
  $region6: #{forward.15} parent=0 // loop_footer
    %s13 = sadd.s32 1, %s9
  $region7: #{forward.15} parent=0 // loop_footer_branch
    %8 = sbr.rel target = $region3
  $region8: #{forward.15} parent=0 // loop_exit
    _

// kernel: forward.14
$region0: #{forward.14}
  #allocation0 [shape = 'u32[]', space=smem, size = 0x4, offset = 0x4, fixed_abs, tag = 'smem constant byte address 0x4 - core index']
  #allocation1 [shape = 'u32[144,128]{1,0:T(1,128)}', space=vmem, size = 0x12000, scoped, tag = 'internal scratch']
  %s0 = inlined_call_operand.vmem [shape: bf16[512,768], index: 0, kind: input, shape index: {}]
  %s1 = inlined_call_operand.vmem [shape: bf16[768,128], index: 1, kind: input, shape index: {}]
  %s2 = inlined_call_operand.vmem [shape: f32[512,128], index: 2, kind: output, shape index: {0}]
  %s3 = inlined_call_operand.vmem [shape: f32[16,128], index: 3, kind: output, shape index: {1}]
  %4 = xla_tuple %s2, %s3
  %s5 = sld [smem:[#allocation0]]
  $region57: #{forward.14} parent=0
    _
  %s7 = ssub.s32 1, %s5
  %s8 = scalar_select 0, %s7, %s5
  loop: start=0, step=1, limit=4
  $region2: #{forward.14} parent=0 // loop_pre_header
    _
  $region3: #{forward.14} parent=0 // loop_header
    %s10 = sphi 0, %s14
    %p11 = scmp.ge.s32.totalorder %s10, 4
    %s17 = sphi 0, %s29
    %s18 = sphi 0, %s25
    %s19 = sphi 0, %s17
    %s20 = sphi 0, %s18
    %s21 = sphi 0, %s19
    %s22 = sphi 0, %s20
    %s34 = sphi 0, %s36
    %s37 = sphi 0, %s34
    %s38 = sphi 0, %s37
    %s54 = sphi 0, %s38
    %s60 = sphi 0, %s62
    %s63 = sphi 0, %s60
    %s64 = sphi 0, %s63
    %s80 = sphi 0, %s64
    %s86 = sphi 0, %s88
    %s89 = sphi 0, %s86
    %s90 = sphi 0, %s89
    %s106 = sphi 0, %s90
    %s112 = sphi 0, %s114
    %s115 = sphi 0, %s112
    %s116 = sphi 0, %s115
    %s132 = sphi 0, %s116
  $region4: #{forward.14} parent=0 // loop_header_branch
    %13 = sbr.rel (%p11) target = $region8
  $region5: #{forward.14} parent=0 // loop_body
    %s15 = ssub.s32 %s10, 1
    %s16 = ssub.s32 %s10, 2
    %s23 = sadd.s32 1, %s18
    %p24 = scmp.ge.s32.totalorder %s23, 1
    %s25 = scalar_select %p24, 0, %s23
    %s26 = sadd.s32 1, %s17
    %s27 = scalar_select %p24, %s26, %s17
    %p28 = scmp.ge.s32.totalorder %s27, 2
    %s29 = scalar_select %p28, 0, %s27
    %s30 = ssub.s32 %s17, %s29
    %s31 = ssub.s32 %s18, %s25
    %s32 = sor.u32 %s30, %s31
    %p33 = scmp.eq.s32.totalorder %s32, 0
    %s35 = sadd.s32 %s34, 1
    %s36 = scalar_select %p33, %s34, %s35
    %p39 = pneg %p33
    %p40 = scmp.eq.s32.totalorder %s10, 1
    %p41 = por %p39, %p40
    %p42 = scmp.ne.s32.totalorder %s34, %s37
    %p43 = scmp.eq.s32.totalorder %s10, 0
    %p44 = por %p42, %p43
    %p45 = scmp.ne.s32.totalorder %s34, %s37
    %p46 = scmp.eq.s32.totalorder %s15, 1
    %p47 = por %p45, %p46
    %p48 = scmp.ne.s32.totalorder %s37, %s38
    %p49 = scmp.eq.s32.totalorder %s15, 0
    %p50 = por %p48, %p49
    %p51 = scmp.ne.s32.totalorder %s37, %s38
    %p52 = scmp.eq.s32.totalorder %s16, 1
    %p53 = por %p51, %p52
    %p55 = scmp.ne.s32.totalorder %s38, %s54
    %p56 = scmp.eq.s32.totalorder %s16, 0
    %p57 = por %p55, %p56
    %s58 = ssub.s32 %s18, %s25
    %p59 = scmp.eq.s32.totalorder %s58, 0
    %s61 = sadd.s32 %s60, 1
    %s62 = scalar_select %p59, %s60, %s61
    %p65 = pneg %p59
    %p66 = scmp.eq.s32.totalorder %s10, 1
    %p67 = por %p65, %p66
    %p68 = scmp.ne.s32.totalorder %s60, %s63
    %p69 = scmp.eq.s32.totalorder %s10, 0
    %p70 = por %p68, %p69
    %p71 = scmp.ne.s32.totalorder %s60, %s63
    %p72 = scmp.eq.s32.totalorder %s15, 1
    %p73 = por %p71, %p72
    %p74 = scmp.ne.s32.totalorder %s63, %s64
    %p75 = scmp.eq.s32.totalorder %s15, 0
    %p76 = por %p74, %p75
    %p77 = scmp.ne.s32.totalorder %s63, %s64
    %p78 = scmp.eq.s32.totalorder %s16, 1
    %p79 = por %p77, %p78
    %p81 = scmp.ne.s32.totalorder %s64, %s80
    %p82 = scmp.eq.s32.totalorder %s16, 0
    %p83 = por %p81, %p82
    %s84 = ssub.s32 %s17, %s29
    %p85 = scmp.eq.s32.totalorder %s84, 0
    %s87 = sadd.s32 %s86, 1
    %s88 = scalar_select %p85, %s86, %s87
    %p91 = pneg %p85
    %p92 = scmp.eq.s32.totalorder %s10, 1
    %p93 = por %p91, %p92
    %p94 = scmp.ne.s32.totalorder %s86, %s89
    %p95 = scmp.eq.s32.totalorder %s10, 0
    %p96 = por %p94, %p95
    %p97 = scmp.ne.s32.totalorder %s86, %s89
    %p98 = scmp.eq.s32.totalorder %s15, 1
    %p99 = por %p97, %p98
    %p100 = scmp.ne.s32.totalorder %s89, %s90
    %p101 = scmp.eq.s32.totalorder %s15, 0
    %p102 = por %p100, %p101
    %p103 = scmp.ne.s32.totalorder %s89, %s90
    %p104 = scmp.eq.s32.totalorder %s16, 1
    %p105 = por %p103, %p104
    %p107 = scmp.ne.s32.totalorder %s90, %s106
    %p108 = scmp.eq.s32.totalorder %s16, 0
    %p109 = por %p107, %p108
    %s110 = ssub.s32 %s17, %s29
    %p111 = scmp.eq.s32.totalorder %s110, 0
    %s113 = sadd.s32 %s112, 1
    %s114 = scalar_select %p111, %s112, %s113
    %p117 = pneg %p111
    %p118 = scmp.eq.s32.totalorder %s10, 1
    %p119 = por %p117, %p118
    %p120 = scmp.ne.s32.totalorder %s112, %s115
    %p121 = scmp.eq.s32.totalorder %s10, 0
    %p122 = por %p120, %p121
    %p123 = scmp.ne.s32.totalorder %s112, %s115
    %p124 = scmp.eq.s32.totalorder %s15, 1
    %p125 = por %p123, %p124
    %p126 = scmp.ne.s32.totalorder %s115, %s116
    %p127 = scmp.eq.s32.totalorder %s15, 0
    %p128 = por %p126, %p127
    %p129 = scmp.ne.s32.totalorder %s115, %s116
    %p130 = scmp.eq.s32.totalorder %s16, 1
    %p131 = por %p129, %p130
    %p133 = scmp.ne.s32.totalorder %s116, %s132
    %p134 = scmp.eq.s32.totalorder %s16, 0
    %p135 = por %p133, %p134
    %p136 = scmp.le.s32.totalorder 1, %s10
    %p137 = scmp.lt.s32.totalorder %s10, 3
    %p138 = pnand %p136, %p137
    %p139 = pneg %p138
    // Predicated region
    $region9: #{forward.14} parent=5 // pred_check
      _
    $region10: #{forward.14} parent=5 // pred_check_branch
      %141 = sbr.rel (%p138) target = $region12
    $region11: #{forward.14} parent=5 // pred_region
      %s142 = ssub.s32 %s10, 1
      // Predicated region
      $region13: #{forward.14} parent=11 // pred_check
        %p143 = pneg %p76
      $region14: #{forward.14} parent=11 // pred_check_branch
        %145 = sbr.rel (%p143) target = $region16
      $region15: #{forward.14} parent=11 // pred_region
        %s146 = smul.u32 96, %s20
        %p147 = scmp.lt.s32.totalorder %s146, 95
        %s148 = scalar_select %p147, %s146, 95
        %s149 = smul.addr %s148, 4
        %s150 = scalar_lea.vmem %s1, %s149
        %s151 = smul.u32 96, %s20
      $region16: #{forward.14} parent=11 // pred_fallthru
        _
    $region12: #{forward.14} parent=5 // pred_fallthru
      _
    %p152 = scmp.lt.s32.totalorder %s10, 2
    // Predicated region
    $region17: #{forward.14} parent=5 // pred_check
      %p153 = pneg %p152
    $region18: #{forward.14} parent=5 // pred_check_branch
      %155 = sbr.rel (%p153) target = $region20
    $region19: #{forward.14} parent=5 // pred_region
      // Predicated region
      $region21: #{forward.14} parent=19 // pred_check
        %p156 = pneg %p44
      $region22: #{forward.14} parent=19 // pred_check_branch
        %158 = sbr.rel (%p156) target = $region24
      $region23: #{forward.14} parent=19 // pred_region
        %s159 = smul.u32 32, %s17
        %s160 = smul.u32 6, %s18
        %p161 = scmp.lt.s32.totalorder %s159, 63
        %s162 = scalar_select %p161, %s159, 63
        %p163 = scmp.lt.s32.totalorder %s160, 5
        %s164 = scalar_select %p163, %s160, 5
        %s165 = smul.addr %s162, 6
        %s166 = sadd.s32 %s164, %s165
        %s167 = smul.addr %s166, 4
        %s168 = scalar_lea.vmem %s0, %s167
        %s169 = smul.u32 32, %s17
        %s170 = smul.u32 6, %s18
      $region24: #{forward.14} parent=19 // pred_fallthru
        _
    $region20: #{forward.14} parent=5 // pred_fallthru
      _
    %p171 = scmp.le.s32.totalorder 1, %s10
    %p172 = scmp.lt.s32.totalorder %s10, 3
    %p173 = pnand %p171, %p172
    %p174 = pneg %p173
    // Predicated region
    $region25: #{forward.14} parent=5 // pred_check
      _
    $region26: #{forward.14} parent=5 // pred_check_branch
      %176 = sbr.rel (%p173) target = $region28
    $region27: #{forward.14} parent=5 // pred_region
      %s177 = ssub.s32 %s10, 1
      %s178 = smul.u32 32, %s19
      %s179 = smul.u32 6, %s20
      %p180 = scmp.lt.s32.totalorder %s178, 63
      %s181 = scalar_select %p180, %s178, 63
      %p182 = scmp.lt.s32.totalorder %s179, 5
      %s183 = scalar_select %p182, %s179, 5
      %s184 = smul.addr %s181, 6
      %s185 = sadd.s32 %s183, %s184
      %s186 = smul.addr %s185, 4
      %s187 = scalar_lea.vmem %s0, %s186
      %p188 = pneg %p50
      %p189 = pneg %p47
      %s190 = smul.u32 96, %s20
      %p191 = scmp.lt.s32.totalorder %s190, 95
      %s192 = scalar_select %p191, %s190, 95
      %s193 = smul.addr %s192, 4
      %s194 = scalar_lea.vmem %s1, %s193
      %p195 = pneg %p76
      %p196 = pneg %p73
      %p197 = pneg %p102
      %p198 = pneg %p99
      %s199 = smul.u32 32, %s19
      %p200 = scmp.lt.s32.totalorder %s199, 63
      %s201 = scalar_select %p200, %s199, 63
      %s202 = smul.addr %s201, 8
      %s203 = scalar_lea.vmem %s2, %s202
      %p204 = pneg %p128
      %p205 = pneg %p125
      %p206 = scmp.lt.s32.totalorder %s19, 1
      %s207 = scalar_select %p206, %s19, 1
      %s208 = smul.addr %s207, 8
      %s209 = scalar_lea.vmem %s3, %s208
      %s210 = smul.u32 32, %s19
      %s211 = smul.u32 6, %s20
      %p212 = scmp.lt.s32.totalorder %s210, 63
      %s213 = scalar_select %p212, %s210, 63
      %p214 = scmp.lt.s32.totalorder %s211, 5
      %s215 = scalar_select %p214, %s211, 5
      %s216 = smul.addr %s213, 6
      %s217 = sadd.s32 %s215, %s216
      %s218 = smul.addr %s217, 4
      %s219 = scalar_lea.vmem %s0, %s218
      %s220 = smul.u32 32, %s19
      %s221 = smul.u32 6, %s20
      %s222 = smul.u32 96, %s20
      %p223 = scmp.lt.s32.totalorder %s222, 95
      %s224 = scalar_select %p223, %s222, 95
      %s225 = smul.addr %s224, 4
      %s226 = scalar_lea.vmem %s1, %s225
      %s227 = smul.u32 96, %s20
      %s228 = smul.u32 32, %s19
      %p229 = scmp.lt.s32.totalorder %s228, 63
      %s230 = scalar_select %p229, %s228, 63
      %s231 = smul.addr %s230, 8
      %s232 = scalar_lea.vmem %s2, %s231
      %s233 = smul.u32 32, %s19
      %p234 = scmp.lt.s32.totalorder %s19, 1
      %s235 = scalar_select %p234, %s19, 1
      %s236 = smul.addr %s235, 8
      %s237 = scalar_lea.vmem %s3, %s236
      %p239 = scmp.eq.s32.totalorder %s20, 0
      // Predicated region
      $region29: #{forward.14} parent=27 // pred_check
        %p240 = pneg %p239
      $region30: #{forward.14} parent=27 // pred_check_branch
        %242 = sbr.rel (%p240) target = $region32
      $region31: #{forward.14} parent=27 // pred_region
        %243 = vst [vmem:[%s232] sm:$0xff] 0.0
        %244 = vst [vmem:[%s232 + $0x8] sm:$0xff] 0.0
        %245 = vst [vmem:[%s232 + $0x10] sm:$0xff] 0.0
        %246 = vst [vmem:[%s232 + $0x18] sm:$0xff] 0.0
        %247 = vst [vmem:[%s232 + $0x20] sm:$0xff] 0.0
        %248 = vst [vmem:[%s232 + $0x28] sm:$0xff] 0.0
        %249 = vst [vmem:[%s232 + $0x30] sm:$0xff] 0.0
        %250 = vst [vmem:[%s232 + $0x38] sm:$0xff] 0.0
        %251 = vst [vmem:[%s232 + $0x40] sm:$0xff] 0.0
        %252 = vst [vmem:[%s232 + $0x48] sm:$0xff] 0.0
        %253 = vst [vmem:[%s232 + $0x50] sm:$0xff] 0.0
        %254 = vst [vmem:[%s232 + $0x58] sm:$0xff] 0.0
        %255 = vst [vmem:[%s232 + $0x60] sm:$0xff] 0.0
        %256 = vst [vmem:[%s232 + $0x68] sm:$0xff] 0.0
        %257 = vst [vmem:[%s232 + $0x70] sm:$0xff] 0.0
        %258 = vst [vmem:[%s232 + $0x78] sm:$0xff] 0.0
        %259 = vst [vmem:[%s232 + $0x80] sm:$0xff] 0.0
        %260 = vst [vmem:[%s232 + $0x88] sm:$0xff] 0.0
        %261 = vst [vmem:[%s232 + $0x90] sm:$0xff] 0.0
        %262 = vst [vmem:[%s232 + $0x98] sm:$0xff] 0.0
        %263 = vst [vmem:[%s232 + $0xa0] sm:$0xff] 0.0
        %264 = vst [vmem:[%s232 + $0xa8] sm:$0xff] 0.0
        %265 = vst [vmem:[%s232 + $0xb0] sm:$0xff] 0.0
        %266 = vst [vmem:[%s232 + $0xb8] sm:$0xff] 0.0
        %267 = vst [vmem:[%s232 + $0xc0] sm:$0xff] 0.0
        %268 = vst [vmem:[%s232 + $0xc8] sm:$0xff] 0.0
        %269 = vst [vmem:[%s232 + $0xd0] sm:$0xff] 0.0
        %270 = vst [vmem:[%s232 + $0xd8] sm:$0xff] 0.0
        %271 = vst [vmem:[%s232 + $0xe0] sm:$0xff] 0.0
        %272 = vst [vmem:[%s232 + $0xe8] sm:$0xff] 0.0
        %273 = vst [vmem:[%s232 + $0xf0] sm:$0xff] 0.0
        %274 = vst [vmem:[%s232 + $0xf8] sm:$0xff] 0.0
      $region32: #{forward.14} parent=27 // pred_fallthru
        _
      %v275 = vld [vmem:[%s232] sm:$0xff]
      %v276 = vld [vmem:[%s232 + $0x8] sm:$0xff]
      %v277 = vld [vmem:[%s232 + $0x10] sm:$0xff]
      %v278 = vld [vmem:[%s232 + $0x18] sm:$0xff]
      %v279 = vld [vmem:[%s232 + $0x20] sm:$0xff]
      %v280 = vld [vmem:[%s232 + $0x28] sm:$0xff]
      %v281 = vld [vmem:[%s232 + $0x30] sm:$0xff]
      %v282 = vld [vmem:[%s232 + $0x38] sm:$0xff]
      %v283 = vld [vmem:[%s232 + $0x40] sm:$0xff]
      %v284 = vld [vmem:[%s232 + $0x48] sm:$0xff]
      %v285 = vld [vmem:[%s232 + $0x50] sm:$0xff]
      %v286 = vld [vmem:[%s232 + $0x58] sm:$0xff]
      %v287 = vld [vmem:[%s232 + $0x60] sm:$0xff]
      %v288 = vld [vmem:[%s232 + $0x68] sm:$0xff]
      %v289 = vld [vmem:[%s232 + $0x70] sm:$0xff]
      %v290 = vld [vmem:[%s232 + $0x78] sm:$0xff]
      %v291 = vld [vmem:[%s232 + $0x80] sm:$0xff]
      %v292 = vld [vmem:[%s232 + $0x88] sm:$0xff]
      %v293 = vld [vmem:[%s232 + $0x90] sm:$0xff]
      %v294 = vld [vmem:[%s232 + $0x98] sm:$0xff]
      %v295 = vld [vmem:[%s232 + $0xa0] sm:$0xff]
      %v296 = vld [vmem:[%s232 + $0xa8] sm:$0xff]
      %v297 = vld [vmem:[%s232 + $0xb0] sm:$0xff]
      %v298 = vld [vmem:[%s232 + $0xb8] sm:$0xff]
      %v299 = vld [vmem:[%s232 + $0xc0] sm:$0xff]
      %v300 = vld [vmem:[%s232 + $0xc8] sm:$0xff]
      %v301 = vld [vmem:[%s232 + $0xd0] sm:$0xff]
      %v302 = vld [vmem:[%s232 + $0xd8] sm:$0xff]
      %v303 = vld [vmem:[%s232 + $0xe0] sm:$0xff]
      %v304 = vld [vmem:[%s232 + $0xe8] sm:$0xff]
      %v305 = vld [vmem:[%s232 + $0xf0] sm:$0xff]
      %v306 = vld [vmem:[%s232 + $0xf8] sm:$0xff]
      %v307 = vld [vmem:[%s219] sm:$0xff]
      %v308 = vld [vmem:[%s219 + $0x8] sm:$0xff]
      %v309 = vld [vmem:[%s219 + $0x10] sm:$0xff]
      %v310 = vld [vmem:[%s219 + $0x18] sm:$0xff]
      %v311 = vld [vmem:[%s219 + $0x20] sm:$0xff]
      %v312 = vld [vmem:[%s219 + $0x28] sm:$0xff]
      %v313 = vld [vmem:[%s219 + $0x30] sm:$0xff]
      %v314 = vld [vmem:[%s219 + $0x38] sm:$0xff]
      %v315 = vld [vmem:[%s219 + $0x40] sm:$0xff]
      %v316 = vld [vmem:[%s219 + $0x48] sm:$0xff]
      %v317 = vld [vmem:[%s219 + $0x50] sm:$0xff]
      %v318 = vld [vmem:[%s219 + $0x58] sm:$0xff]
      %v319 = vld [vmem:[%s219 + $0x60] sm:$0xff]
      %v320 = vld [vmem:[%s219 + $0x68] sm:$0xff]
      %v321 = vld [vmem:[%s219 + $0x70] sm:$0xff]
      %v322 = vld [vmem:[%s219 + $0x78] sm:$0xff]
      %v323 = vld [vmem:[%s219 + $0x80] sm:$0xff]
      %v324 = vld [vmem:[%s219 + $0x88] sm:$0xff]
      %v325 = vld [vmem:[%s219 + $0x90] sm:$0xff]
      %v326 = vld [vmem:[%s219 + $0x98] sm:$0xff]
      %v327 = vld [vmem:[%s219 + $0xa0] sm:$0xff]
      %v328 = vld [vmem:[%s219 + $0xa8] sm:$0xff]
      %v329 = vld [vmem:[%s219 + $0xb0] sm:$0xff]
      %v330 = vld [vmem:[%s219 + $0xb8] sm:$0xff]
      %v331 = vld [vmem:[%s219 + $0xc0] sm:$0xff]
      %v332 = vld [vmem:[%s219 + $0xc8] sm:$0xff]
      %v333 = vld [vmem:[%s219 + $0xd0] sm:$0xff]
      %v334 = vld [vmem:[%s219 + $0xd8] sm:$0xff]
      %v335 = vld [vmem:[%s219 + $0xe0] sm:$0xff]
      %v336 = vld [vmem:[%s219 + $0xe8] sm:$0xff]
      %v337 = vld [vmem:[%s219 + $0xf0] sm:$0xff]
      %v338 = vld [vmem:[%s219 + $0xf8] sm:$0xff]
      %v339 = vld [vmem:[%s219 + $0x100] sm:$0xff]
      %v340 = vld [vmem:[%s219 + $0x108] sm:$0xff]
      %v341 = vld [vmem:[%s219 + $0x110] sm:$0xff]
      %v342 = vld [vmem:[%s219 + $0x118] sm:$0xff]
      %v343 = vld [vmem:[%s219 + $0x120] sm:$0xff]
      %v344 = vld [vmem:[%s219 + $0x128] sm:$0xff]
      %v345 = vld [vmem:[%s219 + $0x130] sm:$0xff]
      %v346 = vld [vmem:[%s219 + $0x138] sm:$0xff]
      %v347 = vld [vmem:[%s219 + $0x140] sm:$0xff]
      %v348 = vld [vmem:[%s219 + $0x148] sm:$0xff]
      %v349 = vld [vmem:[%s219 + $0x150] sm:$0xff]
      %v350 = vld [vmem:[%s219 + $0x158] sm:$0xff]
      %v351 = vld [vmem:[%s219 + $0x160] sm:$0xff]
      %v352 = vld [vmem:[%s219 + $0x168] sm:$0xff]
      %v353 = vld [vmem:[%s219 + $0x170] sm:$0xff]
      %v354 = vld [vmem:[%s219 + $0x178] sm:$0xff]
      %v355 = vld [vmem:[%s219 + $0x180] sm:$0xff]
      %v356 = vld [vmem:[%s219 + $0x188] sm:$0xff]
      %v357 = vld [vmem:[%s219 + $0x190] sm:$0xff]
      %v358 = vld [vmem:[%s219 + $0x198] sm:$0xff]
      %v359 = vld [vmem:[%s219 + $0x1a0] sm:$0xff]
      %v360 = vld [vmem:[%s219 + $0x1a8] sm:$0xff]
      %v361 = vld [vmem:[%s219 + $0x1b0] sm:$0xff]
      %v362 = vld [vmem:[%s219 + $0x1b8] sm:$0xff]
      %v363 = vld [vmem:[%s219 + $0x1c0] sm:$0xff]
      %v364 = vld [vmem:[%s219 + $0x1c8] sm:$0xff]
      %v365 = vld [vmem:[%s219 + $0x1d0] sm:$0xff]
      %v366 = vld [vmem:[%s219 + $0x1d8] sm:$0xff]
      %v367 = vld [vmem:[%s219 + $0x1e0] sm:$0xff]
      %v368 = vld [vmem:[%s219 + $0x1e8] sm:$0xff]
      %v369 = vld [vmem:[%s219 + $0x1f0] sm:$0xff]
      %v370 = vld [vmem:[%s219 + $0x1f8] sm:$0xff]
      %v371 = vld [vmem:[%s219 + $0x200] sm:$0xff]
      %v372 = vld [vmem:[%s219 + $0x208] sm:$0xff]
      %v373 = vld [vmem:[%s219 + $0x210] sm:$0xff]
      %v374 = vld [vmem:[%s219 + $0x218] sm:$0xff]
      %v375 = vld [vmem:[%s219 + $0x220] sm:$0xff]
      %v376 = vld [vmem:[%s219 + $0x228] sm:$0xff]
      %v377 = vld [vmem:[%s219 + $0x230] sm:$0xff]
      %v378 = vld [vmem:[%s219 + $0x238] sm:$0xff]
      %v379 = vld [vmem:[%s219 + $0x240] sm:$0xff]
      %v380 = vld [vmem:[%s219 + $0x248] sm:$0xff]
      %v381 = vld [vmem:[%s219 + $0x250] sm:$0xff]
      %v382 = vld [vmem:[%s219 + $0x258] sm:$0xff]
      %v383 = vld [vmem:[%s219 + $0x260] sm:$0xff]
      %v384 = vld [vmem:[%s219 + $0x268] sm:$0xff]
      %v385 = vld [vmem:[%s219 + $0x270] sm:$0xff]
      %v386 = vld [vmem:[%s219 + $0x278] sm:$0xff]
      %v387 = vld [vmem:[%s219 + $0x280] sm:$0xff]
      %v388 = vld [vmem:[%s219 + $0x288] sm:$0xff]
      %v389 = vld [vmem:[%s219 + $0x290] sm:$0xff]
      %v390 = vld [vmem:[%s219 + $0x298] sm:$0xff]
      %v391 = vld [vmem:[%s219 + $0x2a0] sm:$0xff]
      %v392 = vld [vmem:[%s219 + $0x2a8] sm:$0xff]
      %v393 = vld [vmem:[%s219 + $0x2b0] sm:$0xff]
      %v394 = vld [vmem:[%s219 + $0x2b8] sm:$0xff]
      %v395 = vld [vmem:[%s219 + $0x2c0] sm:$0xff]
      %v396 = vld [vmem:[%s219 + $0x2c8] sm:$0xff]
      %v397 = vld [vmem:[%s219 + $0x2d0] sm:$0xff]
      %v398 = vld [vmem:[%s219 + $0x2d8] sm:$0xff]
      %v399 = vld [vmem:[%s219 + $0x2e0] sm:$0xff]
      %v400 = vld [vmem:[%s219 + $0x2e8] sm:$0xff]
      %v401 = vld [vmem:[%s219 + $0x2f0] sm:$0xff]
      %v402 = vld [vmem:[%s219 + $0x2f8] sm:$0xff]
      %v403 = vld [vmem:[%s226] sm:$0xf]
      %v404 = vld [vmem:[%s226 + $0x4] sm:$0xf]
      %v405 = vld [vmem:[%s226 + $0x8] sm:$0xf]
      %v406 = vld [vmem:[%s226 + $0xc] sm:$0xf]
      %v407 = vld [vmem:[%s226 + $0x10] sm:$0xf]
      %v408 = vld [vmem:[%s226 + $0x14] sm:$0xf]
      %v409 = vld [vmem:[%s226 + $0x18] sm:$0xf]
      %v410 = vld [vmem:[%s226 + $0x1c] sm:$0xf]
      %v411 = vld [vmem:[%s226 + $0x20] sm:$0xf]
      %v412 = vld [vmem:[%s226 + $0x24] sm:$0xf]
      %v413 = vld [vmem:[%s226 + $0x28] sm:$0xf]
      %v414 = vld [vmem:[%s226 + $0x2c] sm:$0xf]
      %v415 = vld [vmem:[%s226 + $0x30] sm:$0xf]
      %v416 = vld [vmem:[%s226 + $0x34] sm:$0xf]
      %v417 = vld [vmem:[%s226 + $0x38] sm:$0xf]
      %v418 = vld [vmem:[%s226 + $0x3c] sm:$0xf]
      %v419 = vld [vmem:[%s226 + $0x40] sm:$0xf]
      %v420 = vld [vmem:[%s226 + $0x44] sm:$0xf]
      %v421 = vld [vmem:[%s226 + $0x48] sm:$0xf]
      %v422 = vld [vmem:[%s226 + $0x4c] sm:$0xf]
      %v423 = vld [vmem:[%s226 + $0x50] sm:$0xf]
      %v424 = vld [vmem:[%s226 + $0x54] sm:$0xf]
      %v425 = vld [vmem:[%s226 + $0x58] sm:$0xf]
      %v426 = vld [vmem:[%s226 + $0x5c] sm:$0xf]
      %v427 = vld [vmem:[%s226 + $0x60] sm:$0xf]
      %v428 = vld [vmem:[%s226 + $0x64] sm:$0xf]
      %v429 = vld [vmem:[%s226 + $0x68] sm:$0xf]
      %v430 = vld [vmem:[%s226 + $0x6c] sm:$0xf]
      %v431 = vld [vmem:[%s226 + $0x70] sm:$0xf]
      %v432 = vld [vmem:[%s226 + $0x74] sm:$0xf]
      %v433 = vld [vmem:[%s226 + $0x78] sm:$0xf]
      %v434 = vld [vmem:[%s226 + $0x7c] sm:$0xf]
      %v435 = vld [vmem:[%s226 + $0x80] sm:$0xf]
      %v436 = vld [vmem:[%s226 + $0x84] sm:$0xf]
      %v437 = vld [vmem:[%s226 + $0x88] sm:$0xf]
      %v438 = vld [vmem:[%s226 + $0x8c] sm:$0xf]
      %v439 = vld [vmem:[%s226 + $0x90] sm:$0xf]
      %v440 = vld [vmem:[%s226 + $0x94] sm:$0xf]
      %v441 = vld [vmem:[%s226 + $0x98] sm:$0xf]
      %v442 = vld [vmem:[%s226 + $0x9c] sm:$0xf]
      %v443 = vld [vmem:[%s226 + $0xa0] sm:$0xf]
      %v444 = vld [vmem:[%s226 + $0xa4] sm:$0xf]
      %v445 = vld [vmem:[%s226 + $0xa8] sm:$0xf]
      %v446 = vld [vmem:[%s226 + $0xac] sm:$0xf]
      %v447 = vld [vmem:[%s226 + $0xb0] sm:$0xf]
      %v448 = vld [vmem:[%s226 + $0xb4] sm:$0xf]
      %v449 = vld [vmem:[%s226 + $0xb8] sm:$0xf]
      %v450 = vld [vmem:[%s226 + $0xbc] sm:$0xf]
      %v451 = vld [vmem:[%s226 + $0xc0] sm:$0xf]
      %v452 = vld [vmem:[%s226 + $0xc4] sm:$0xf]
      %v453 = vld [vmem:[%s226 + $0xc8] sm:$0xf]
      %v454 = vld [vmem:[%s226 + $0xcc] sm:$0xf]
      %v455 = vld [vmem:[%s226 + $0xd0] sm:$0xf]
      %v456 = vld [vmem:[%s226 + $0xd4] sm:$0xf]
      %v457 = vld [vmem:[%s226 + $0xd8] sm:$0xf]
      %v458 = vld [vmem:[%s226 + $0xdc] sm:$0xf]
      %v459 = vld [vmem:[%s226 + $0xe0] sm:$0xf]
      %v460 = vld [vmem:[%s226 + $0xe4] sm:$0xf]
      %v461 = vld [vmem:[%s226 + $0xe8] sm:$0xf]
      %v462 = vld [vmem:[%s226 + $0xec] sm:$0xf]
      %v463 = vld [vmem:[%s226 + $0xf0] sm:$0xf]
      %v464 = vld [vmem:[%s226 + $0xf4] sm:$0xf]
      %v465 = vld [vmem:[%s226 + $0xf8] sm:$0xf]
      %v466 = vld [vmem:[%s226 + $0xfc] sm:$0xf]
      %v467 = vld [vmem:[%s226 + $0x100] sm:$0xf]
      %v468 = vld [vmem:[%s226 + $0x104] sm:$0xf]
      %v469 = vld [vmem:[%s226 + $0x108] sm:$0xf]
      %v470 = vld [vmem:[%s226 + $0x10c] sm:$0xf]
      %v471 = vld [vmem:[%s226 + $0x110] sm:$0xf]
      %v472 = vld [vmem:[%s226 + $0x114] sm:$0xf]
      %v473 = vld [vmem:[%s226 + $0x118] sm:$0xf]
      %v474 = vld [vmem:[%s226 + $0x11c] sm:$0xf]
      %v475 = vld [vmem:[%s226 + $0x120] sm:$0xf]
      %v476 = vld [vmem:[%s226 + $0x124] sm:$0xf]
      %v477 = vld [vmem:[%s226 + $0x128] sm:$0xf]
      %v478 = vld [vmem:[%s226 + $0x12c] sm:$0xf]
      %v479 = vld [vmem:[%s226 + $0x130] sm:$0xf]
      %v480 = vld [vmem:[%s226 + $0x134] sm:$0xf]
      %v481 = vld [vmem:[%s226 + $0x138] sm:$0xf]
      %v482 = vld [vmem:[%s226 + $0x13c] sm:$0xf]
      %v483 = vld [vmem:[%s226 + $0x140] sm:$0xf]
      %v484 = vld [vmem:[%s226 + $0x144] sm:$0xf]
      %v485 = vld [vmem:[%s226 + $0x148] sm:$0xf]
      %v486 = vld [vmem:[%s226 + $0x14c] sm:$0xf]
      %v487 = vld [vmem:[%s226 + $0x150] sm:$0xf]
      %v488 = vld [vmem:[%s226 + $0x154] sm:$0xf]
      %v489 = vld [vmem:[%s226 + $0x158] sm:$0xf]
      %v490 = vld [vmem:[%s226 + $0x15c] sm:$0xf]
      %v491 = vld [vmem:[%s226 + $0x160] sm:$0xf]
      %v492 = vld [vmem:[%s226 + $0x164] sm:$0xf]
      %v493 = vld [vmem:[%s226 + $0x168] sm:$0xf]
      %v494 = vld [vmem:[%s226 + $0x16c] sm:$0xf]
      %v495 = vld [vmem:[%s226 + $0x170] sm:$0xf]
      %v496 = vld [vmem:[%s226 + $0x174] sm:$0xf]
      %v497 = vld [vmem:[%s226 + $0x178] sm:$0xf]
      %v498 = vld [vmem:[%s226 + $0x17c] sm:$0xf]
      %v595 = vunpack.c.l.b16 %v307
      %v596 = vunpack.c.h.b16 %v307
      %v597 = vunpack.c.l.b16 %v308
      %v598 = vunpack.c.h.b16 %v308
      %v599 = vunpack.c.l.b16 %v309
      %v600 = vunpack.c.h.b16 %v309
      %v601 = vunpack.c.l.b16 %v310
      %v602 = vunpack.c.h.b16 %v310
      %v603 = vunpack.c.l.b16 %v311
      %v604 = vunpack.c.h.b16 %v311
      %v605 = vunpack.c.l.b16 %v312
      %v606 = vunpack.c.h.b16 %v312
      %v607 = vunpack.c.l.b16 %v313
      %v608 = vunpack.c.h.b16 %v313
      %v609 = vunpack.c.l.b16 %v314
      %v610 = vunpack.c.h.b16 %v314
      %v611 = vunpack.c.l.b16 %v315
      %v612 = vunpack.c.h.b16 %v315
      %v613 = vunpack.c.l.b16 %v316
      %v614 = vunpack.c.h.b16 %v316
      %v615 = vunpack.c.l.b16 %v317
      %v616 = vunpack.c.h.b16 %v317
      %v617 = vunpack.c.l.b16 %v318
      %v618 = vunpack.c.h.b16 %v318
      %v619 = vunpack.c.l.b16 %v319
      %v620 = vunpack.c.h.b16 %v319
      %v621 = vunpack.c.l.b16 %v320
      %v622 = vunpack.c.h.b16 %v320
      %v623 = vunpack.c.l.b16 %v321
      %v624 = vunpack.c.h.b16 %v321
      %v625 = vunpack.c.l.b16 %v322
      %v626 = vunpack.c.h.b16 %v322
      %v627 = vunpack.c.l.b16 %v323
      %v628 = vunpack.c.h.b16 %v323
      %v629 = vunpack.c.l.b16 %v324
      %v630 = vunpack.c.h.b16 %v324
      %v631 = vunpack.c.l.b16 %v325
      %v632 = vunpack.c.h.b16 %v325
      %v633 = vunpack.c.l.b16 %v326
      %v634 = vunpack.c.h.b16 %v326
      %v635 = vunpack.c.l.b16 %v327
      %v636 = vunpack.c.h.b16 %v327
      %v637 = vunpack.c.l.b16 %v328
      %v638 = vunpack.c.h.b16 %v328
      %v639 = vunpack.c.l.b16 %v329
      %v640 = vunpack.c.h.b16 %v329
      %v641 = vunpack.c.l.b16 %v330
      %v642 = vunpack.c.h.b16 %v330
      %v643 = vunpack.c.l.b16 %v331
      %v644 = vunpack.c.h.b16 %v331
      %v645 = vunpack.c.l.b16 %v332
      %v646 = vunpack.c.h.b16 %v332
      %v647 = vunpack.c.l.b16 %v333
      %v648 = vunpack.c.h.b16 %v333
      %v649 = vunpack.c.l.b16 %v334
      %v650 = vunpack.c.h.b16 %v334
      %v651 = vunpack.c.l.b16 %v335
      %v652 = vunpack.c.h.b16 %v335
      %v653 = vunpack.c.l.b16 %v336
      %v654 = vunpack.c.h.b16 %v336
      %v655 = vunpack.c.l.b16 %v337
      %v656 = vunpack.c.h.b16 %v337
      %v657 = vunpack.c.l.b16 %v338
      %v658 = vunpack.c.h.b16 %v338
      %v659 = vunpack.c.l.b16 %v339
      %v660 = vunpack.c.h.b16 %v339
      %v661 = vunpack.c.l.b16 %v340
      %v662 = vunpack.c.h.b16 %v340
      %v663 = vunpack.c.l.b16 %v341
      %v664 = vunpack.c.h.b16 %v341
      %v665 = vunpack.c.l.b16 %v342
      %v666 = vunpack.c.h.b16 %v342
      %v667 = vunpack.c.l.b16 %v343
      %v668 = vunpack.c.h.b16 %v343
      %v669 = vunpack.c.l.b16 %v344
      %v670 = vunpack.c.h.b16 %v344
      %v671 = vunpack.c.l.b16 %v345
      %v672 = vunpack.c.h.b16 %v345
      %v673 = vunpack.c.l.b16 %v346
      %v674 = vunpack.c.h.b16 %v346
      %v675 = vunpack.c.l.b16 %v347
      %v676 = vunpack.c.h.b16 %v347
      %v677 = vunpack.c.l.b16 %v348
      %v678 = vunpack.c.h.b16 %v348
      %v679 = vunpack.c.l.b16 %v349
      %v680 = vunpack.c.h.b16 %v349
      %v681 = vunpack.c.l.b16 %v350
      %v682 = vunpack.c.h.b16 %v350
      %v683 = vunpack.c.l.b16 %v351
      %v684 = vunpack.c.h.b16 %v351
      %v685 = vunpack.c.l.b16 %v352
      %v686 = vunpack.c.h.b16 %v352
      %v687 = vunpack.c.l.b16 %v353
      %v688 = vunpack.c.h.b16 %v353
      %v689 = vunpack.c.l.b16 %v354
      %v690 = vunpack.c.h.b16 %v354
      %v691 = vunpack.c.l.b16 %v355
      %v692 = vunpack.c.h.b16 %v355
      %v693 = vunpack.c.l.b16 %v356
      %v694 = vunpack.c.h.b16 %v356
      %v695 = vunpack.c.l.b16 %v357
      %v696 = vunpack.c.h.b16 %v357
      %v697 = vunpack.c.l.b16 %v358
      %v698 = vunpack.c.h.b16 %v358
      %v699 = vunpack.c.l.b16 %v359
      %v700 = vunpack.c.h.b16 %v359
      %v701 = vunpack.c.l.b16 %v360
      %v702 = vunpack.c.h.b16 %v360
      %v703 = vunpack.c.l.b16 %v361
      %v704 = vunpack.c.h.b16 %v361
      %v705 = vunpack.c.l.b16 %v362
      %v706 = vunpack.c.h.b16 %v362
      %v707 = vunpack.c.l.b16 %v363
      %v708 = vunpack.c.h.b16 %v363
      %v709 = vunpack.c.l.b16 %v364
      %v710 = vunpack.c.h.b16 %v364
      %v711 = vunpack.c.l.b16 %v365
      %v712 = vunpack.c.h.b16 %v365
      %v713 = vunpack.c.l.b16 %v366
      %v714 = vunpack.c.h.b16 %v366
      %v715 = vunpack.c.l.b16 %v367
      %v716 = vunpack.c.h.b16 %v367
      %v717 = vunpack.c.l.b16 %v368
      %v718 = vunpack.c.h.b16 %v368
      %v719 = vunpack.c.l.b16 %v369
      %v720 = vunpack.c.h.b16 %v369
      %v721 = vunpack.c.l.b16 %v370
      %v722 = vunpack.c.h.b16 %v370
      %v723 = vunpack.c.l.b16 %v371
      %v724 = vunpack.c.h.b16 %v371
      %v725 = vunpack.c.l.b16 %v372
      %v726 = vunpack.c.h.b16 %v372
      %v727 = vunpack.c.l.b16 %v373
      %v728 = vunpack.c.h.b16 %v373
      %v729 = vunpack.c.l.b16 %v374
      %v730 = vunpack.c.h.b16 %v374
      %v731 = vunpack.c.l.b16 %v375
      %v732 = vunpack.c.h.b16 %v375
      %v733 = vunpack.c.l.b16 %v376
      %v734 = vunpack.c.h.b16 %v376
      %v735 = vunpack.c.l.b16 %v377
      %v736 = vunpack.c.h.b16 %v377
      %v737 = vunpack.c.l.b16 %v378
      %v738 = vunpack.c.h.b16 %v378
      %v739 = vunpack.c.l.b16 %v379
      %v740 = vunpack.c.h.b16 %v379
      %v741 = vunpack.c.l.b16 %v380
      %v742 = vunpack.c.h.b16 %v380
      %v743 = vunpack.c.l.b16 %v381
      %v744 = vunpack.c.h.b16 %v381
      %v745 = vunpack.c.l.b16 %v382
      %v746 = vunpack.c.h.b16 %v382
      %v747 = vunpack.c.l.b16 %v383
      %v748 = vunpack.c.h.b16 %v383
      %v749 = vunpack.c.l.b16 %v384
      %v750 = vunpack.c.h.b16 %v384
      %v751 = vunpack.c.l.b16 %v385
      %v752 = vunpack.c.h.b16 %v385
      %v753 = vunpack.c.l.b16 %v386
      %v754 = vunpack.c.h.b16 %v386
      %v755 = vunpack.c.l.b16 %v387
      %v756 = vunpack.c.h.b16 %v387
      %v757 = vunpack.c.l.b16 %v388
      %v758 = vunpack.c.h.b16 %v388
      %v759 = vunpack.c.l.b16 %v389
      %v760 = vunpack.c.h.b16 %v389
      %v761 = vunpack.c.l.b16 %v390
      %v762 = vunpack.c.h.b16 %v390
      %v763 = vunpack.c.l.b16 %v391
      %v764 = vunpack.c.h.b16 %v391
      %v765 = vunpack.c.l.b16 %v392
      %v766 = vunpack.c.h.b16 %v392
      %v767 = vunpack.c.l.b16 %v393
      %v768 = vunpack.c.h.b16 %v393
      %v769 = vunpack.c.l.b16 %v394
      %v770 = vunpack.c.h.b16 %v394
      %v771 = vunpack.c.l.b16 %v395
      %v772 = vunpack.c.h.b16 %v395
      %v773 = vunpack.c.l.b16 %v396
      %v774 = vunpack.c.h.b16 %v396
      %v775 = vunpack.c.l.b16 %v397
      %v776 = vunpack.c.h.b16 %v397
      %v777 = vunpack.c.l.b16 %v398
      %v778 = vunpack.c.h.b16 %v398
      %v779 = vunpack.c.l.b16 %v399
      %v780 = vunpack.c.h.b16 %v399
      %v781 = vunpack.c.l.b16 %v400
      %v782 = vunpack.c.h.b16 %v400
      %v783 = vunpack.c.l.b16 %v401
      %v784 = vunpack.c.h.b16 %v401
      %v785 = vunpack.c.l.b16 %v402
      %v786 = vunpack.c.h.b16 %v402
      %v787 = vpack.c.b16 %v601, %v595
      %v788 = vpack.c.b16 %v602, %v596
      %v789 = vpack.c.b16 %v603, %v597
      %v790 = vpack.c.b16 %v604, %v598
      %v791 = vpack.c.b16 %v605, %v599
      %v792 = vpack.c.b16 %v606, %v600
      %v793 = vpack.c.b16 %v613, %v607
      %v794 = vpack.c.b16 %v614, %v608
      %v795 = vpack.c.b16 %v615, %v609
      %v796 = vpack.c.b16 %v616, %v610
      %v797 = vpack.c.b16 %v617, %v611
      %v798 = vpack.c.b16 %v618, %v612
      %v799 = vpack.c.b16 %v625, %v619
      %v800 = vpack.c.b16 %v626, %v620
      %v801 = vpack.c.b16 %v627, %v621
      %v802 = vpack.c.b16 %v628, %v622
      %v803 = vpack.c.b16 %v629, %v623
      %v804 = vpack.c.b16 %v630, %v624
      %v805 = vpack.c.b16 %v637, %v631
      %v806 = vpack.c.b16 %v638, %v632
      %v807 = vpack.c.b16 %v639, %v633
      %v808 = vpack.c.b16 %v640, %v634
      %v809 = vpack.c.b16 %v641, %v635
      %v810 = vpack.c.b16 %v642, %v636
      %v811 = vpack.c.b16 %v649, %v643
      %v812 = vpack.c.b16 %v650, %v644
      %v813 = vpack.c.b16 %v651, %v645
      %v814 = vpack.c.b16 %v652, %v646
      %v815 = vpack.c.b16 %v653, %v647
      %v816 = vpack.c.b16 %v654, %v648
      %v817 = vpack.c.b16 %v661, %v655
      %v818 = vpack.c.b16 %v662, %v656
      %v819 = vpack.c.b16 %v663, %v657
      %v820 = vpack.c.b16 %v664, %v658
      %v821 = vpack.c.b16 %v665, %v659
      %v822 = vpack.c.b16 %v666, %v660
      %v823 = vpack.c.b16 %v673, %v667
      %v824 = vpack.c.b16 %v674, %v668
      %v825 = vpack.c.b16 %v675, %v669
      %v826 = vpack.c.b16 %v676, %v670
      %v827 = vpack.c.b16 %v677, %v671
      %v828 = vpack.c.b16 %v678, %v672
      %v829 = vpack.c.b16 %v685, %v679
      %v830 = vpack.c.b16 %v686, %v680
      %v831 = vpack.c.b16 %v687, %v681
      %v832 = vpack.c.b16 %v688, %v682
      %v833 = vpack.c.b16 %v689, %v683
      %v834 = vpack.c.b16 %v690, %v684
      %v835 = vpack.c.b16 %v697, %v691
      %v836 = vpack.c.b16 %v698, %v692
      %v837 = vpack.c.b16 %v699, %v693
      %v838 = vpack.c.b16 %v700, %v694
      %v839 = vpack.c.b16 %v701, %v695
      %v840 = vpack.c.b16 %v702, %v696
      %v841 = vpack.c.b16 %v709, %v703
      %v842 = vpack.c.b16 %v710, %v704
      %v843 = vpack.c.b16 %v711, %v705
      %v844 = vpack.c.b16 %v712, %v706
      %v845 = vpack.c.b16 %v713, %v707
      %v846 = vpack.c.b16 %v714, %v708
      %v847 = vpack.c.b16 %v721, %v715
      %v848 = vpack.c.b16 %v722, %v716
      %v849 = vpack.c.b16 %v723, %v717
      %v850 = vpack.c.b16 %v724, %v718
      %v851 = vpack.c.b16 %v725, %v719
      %v852 = vpack.c.b16 %v726, %v720
      %v853 = vpack.c.b16 %v733, %v727
      %v854 = vpack.c.b16 %v734, %v728
      %v855 = vpack.c.b16 %v735, %v729
      %v856 = vpack.c.b16 %v736, %v730
      %v857 = vpack.c.b16 %v737, %v731
      %v858 = vpack.c.b16 %v738, %v732
      %v859 = vpack.c.b16 %v745, %v739
      %v860 = vpack.c.b16 %v746, %v740
      %v861 = vpack.c.b16 %v747, %v741
      %v862 = vpack.c.b16 %v748, %v742
      %v863 = vpack.c.b16 %v749, %v743
      %v864 = vpack.c.b16 %v750, %v744
      %v865 = vpack.c.b16 %v757, %v751
      %v866 = vpack.c.b16 %v758, %v752
      %v867 = vpack.c.b16 %v759, %v753
      %v868 = vpack.c.b16 %v760, %v754
      %v869 = vpack.c.b16 %v761, %v755
      %v870 = vpack.c.b16 %v762, %v756
      %v871 = vpack.c.b16 %v769, %v763
      %v872 = vpack.c.b16 %v770, %v764
      %v873 = vpack.c.b16 %v771, %v765
      %v874 = vpack.c.b16 %v772, %v766
      %v875 = vpack.c.b16 %v773, %v767
      %v876 = vpack.c.b16 %v774, %v768
      %v877 = vpack.c.b16 %v781, %v775
      %v878 = vpack.c.b16 %v782, %v776
      %v879 = vpack.c.b16 %v783, %v777
      %v880 = vpack.c.b16 %v784, %v778
      %v881 = vpack.c.b16 %v785, %v779
      %v882 = vpack.c.b16 %v786, %v780
      %v1075 = vunpack.c.l.b16 %v403
      %v1076 = vunpack.c.l.b16 %v404
      %v1077 = vunpack.c.l.b16 %v405
      %v1078 = vunpack.c.l.b16 %v406
      %v1079 = vunpack.c.l.b16 %v407
      %v1080 = vunpack.c.l.b16 %v408
      %v1081 = vunpack.c.l.b16 %v409
      %v1082 = vunpack.c.l.b16 %v410
      %v1083 = vunpack.c.l.b16 %v411
      %v1084 = vunpack.c.l.b16 %v412
      %v1085 = vunpack.c.l.b16 %v413
      %v1086 = vunpack.c.l.b16 %v414
      %v1087 = vunpack.c.l.b16 %v415
      %v1088 = vunpack.c.l.b16 %v416
      %v1089 = vunpack.c.l.b16 %v417
      %v1090 = vunpack.c.l.b16 %v418
      %v1091 = vunpack.c.l.b16 %v419
      %v1092 = vunpack.c.l.b16 %v420
      %v1093 = vunpack.c.l.b16 %v421
      %v1094 = vunpack.c.l.b16 %v422
      %v1095 = vunpack.c.l.b16 %v423
      %v1096 = vunpack.c.l.b16 %v424
      %v1097 = vunpack.c.l.b16 %v425
      %v1098 = vunpack.c.l.b16 %v426
      %v1099 = vunpack.c.l.b16 %v427
      %v1100 = vunpack.c.l.b16 %v428
      %v1101 = vunpack.c.l.b16 %v429
      %v1102 = vunpack.c.l.b16 %v430
      %v1103 = vunpack.c.l.b16 %v431
      %v1104 = vunpack.c.l.b16 %v432
      %v1105 = vunpack.c.l.b16 %v433
      %v1106 = vunpack.c.l.b16 %v434
      %v1107 = vunpack.c.l.b16 %v435
      %v1108 = vunpack.c.l.b16 %v436
      %v1109 = vunpack.c.l.b16 %v437
      %v1110 = vunpack.c.l.b16 %v438
      %v1111 = vunpack.c.l.b16 %v439
      %v1112 = vunpack.c.l.b16 %v440
      %v1113 = vunpack.c.l.b16 %v441
      %v1114 = vunpack.c.l.b16 %v442
      %v1115 = vunpack.c.l.b16 %v443
      %v1116 = vunpack.c.l.b16 %v444
      %v1117 = vunpack.c.l.b16 %v445
      %v1118 = vunpack.c.l.b16 %v446
      %v1119 = vunpack.c.l.b16 %v447
      %v1120 = vunpack.c.l.b16 %v448
      %v1121 = vunpack.c.l.b16 %v449
      %v1122 = vunpack.c.l.b16 %v450
      %v1123 = vunpack.c.l.b16 %v451
      %v1124 = vunpack.c.l.b16 %v452
      %v1125 = vunpack.c.l.b16 %v453
      %v1126 = vunpack.c.l.b16 %v454
      %v1127 = vunpack.c.l.b16 %v455
      %v1128 = vunpack.c.l.b16 %v456
      %v1129 = vunpack.c.l.b16 %v457
      %v1130 = vunpack.c.l.b16 %v458
      %v1131 = vunpack.c.l.b16 %v459
      %v1132 = vunpack.c.l.b16 %v460
      %v1133 = vunpack.c.l.b16 %v461
      %v1134 = vunpack.c.l.b16 %v462
      %v1135 = vunpack.c.l.b16 %v463
      %v1136 = vunpack.c.l.b16 %v464
      %v1137 = vunpack.c.l.b16 %v465
      %v1138 = vunpack.c.l.b16 %v466
      %v1139 = vunpack.c.l.b16 %v467
      %v1140 = vunpack.c.l.b16 %v468
      %v1141 = vunpack.c.l.b16 %v469
      %v1142 = vunpack.c.l.b16 %v470
      %v1143 = vunpack.c.l.b16 %v471
      %v1144 = vunpack.c.l.b16 %v472
      %v1145 = vunpack.c.l.b16 %v473
      %v1146 = vunpack.c.l.b16 %v474
      %v1147 = vunpack.c.l.b16 %v475
      %v1148 = vunpack.c.l.b16 %v476
      %v1149 = vunpack.c.l.b16 %v477
      %v1150 = vunpack.c.l.b16 %v478
      %v1151 = vunpack.c.l.b16 %v479
      %v1152 = vunpack.c.l.b16 %v480
      %v1153 = vunpack.c.l.b16 %v481
      %v1154 = vunpack.c.l.b16 %v482
      %v1155 = vunpack.c.l.b16 %v483
      %v1156 = vunpack.c.l.b16 %v484
      %v1157 = vunpack.c.l.b16 %v485
      %v1158 = vunpack.c.l.b16 %v486
      %v1159 = vunpack.c.l.b16 %v487
      %v1160 = vunpack.c.l.b16 %v488
      %v1161 = vunpack.c.l.b16 %v489
      %v1162 = vunpack.c.l.b16 %v490
      %v1163 = vunpack.c.l.b16 %v491
      %v1164 = vunpack.c.l.b16 %v492
      %v1165 = vunpack.c.l.b16 %v493
      %v1166 = vunpack.c.l.b16 %v494
      %v1167 = vunpack.c.l.b16 %v495
      %v1168 = vunpack.c.l.b16 %v496
      %v1169 = vunpack.c.l.b16 %v497
      %v1170 = vunpack.c.l.b16 %v498
      %v1171 = vpack.c.b16 %v1076, %v1075
      %v1172 = vpack.c.b16 %v1078, %v1077
      %v1173 = vpack.c.b16 %v1080, %v1079
      %v1174 = vpack.c.b16 %v1082, %v1081
      %v1175 = vpack.c.b16 %v1084, %v1083
      %v1176 = vpack.c.b16 %v1086, %v1085
      %v1177 = vpack.c.b16 %v1088, %v1087
      %v1178 = vpack.c.b16 %v1090, %v1089
      %v1179 = vpack.c.b16 %v1092, %v1091
      %v1180 = vpack.c.b16 %v1094, %v1093
      %v1181 = vpack.c.b16 %v1096, %v1095
      %v1182 = vpack.c.b16 %v1098, %v1097
      %v1183 = vpack.c.b16 %v1100, %v1099
      %v1184 = vpack.c.b16 %v1102, %v1101
      %v1185 = vpack.c.b16 %v1104, %v1103
      %v1186 = vpack.c.b16 %v1106, %v1105
      %v1187 = vpack.c.b16 %v1108, %v1107
      %v1188 = vpack.c.b16 %v1110, %v1109
      %v1189 = vpack.c.b16 %v1112, %v1111
      %v1190 = vpack.c.b16 %v1114, %v1113
      %v1191 = vpack.c.b16 %v1116, %v1115
      %v1192 = vpack.c.b16 %v1118, %v1117
      %v1193 = vpack.c.b16 %v1120, %v1119
      %v1194 = vpack.c.b16 %v1122, %v1121
      %v1195 = vpack.c.b16 %v1124, %v1123
      %v1196 = vpack.c.b16 %v1126, %v1125
      %v1197 = vpack.c.b16 %v1128, %v1127
      %v1198 = vpack.c.b16 %v1130, %v1129
      %v1199 = vpack.c.b16 %v1132, %v1131
      %v1200 = vpack.c.b16 %v1134, %v1133
      %v1201 = vpack.c.b16 %v1136, %v1135
      %v1202 = vpack.c.b16 %v1138, %v1137
      %v1203 = vpack.c.b16 %v1140, %v1139
      %v1204 = vpack.c.b16 %v1142, %v1141
      %v1205 = vpack.c.b16 %v1144, %v1143
      %v1206 = vpack.c.b16 %v1146, %v1145
      %v1207 = vpack.c.b16 %v1148, %v1147
      %v1208 = vpack.c.b16 %v1150, %v1149
      %v1209 = vpack.c.b16 %v1152, %v1151
      %v1210 = vpack.c.b16 %v1154, %v1153
      %v1211 = vpack.c.b16 %v1156, %v1155
      %v1212 = vpack.c.b16 %v1158, %v1157
      %v1213 = vpack.c.b16 %v1160, %v1159
      %v1214 = vpack.c.b16 %v1162, %v1161
      %v1215 = vpack.c.b16 %v1164, %v1163
      %v1216 = vpack.c.b16 %v1166, %v1165
      %v1217 = vpack.c.b16 %v1168, %v1167
      %v1218 = vpack.c.b16 %v1170, %v1169
      %1267 = vmatprep.subr.bf16.mxu0 0
      %1268 = vmatpush1.bf16.msra.mxu0 %v1178
      %1269 = vmatprep.subr.bf16.mxu0 0
      %1270 = vmatpush1.bf16.msra.mxu0 %v1177
      %1271 = vmatprep.subr.bf16.mxu0 0
      %1272 = vmatpush1.bf16.msra.mxu0 %v1176
      %1273 = vmatprep.subr.bf16.mxu0 0
      %1274 = vmatpush1.bf16.msra.mxu0 %v1175
      %1275 = vmatprep.subr.bf16.mxu0 0
      %1276 = vmatpush1.bf16.msra.mxu0 %v1174
      %1277 = vmatprep.subr.bf16.mxu0 0
      %1278 = vmatpush1.bf16.msra.mxu0 %v1173
      %1279 = vmatprep.subr.bf16.mxu0 0
      %1280 = vmatpush1.bf16.msra.mxu0 %v1172
      %1281 = vmatprep.subr.bf16.mxu0 0
      %1282 = vmatpush1.bf16.msra.mxu0 %v1171
      %1283 = vmatprep.subr.bf16.mxu0 0
      %1284 = vmatpush2.bf16.msra.mxu0 %v1186
      %1285 = vmatprep.subr.bf16.mxu0 0
      %1286 = vmatpush2.bf16.msra.mxu0 %v1185
      %1287 = vmatprep.subr.bf16.mxu0 0
      %1288 = vmatpush2.bf16.msra.mxu0 %v1184
      %1289 = vmatprep.subr.bf16.mxu0 0
      %1290 = vmatpush2.bf16.msra.mxu0 %v1183
      %1291 = vmatprep.subr.bf16.mxu0 0
      %1292 = vmatpush2.bf16.msra.mxu0 %v1182
      %1293 = vmatprep.subr.bf16.mxu0 0
      %1294 = vmatpush2.bf16.msra.mxu0 %v1181
      %1295 = vmatprep.subr.bf16.mxu0 0
      %1296 = vmatpush2.bf16.msra.mxu0 %v1180
      %1297 = vmatprep.subr.bf16.mxu0 0
      %1298 = vmatpush2.bf16.msra.mxu0 %v1179
      %1299 = vmatprep.mubr.bf16.mxu0 %v788
      %1300 = vmatmul.mubr.bf16.gmra.mxu0 %v787
      %v1301 = vpop.f32.mrf.mxu0
      %v1302 = vadd.f32 0.0, %v1301
      %v1303 = vpop.f32.mrf.mxu0
      %v1304 = vpop.f32.mrf.mxu0
      %v1305 = vadd.f32 0.0, %v1304
      %v1306 = vpop.f32.mrf.mxu0
      %1307 = vmatprep.mubr.bf16.mxu0 %v794
      %1308 = vmatmul.mubr.bf16.gmra.mxu0 %v793
      %v1309 = vpop.f32.mrf.mxu0
      %v1310 = vadd.f32 0.0, %v1309
      %v1311 = vpop.f32.mrf.mxu0
      %v1312 = vpop.f32.mrf.mxu0
      %v1313 = vadd.f32 0.0, %v1312
      %v1314 = vpop.f32.mrf.mxu0
      %1315 = vmatprep.mubr.bf16.mxu0 %v800
      %1316 = vmatmul.mubr.bf16.gmra.mxu0 %v799
      %v1317 = vpop.f32.mrf.mxu0
      %v1318 = vadd.f32 0.0, %v1317
      %v1319 = vpop.f32.mrf.mxu0
      %v1320 = vpop.f32.mrf.mxu0
      %v1321 = vadd.f32 0.0, %v1320
      %v1322 = vpop.f32.mrf.mxu0
      %1323 = vmatprep.mubr.bf16.mxu0 %v806
      %1324 = vmatmul.mubr.bf16.gmra.mxu0 %v805
      %v1325 = vpop.f32.mrf.mxu0
      %v1326 = vadd.f32 0.0, %v1325
      %v1327 = vpop.f32.mrf.mxu0
      %v1328 = vpop.f32.mrf.mxu0
      %v1329 = vadd.f32 0.0, %v1328
      %v1330 = vpop.f32.mrf.mxu0
      %1331 = vmatprep.mubr.bf16.mxu0 %v812
      %1332 = vmatmul.mubr.bf16.gmra.mxu0 %v811
      %v1333 = vpop.f32.mrf.mxu0
      %v1334 = vadd.f32 0.0, %v1333
      %v1335 = vpop.f32.mrf.mxu0
      %v1336 = vpop.f32.mrf.mxu0
      %v1337 = vadd.f32 0.0, %v1336
      %v1338 = vpop.f32.mrf.mxu0
      %1339 = vmatprep.mubr.bf16.mxu0 %v818
      %1340 = vmatmul.mubr.bf16.gmra.mxu0 %v817
      %v1341 = vpop.f32.mrf.mxu0
      %v1342 = vadd.f32 0.0, %v1341
      %v1343 = vpop.f32.mrf.mxu0
      %v1344 = vpop.f32.mrf.mxu0
      %v1345 = vadd.f32 0.0, %v1344
      %v1346 = vpop.f32.mrf.mxu0
      %1347 = vmatprep.mubr.bf16.mxu0 %v824
      %1348 = vmatmul.mubr.bf16.gmra.mxu0 %v823
      %v1349 = vpop.f32.mrf.mxu0
      %v1350 = vadd.f32 0.0, %v1349
      %v1351 = vpop.f32.mrf.mxu0
      %v1352 = vpop.f32.mrf.mxu0
      %v1353 = vadd.f32 0.0, %v1352
      %v1354 = vpop.f32.mrf.mxu0
      %1355 = vmatprep.mubr.bf16.mxu0 %v830
      %1356 = vmatmul.mubr.bf16.gmra.mxu0 %v829
      %v1357 = vpop.f32.mrf.mxu0
      %v1358 = vadd.f32 0.0, %v1357
      %v1359 = vpop.f32.mrf.mxu0
      %v1360 = vpop.f32.mrf.mxu0
      %v1361 = vadd.f32 0.0, %v1360
      %v1362 = vpop.f32.mrf.mxu0
      %1363 = vmatprep.mubr.bf16.mxu0 %v836
      %1364 = vmatmul.mubr.bf16.gmra.mxu0 %v835
      %v1365 = vpop.f32.mrf.mxu0
      %v1366 = vadd.f32 0.0, %v1365
      %v1367 = vpop.f32.mrf.mxu0
      %v1368 = vpop.f32.mrf.mxu0
      %v1369 = vadd.f32 0.0, %v1368
      %v1370 = vpop.f32.mrf.mxu0
      %1371 = vmatprep.mubr.bf16.mxu0 %v842
      %1372 = vmatmul.mubr.bf16.gmra.mxu0 %v841
      %v1373 = vpop.f32.mrf.mxu0
      %v1374 = vadd.f32 0.0, %v1373
      %v1375 = vpop.f32.mrf.mxu0
      %v1376 = vpop.f32.mrf.mxu0
      %v1377 = vadd.f32 0.0, %v1376
      %v1378 = vpop.f32.mrf.mxu0
      %1379 = vmatprep.mubr.bf16.mxu0 %v848
      %1380 = vmatmul.mubr.bf16.gmra.mxu0 %v847
      %v1381 = vpop.f32.mrf.mxu0
      %v1382 = vadd.f32 0.0, %v1381
      %v1383 = vpop.f32.mrf.mxu0
      %v1384 = vpop.f32.mrf.mxu0
      %v1385 = vadd.f32 0.0, %v1384
      %v1386 = vpop.f32.mrf.mxu0
      %1387 = vmatprep.mubr.bf16.mxu0 %v854
      %1388 = vmatmul.mubr.bf16.gmra.mxu0 %v853
      %v1389 = vpop.f32.mrf.mxu0
      %v1390 = vadd.f32 0.0, %v1389
      %v1391 = vpop.f32.mrf.mxu0
      %v1392 = vpop.f32.mrf.mxu0
      %v1393 = vadd.f32 0.0, %v1392
      %v1394 = vpop.f32.mrf.mxu0
      %1395 = vmatprep.mubr.bf16.mxu0 %v860
      %1396 = vmatmul.mubr.bf16.gmra.mxu0 %v859
      %v1397 = vpop.f32.mrf.mxu0
      %v1398 = vadd.f32 0.0, %v1397
      %v1399 = vpop.f32.mrf.mxu0
      %v1400 = vpop.f32.mrf.mxu0
      %v1401 = vadd.f32 0.0, %v1400
      %v1402 = vpop.f32.mrf.mxu0
      %1403 = vmatprep.mubr.bf16.mxu0 %v866
      %1404 = vmatmul.mubr.bf16.gmra.mxu0 %v865
      %v1405 = vpop.f32.mrf.mxu0
      %v1406 = vadd.f32 0.0, %v1405
      %v1407 = vpop.f32.mrf.mxu0
      %v1408 = vpop.f32.mrf.mxu0
      %v1409 = vadd.f32 0.0, %v1408
      %v1410 = vpop.f32.mrf.mxu0
      %1411 = vmatprep.mubr.bf16.mxu0 %v872
      %1412 = vmatmul.mubr.bf16.gmra.mxu0 %v871
      %v1413 = vpop.f32.mrf.mxu0
      %v1414 = vadd.f32 0.0, %v1413
      %v1415 = vpop.f32.mrf.mxu0
      %v1416 = vpop.f32.mrf.mxu0
      %v1417 = vadd.f32 0.0, %v1416
      %v1418 = vpop.f32.mrf.mxu0
      %1419 = vmatprep.mubr.bf16.mxu0 %v878
      %1420 = vmatmul.mubr.bf16.gmra.mxu0 %v877
      %v1421 = vpop.f32.mrf.mxu0
      %v1422 = vadd.f32 0.0, %v1421
      %v1423 = vpop.f32.mrf.mxu0
      %v1424 = vpop.f32.mrf.mxu0
      %v1425 = vadd.f32 0.0, %v1424
      %v1426 = vpop.f32.mrf.mxu0
      %1427 = vdwg.mxu0
      %1428 = vmatprep.subr.bf16.mxu0 0
      %1429 = vmatpush1.bf16.msra.mxu0 %v1194
      %1430 = vmatprep.subr.bf16.mxu0 0
      %1431 = vmatpush1.bf16.msra.mxu0 %v1193
      %1432 = vmatprep.subr.bf16.mxu0 0
      %1433 = vmatpush1.bf16.msra.mxu0 %v1192
      %1434 = vmatprep.subr.bf16.mxu0 0
      %1435 = vmatpush1.bf16.msra.mxu0 %v1191
      %1436 = vmatprep.subr.bf16.mxu0 0
      %1437 = vmatpush1.bf16.msra.mxu0 %v1190
      %1438 = vmatprep.subr.bf16.mxu0 0
      %1439 = vmatpush1.bf16.msra.mxu0 %v1189
      %1440 = vmatprep.subr.bf16.mxu0 0
      %1441 = vmatpush1.bf16.msra.mxu0 %v1188
      %1442 = vmatprep.subr.bf16.mxu0 0
      %1443 = vmatpush1.bf16.msra.mxu0 %v1187
      %1444 = vmatprep.subr.bf16.mxu0 0
      %1445 = vmatpush2.bf16.msra.mxu0 %v1202
      %1446 = vmatprep.subr.bf16.mxu0 0
      %1447 = vmatpush2.bf16.msra.mxu0 %v1201
      %1448 = vmatprep.subr.bf16.mxu0 0
      %1449 = vmatpush2.bf16.msra.mxu0 %v1200
      %1450 = vmatprep.subr.bf16.mxu0 0
      %1451 = vmatpush2.bf16.msra.mxu0 %v1199
      %1452 = vmatprep.subr.bf16.mxu0 0
      %1453 = vmatpush2.bf16.msra.mxu0 %v1198
      %1454 = vmatprep.subr.bf16.mxu0 0
      %1455 = vmatpush2.bf16.msra.mxu0 %v1197
      %1456 = vmatprep.subr.bf16.mxu0 0
      %1457 = vmatpush2.bf16.msra.mxu0 %v1196
      %1458 = vmatprep.subr.bf16.mxu0 0
      %1459 = vmatpush2.bf16.msra.mxu0 %v1195
      %1460 = vmatprep.mubr.bf16.mxu0 %v790
      %1461 = vmatmul.mubr.bf16.gmra.mxu0 %v789
      %v1462 = vpop.f32.mrf.mxu0
      %v1463 = vadd.f32 %v1302, %v1462
      %v1464 = vpop.f32.mrf.mxu0
      %v1465 = vpop.f32.mrf.mxu0
      %v1466 = vadd.f32 %v1305, %v1465
      %v1467 = vpop.f32.mrf.mxu0
      %1468 = vmatprep.mubr.bf16.mxu0 %v796
      %1469 = vmatmul.mubr.bf16.gmra.mxu0 %v795
      %v1470 = vpop.f32.mrf.mxu0
      %v1471 = vadd.f32 %v1310, %v1470
      %v1472 = vpop.f32.mrf.mxu0
      %v1473 = vpop.f32.mrf.mxu0
      %v1474 = vadd.f32 %v1313, %v1473
      %v1475 = vpop.f32.mrf.mxu0
      %1476 = vmatprep.mubr.bf16.mxu0 %v802
      %1477 = vmatmul.mubr.bf16.gmra.mxu0 %v801
      %v1478 = vpop.f32.mrf.mxu0
      %v1479 = vadd.f32 %v1318, %v1478
      %v1480 = vpop.f32.mrf.mxu0
      %v1481 = vpop.f32.mrf.mxu0
      %v1482 = vadd.f32 %v1321, %v1481
      %v1483 = vpop.f32.mrf.mxu0
      %1484 = vmatprep.mubr.bf16.mxu0 %v808
      %1485 = vmatmul.mubr.bf16.gmra.mxu0 %v807
      %v1486 = vpop.f32.mrf.mxu0
      %v1487 = vadd.f32 %v1326, %v1486
      %v1488 = vpop.f32.mrf.mxu0
      %v1489 = vpop.f32.mrf.mxu0
      %v1490 = vadd.f32 %v1329, %v1489
      %v1491 = vpop.f32.mrf.mxu0
      %1492 = vmatprep.mubr.bf16.mxu0 %v814
      %1493 = vmatmul.mubr.bf16.gmra.mxu0 %v813
      %v1494 = vpop.f32.mrf.mxu0
      %v1495 = vadd.f32 %v1334, %v1494
      %v1496 = vpop.f32.mrf.mxu0
      %v1497 = vpop.f32.mrf.mxu0
      %v1498 = vadd.f32 %v1337, %v1497
      %v1499 = vpop.f32.mrf.mxu0
      %1500 = vmatprep.mubr.bf16.mxu0 %v820
      %1501 = vmatmul.mubr.bf16.gmra.mxu0 %v819
      %v1502 = vpop.f32.mrf.mxu0
      %v1503 = vadd.f32 %v1342, %v1502
      %v1504 = vpop.f32.mrf.mxu0
      %v1505 = vpop.f32.mrf.mxu0
      %v1506 = vadd.f32 %v1345, %v1505
      %v1507 = vpop.f32.mrf.mxu0
      %1508 = vmatprep.mubr.bf16.mxu0 %v826
      %1509 = vmatmul.mubr.bf16.gmra.mxu0 %v825
      %v1510 = vpop.f32.mrf.mxu0
      %v1511 = vadd.f32 %v1350, %v1510
      %v1512 = vpop.f32.mrf.mxu0
      %v1513 = vpop.f32.mrf.mxu0
      %v1514 = vadd.f32 %v1353, %v1513
      %v1515 = vpop.f32.mrf.mxu0
      %1516 = vmatprep.mubr.bf16.mxu0 %v832
      %1517 = vmatmul.mubr.bf16.gmra.mxu0 %v831
      %v1518 = vpop.f32.mrf.mxu0
      %v1519 = vadd.f32 %v1358, %v1518
      %v1520 = vpop.f32.mrf.mxu0
      %v1521 = vpop.f32.mrf.mxu0
      %v1522 = vadd.f32 %v1361, %v1521
      %v1523 = vpop.f32.mrf.mxu0
      %1524 = vmatprep.mubr.bf16.mxu0 %v838
      %1525 = vmatmul.mubr.bf16.gmra.mxu0 %v837
      %v1526 = vpop.f32.mrf.mxu0
      %v1527 = vadd.f32 %v1366, %v1526
      %v1528 = vpop.f32.mrf.mxu0
      %v1529 = vpop.f32.mrf.mxu0
      %v1530 = vadd.f32 %v1369, %v1529
      %v1531 = vpop.f32.mrf.mxu0
      %1532 = vmatprep.mubr.bf16.mxu0 %v844
      %1533 = vmatmul.mubr.bf16.gmra.mxu0 %v843
      %v1534 = vpop.f32.mrf.mxu0
      %v1535 = vadd.f32 %v1374, %v1534
      %v1536 = vpop.f32.mrf.mxu0
      %v1537 = vpop.f32.mrf.mxu0
      %v1538 = vadd.f32 %v1377, %v1537
      %v1539 = vpop.f32.mrf.mxu0
      %1540 = vmatprep.mubr.bf16.mxu0 %v850
      %1541 = vmatmul.mubr.bf16.gmra.mxu0 %v849
      %v1542 = vpop.f32.mrf.mxu0
      %v1543 = vadd.f32 %v1382, %v1542
      %v1544 = vpop.f32.mrf.mxu0
      %v1545 = vpop.f32.mrf.mxu0
      %v1546 = vadd.f32 %v1385, %v1545
      %v1547 = vpop.f32.mrf.mxu0
      %1548 = vmatprep.mubr.bf16.mxu0 %v856
      %1549 = vmatmul.mubr.bf16.gmra.mxu0 %v855
      %v1550 = vpop.f32.mrf.mxu0
      %v1551 = vadd.f32 %v1390, %v1550
      %v1552 = vpop.f32.mrf.mxu0
      %v1553 = vpop.f32.mrf.mxu0
      %v1554 = vadd.f32 %v1393, %v1553
      %v1555 = vpop.f32.mrf.mxu0
      %1556 = vmatprep.mubr.bf16.mxu0 %v862
      %1557 = vmatmul.mubr.bf16.gmra.mxu0 %v861
      %v1558 = vpop.f32.mrf.mxu0
      %v1559 = vadd.f32 %v1398, %v1558
      %v1560 = vpop.f32.mrf.mxu0
      %v1561 = vpop.f32.mrf.mxu0
      %v1562 = vadd.f32 %v1401, %v1561
      %v1563 = vpop.f32.mrf.mxu0
      %1564 = vmatprep.mubr.bf16.mxu0 %v868
      %1565 = vmatmul.mubr.bf16.gmra.mxu0 %v867
      %v1566 = vpop.f32.mrf.mxu0
      %v1567 = vadd.f32 %v1406, %v1566
      %v1568 = vpop.f32.mrf.mxu0
      %v1569 = vpop.f32.mrf.mxu0
      %v1570 = vadd.f32 %v1409, %v1569
      %v1571 = vpop.f32.mrf.mxu0
      %1572 = vmatprep.mubr.bf16.mxu0 %v874
      %1573 = vmatmul.mubr.bf16.gmra.mxu0 %v873
      %v1574 = vpop.f32.mrf.mxu0
      %v1575 = vadd.f32 %v1414, %v1574
      %v1576 = vpop.f32.mrf.mxu0
      %v1577 = vpop.f32.mrf.mxu0
      %v1578 = vadd.f32 %v1417, %v1577
      %v1579 = vpop.f32.mrf.mxu0
      %1580 = vmatprep.mubr.bf16.mxu0 %v880
      %1581 = vmatmul.mubr.bf16.gmra.mxu0 %v879
      %v1582 = vpop.f32.mrf.mxu0
      %v1583 = vadd.f32 %v1422, %v1582
      %v1584 = vpop.f32.mrf.mxu0
      %v1585 = vpop.f32.mrf.mxu0
      %v1586 = vadd.f32 %v1425, %v1585
      %v1587 = vpop.f32.mrf.mxu0
      %1588 = vdwg.mxu0
      %1589 = vmatprep.subr.bf16.mxu0 0
      %1590 = vmatpush1.bf16.msra.mxu0 %v1210
      %1591 = vmatprep.subr.bf16.mxu0 0
      %1592 = vmatpush1.bf16.msra.mxu0 %v1209
      %1593 = vmatprep.subr.bf16.mxu0 0
      %1594 = vmatpush1.bf16.msra.mxu0 %v1208
      %1595 = vmatprep.subr.bf16.mxu0 0
      %1596 = vmatpush1.bf16.msra.mxu0 %v1207
      %1597 = vmatprep.subr.bf16.mxu0 0
      %1598 = vmatpush1.bf16.msra.mxu0 %v1206
      %1599 = vmatprep.subr.bf16.mxu0 0
      %1600 = vmatpush1.bf16.msra.mxu0 %v1205
      %1601 = vmatprep.subr.bf16.mxu0 0
      %1602 = vmatpush1.bf16.msra.mxu0 %v1204
      %1603 = vmatprep.subr.bf16.mxu0 0
      %1604 = vmatpush1.bf16.msra.mxu0 %v1203
      %1605 = vmatprep.subr.bf16.mxu0 0
      %1606 = vmatpush2.bf16.msra.mxu0 %v1218
      %1607 = vmatprep.subr.bf16.mxu0 0
      %1608 = vmatpush2.bf16.msra.mxu0 %v1217
      %1609 = vmatprep.subr.bf16.mxu0 0
      %1610 = vmatpush2.bf16.msra.mxu0 %v1216
      %1611 = vmatprep.subr.bf16.mxu0 0
      %1612 = vmatpush2.bf16.msra.mxu0 %v1215
      %1613 = vmatprep.subr.bf16.mxu0 0
      %1614 = vmatpush2.bf16.msra.mxu0 %v1214
      %1615 = vmatprep.subr.bf16.mxu0 0
      %1616 = vmatpush2.bf16.msra.mxu0 %v1213
      %1617 = vmatprep.subr.bf16.mxu0 0
      %1618 = vmatpush2.bf16.msra.mxu0 %v1212
      %1619 = vmatprep.subr.bf16.mxu0 0
      %1620 = vmatpush2.bf16.msra.mxu0 %v1211
      %1621 = vmatprep.mubr.bf16.mxu0 %v792
      %1622 = vmatmul.mubr.bf16.gmra.mxu0 %v791
      %v1623 = vpop.f32.mrf.mxu0
      %v1624 = vadd.f32 %v1463, %v1623
      %v1625 = vpop.f32.mrf.mxu0
      %v1626 = vpop.f32.mrf.mxu0
      %v1627 = vadd.f32 %v1466, %v1626
      %v1628 = vpop.f32.mrf.mxu0
      %1629 = vmatprep.mubr.bf16.mxu0 %v798
      %1630 = vmatmul.mubr.bf16.gmra.mxu0 %v797
      %v1631 = vpop.f32.mrf.mxu0
      %v1632 = vadd.f32 %v1471, %v1631
      %v1633 = vpop.f32.mrf.mxu0
      %v1634 = vpop.f32.mrf.mxu0
      %v1635 = vadd.f32 %v1474, %v1634
      %v1636 = vpop.f32.mrf.mxu0
      %1637 = vmatprep.mubr.bf16.mxu0 %v804
      %1638 = vmatmul.mubr.bf16.gmra.mxu0 %v803
      %v1639 = vpop.f32.mrf.mxu0
      %v1640 = vadd.f32 %v1479, %v1639
      %v1641 = vpop.f32.mrf.mxu0
      %v1642 = vpop.f32.mrf.mxu0
      %v1643 = vadd.f32 %v1482, %v1642
      %v1644 = vpop.f32.mrf.mxu0
      %1645 = vmatprep.mubr.bf16.mxu0 %v810
      %1646 = vmatmul.mubr.bf16.gmra.mxu0 %v809
      %v1647 = vpop.f32.mrf.mxu0
      %v1648 = vadd.f32 %v1487, %v1647
      %v1649 = vpop.f32.mrf.mxu0
      %v1650 = vpop.f32.mrf.mxu0
      %v1651 = vadd.f32 %v1490, %v1650
      %v1652 = vpop.f32.mrf.mxu0
      %1653 = vmatprep.mubr.bf16.mxu0 %v816
      %1654 = vmatmul.mubr.bf16.gmra.mxu0 %v815
      %v1655 = vpop.f32.mrf.mxu0
      %v1656 = vadd.f32 %v1495, %v1655
      %v1657 = vpop.f32.mrf.mxu0
      %v1658 = vpop.f32.mrf.mxu0
      %v1659 = vadd.f32 %v1498, %v1658
      %v1660 = vpop.f32.mrf.mxu0
      %1661 = vmatprep.mubr.bf16.mxu0 %v822
      %1662 = vmatmul.mubr.bf16.gmra.mxu0 %v821
      %v1663 = vpop.f32.mrf.mxu0
      %v1664 = vadd.f32 %v1503, %v1663
      %v1665 = vpop.f32.mrf.mxu0
      %v1666 = vpop.f32.mrf.mxu0
      %v1667 = vadd.f32 %v1506, %v1666
      %v1668 = vpop.f32.mrf.mxu0
      %1669 = vmatprep.mubr.bf16.mxu0 %v828
      %1670 = vmatmul.mubr.bf16.gmra.mxu0 %v827
      %v1671 = vpop.f32.mrf.mxu0
      %v1672 = vadd.f32 %v1511, %v1671
      %v1673 = vpop.f32.mrf.mxu0
      %v1674 = vpop.f32.mrf.mxu0
      %v1675 = vadd.f32 %v1514, %v1674
      %v1676 = vpop.f32.mrf.mxu0
      %1677 = vmatprep.mubr.bf16.mxu0 %v834
      %1678 = vmatmul.mubr.bf16.gmra.mxu0 %v833
      %v1679 = vpop.f32.mrf.mxu0
      %v1680 = vadd.f32 %v1519, %v1679
      %v1681 = vpop.f32.mrf.mxu0
      %v1682 = vpop.f32.mrf.mxu0
      %v1683 = vadd.f32 %v1522, %v1682
      %v1684 = vpop.f32.mrf.mxu0
      %1685 = vmatprep.mubr.bf16.mxu0 %v840
      %1686 = vmatmul.mubr.bf16.gmra.mxu0 %v839
      %v1687 = vpop.f32.mrf.mxu0
      %v1688 = vadd.f32 %v1527, %v1687
      %v1689 = vpop.f32.mrf.mxu0
      %v1690 = vpop.f32.mrf.mxu0
      %v1691 = vadd.f32 %v1530, %v1690
      %v1692 = vpop.f32.mrf.mxu0
      %1693 = vmatprep.mubr.bf16.mxu0 %v846
      %1694 = vmatmul.mubr.bf16.gmra.mxu0 %v845
      %v1695 = vpop.f32.mrf.mxu0
      %v1696 = vadd.f32 %v1535, %v1695
      %v1697 = vpop.f32.mrf.mxu0
      %v1698 = vpop.f32.mrf.mxu0
      %v1699 = vadd.f32 %v1538, %v1698
      %v1700 = vpop.f32.mrf.mxu0
      %1701 = vmatprep.mubr.bf16.mxu0 %v852
      %1702 = vmatmul.mubr.bf16.gmra.mxu0 %v851
      %v1703 = vpop.f32.mrf.mxu0
      %v1704 = vadd.f32 %v1543, %v1703
      %v1705 = vpop.f32.mrf.mxu0
      %v1706 = vpop.f32.mrf.mxu0
      %v1707 = vadd.f32 %v1546, %v1706
      %v1708 = vpop.f32.mrf.mxu0
      %1709 = vmatprep.mubr.bf16.mxu0 %v858
      %1710 = vmatmul.mubr.bf16.gmra.mxu0 %v857
      %v1711 = vpop.f32.mrf.mxu0
      %v1712 = vadd.f32 %v1551, %v1711
      %v1713 = vpop.f32.mrf.mxu0
      %v1714 = vpop.f32.mrf.mxu0
      %v1715 = vadd.f32 %v1554, %v1714
      %v1716 = vpop.f32.mrf.mxu0
      %1717 = vmatprep.mubr.bf16.mxu0 %v864
      %1718 = vmatmul.mubr.bf16.gmra.mxu0 %v863
      %v1719 = vpop.f32.mrf.mxu0
      %v1720 = vadd.f32 %v1559, %v1719
      %v1721 = vpop.f32.mrf.mxu0
      %v1722 = vpop.f32.mrf.mxu0
      %v1723 = vadd.f32 %v1562, %v1722
      %v1724 = vpop.f32.mrf.mxu0
      %1725 = vmatprep.mubr.bf16.mxu0 %v870
      %1726 = vmatmul.mubr.bf16.gmra.mxu0 %v869
      %v1727 = vpop.f32.mrf.mxu0
      %v1728 = vadd.f32 %v1567, %v1727
      %v1729 = vpop.f32.mrf.mxu0
      %v1730 = vpop.f32.mrf.mxu0
      %v1731 = vadd.f32 %v1570, %v1730
      %v1732 = vpop.f32.mrf.mxu0
      %1733 = vmatprep.mubr.bf16.mxu0 %v876
      %1734 = vmatmul.mubr.bf16.gmra.mxu0 %v875
      %v1735 = vpop.f32.mrf.mxu0
      %v1736 = vadd.f32 %v1575, %v1735
      %v1737 = vpop.f32.mrf.mxu0
      %v1738 = vpop.f32.mrf.mxu0
      %v1739 = vadd.f32 %v1578, %v1738
      %v1740 = vpop.f32.mrf.mxu0
      %1741 = vmatprep.mubr.bf16.mxu0 %v882
      %1742 = vmatmul.mubr.bf16.gmra.mxu0 %v881
      %v1743 = vpop.f32.mrf.mxu0
      %v1744 = vadd.f32 %v1583, %v1743
      %v1745 = vpop.f32.mrf.mxu0
      %v1746 = vpop.f32.mrf.mxu0
      %v1747 = vadd.f32 %v1586, %v1746
      %v1748 = vpop.f32.mrf.mxu0
      %1749 = vdwg.mxu0
      %v1750 = vadd.f32 %v275, %v1624
      %v1751 = vadd.f32 %v276, %v1627
      %v1752 = vadd.f32 %v277, %v1632
      %v1753 = vadd.f32 %v278, %v1635
      %v1754 = vadd.f32 %v279, %v1640
      %v1755 = vadd.f32 %v280, %v1643
      %v1756 = vadd.f32 %v281, %v1648
      %v1757 = vadd.f32 %v282, %v1651
      %v1758 = vadd.f32 %v283, %v1656
      %v1759 = vadd.f32 %v284, %v1659
      %v1760 = vadd.f32 %v285, %v1664
      %v1761 = vadd.f32 %v286, %v1667
      %v1762 = vadd.f32 %v287, %v1672
      %v1763 = vadd.f32 %v288, %v1675
      %v1764 = vadd.f32 %v289, %v1680
      %v1765 = vadd.f32 %v290, %v1683
      %v1766 = vadd.f32 %v291, %v1688
      %v1767 = vadd.f32 %v292, %v1691
      %v1768 = vadd.f32 %v293, %v1696
      %v1769 = vadd.f32 %v294, %v1699
      %v1770 = vadd.f32 %v295, %v1704
      %v1771 = vadd.f32 %v296, %v1707
      %v1772 = vadd.f32 %v297, %v1712
      %v1773 = vadd.f32 %v298, %v1715
      %v1774 = vadd.f32 %v299, %v1720
      %v1775 = vadd.f32 %v300, %v1723
      %v1776 = vadd.f32 %v301, %v1728
      %v1777 = vadd.f32 %v302, %v1731
      %v1778 = vadd.f32 %v303, %v1736
      %v1779 = vadd.f32 %v304, %v1739
      %v1780 = vadd.f32 %v305, %v1744
      %v1781 = vadd.f32 %v306, %v1747
      %1782 = vst [vmem:[%s232] sm:$0xff] %v1750
      %1783 = vst [vmem:[%s232 + $0x8] sm:$0xff] %v1751
      %1784 = vst [vmem:[%s232 + $0x10] sm:$0xff] %v1752
      %1785 = vst [vmem:[%s232 + $0x18] sm:$0xff] %v1753
      %1786 = vst [vmem:[%s232 + $0x20] sm:$0xff] %v1754
      %1787 = vst [vmem:[%s232 + $0x28] sm:$0xff] %v1755
      %1788 = vst [vmem:[%s232 + $0x30] sm:$0xff] %v1756
      %1789 = vst [vmem:[%s232 + $0x38] sm:$0xff] %v1757
      %1790 = vst [vmem:[%s232 + $0x40] sm:$0xff] %v1758
      %1791 = vst [vmem:[%s232 + $0x48] sm:$0xff] %v1759
      %1792 = vst [vmem:[%s232 + $0x50] sm:$0xff] %v1760
      %1793 = vst [vmem:[%s232 + $0x58] sm:$0xff] %v1761
      %1794 = vst [vmem:[%s232 + $0x60] sm:$0xff] %v1762
      %1795 = vst [vmem:[%s232 + $0x68] sm:$0xff] %v1763
      %1796 = vst [vmem:[%s232 + $0x70] sm:$0xff] %v1764
      %1797 = vst [vmem:[%s232 + $0x78] sm:$0xff] %v1765
      %1798 = vst [vmem:[%s232 + $0x80] sm:$0xff] %v1766
      %1799 = vst [vmem:[%s232 + $0x88] sm:$0xff] %v1767
      %1800 = vst [vmem:[%s232 + $0x90] sm:$0xff] %v1768
      %1801 = vst [vmem:[%s232 + $0x98] sm:$0xff] %v1769
      %1802 = vst [vmem:[%s232 + $0xa0] sm:$0xff] %v1770
      %1803 = vst [vmem:[%s232 + $0xa8] sm:$0xff] %v1771
      %1804 = vst [vmem:[%s232 + $0xb0] sm:$0xff] %v1772
      %1805 = vst [vmem:[%s232 + $0xb8] sm:$0xff] %v1773
      %1806 = vst [vmem:[%s232 + $0xc0] sm:$0xff] %v1774
      %1807 = vst [vmem:[%s232 + $0xc8] sm:$0xff] %v1775
      %1808 = vst [vmem:[%s232 + $0xd0] sm:$0xff] %v1776
      %1809 = vst [vmem:[%s232 + $0xd8] sm:$0xff] %v1777
      %1810 = vst [vmem:[%s232 + $0xe0] sm:$0xff] %v1778
      %1811 = vst [vmem:[%s232 + $0xe8] sm:$0xff] %v1779
      %1812 = vst [vmem:[%s232 + $0xf0] sm:$0xff] %v1780
      %1813 = vst [vmem:[%s232 + $0xf8] sm:$0xff] %v1781
      // Predicated region
      $region33: #{forward.14} parent=27 // pred_check
        %p1814 = pneg %p239
      $region34: #{forward.14} parent=27 // pred_check_branch
        %1816 = sbr.rel (%p1814) target = $region36
      $region35: #{forward.14} parent=27 // pred_region
        %v1817 = vld [vmem:[%s232] sm:$0xff]
        %v1818 = vld [vmem:[%s232 + $0x8] sm:$0xff]
        %v1819 = vld [vmem:[%s232 + $0x10] sm:$0xff]
        %v1820 = vld [vmem:[%s232 + $0x18] sm:$0xff]
        %v1821 = vld [vmem:[%s232 + $0x20] sm:$0xff]
        %v1822 = vld [vmem:[%s232 + $0x28] sm:$0xff]
        %v1823 = vld [vmem:[%s232 + $0x30] sm:$0xff]
        %v1824 = vld [vmem:[%s232 + $0x38] sm:$0xff]
        %v1825 = vld [vmem:[%s232 + $0x40] sm:$0xff]
        %v1826 = vld [vmem:[%s232 + $0x48] sm:$0xff]
        %v1827 = vld [vmem:[%s232 + $0x50] sm:$0xff]
        %v1828 = vld [vmem:[%s232 + $0x58] sm:$0xff]
        %v1829 = vld [vmem:[%s232 + $0x60] sm:$0xff]
        %v1830 = vld [vmem:[%s232 + $0x68] sm:$0xff]
        %v1831 = vld [vmem:[%s232 + $0x70] sm:$0xff]
        %v1832 = vld [vmem:[%s232 + $0x78] sm:$0xff]
        %v1833 = vld [vmem:[%s232 + $0x80] sm:$0xff]
        %v1834 = vld [vmem:[%s232 + $0x88] sm:$0xff]
        %v1835 = vld [vmem:[%s232 + $0x90] sm:$0xff]
        %v1836 = vld [vmem:[%s232 + $0x98] sm:$0xff]
        %v1837 = vld [vmem:[%s232 + $0xa0] sm:$0xff]
        %v1838 = vld [vmem:[%s232 + $0xa8] sm:$0xff]
        %v1839 = vld [vmem:[%s232 + $0xb0] sm:$0xff]
        %v1840 = vld [vmem:[%s232 + $0xb8] sm:$0xff]
        %v1841 = vld [vmem:[%s232 + $0xc0] sm:$0xff]
        %v1842 = vld [vmem:[%s232 + $0xc8] sm:$0xff]
        %v1843 = vld [vmem:[%s232 + $0xd0] sm:$0xff]
        %v1844 = vld [vmem:[%s232 + $0xd8] sm:$0xff]
        %v1845 = vld [vmem:[%s232 + $0xe0] sm:$0xff]
        %v1846 = vld [vmem:[%s232 + $0xe8] sm:$0xff]
        %v1847 = vld [vmem:[%s232 + $0xf0] sm:$0xff]
        %v1848 = vld [vmem:[%s232 + $0xf8] sm:$0xff]
        %v1849 = vadd.f32 %v1817, %v1818
        %v1850 = vadd.f32 %v1849, %v1819
        %v1851 = vadd.f32 %v1850, %v1820
        %v1852 = vadd.f32 %v1851, %v1821
        %v1853 = vadd.f32 %v1852, %v1822
        %v1854 = vadd.f32 %v1853, %v1823
        %v1855 = vadd.f32 %v1854, %v1824
        %v1856 = vadd.f32 %v1855, %v1825
        %v1857 = vadd.f32 %v1856, %v1826
        %v1858 = vadd.f32 %v1857, %v1827
        %v1859 = vadd.f32 %v1858, %v1828
        %v1860 = vadd.f32 %v1859, %v1829
        %v1861 = vadd.f32 %v1860, %v1830
        %v1862 = vadd.f32 %v1861, %v1831
        %v1863 = vadd.f32 %v1862, %v1832
        %v1864 = vadd.f32 %v1863, %v1833
        %v1865 = vadd.f32 %v1864, %v1834
        %v1866 = vadd.f32 %v1865, %v1835
        %v1867 = vadd.f32 %v1866, %v1836
        %v1868 = vadd.f32 %v1867, %v1837
        %v1869 = vadd.f32 %v1868, %v1838
        %v1870 = vadd.f32 %v1869, %v1839
        %v1871 = vadd.f32 %v1870, %v1840
        %v1872 = vadd.f32 %v1871, %v1841
        %v1873 = vadd.f32 %v1872, %v1842
        %v1874 = vadd.f32 %v1873, %v1843
        %v1875 = vadd.f32 %v1874, %v1844
        %v1876 = vadd.f32 %v1875, %v1845
        %v1877 = vadd.f32 %v1876, %v1846
        %v1878 = vadd.f32 %v1877, %v1847
        %v1879 = vadd.f32 %v1878, %v1848
        %v1880 = vrot.slane %v1879, 4
        %v1881 = vadd.f32 %v1879, %v1880
        %v1882 = vrot.slane %v1881, 2
        %v1883 = vadd.f32 %v1881, %v1882
        %v1884 = vrot.slane %v1883, 1
        %v1885 = vadd.f32 %v1883, %v1884
        %1886 = vst [vmem:[%s237] sm:$0x1] %v1885
        %v1887 = vmul.f32 %v1817, %v1817
        %v1888 = vmul.f32 %v1818, %v1818
        %v1889 = vmul.f32 %v1819, %v1819
        %v1890 = vmul.f32 %v1820, %v1820
        %v1891 = vmul.f32 %v1821, %v1821
        %v1892 = vmul.f32 %v1822, %v1822
        %v1893 = vmul.f32 %v1823, %v1823
        %v1894 = vmul.f32 %v1824, %v1824
        %v1895 = vmul.f32 %v1825, %v1825
        %v1896 = vmul.f32 %v1826, %v1826
        %v1897 = vmul.f32 %v1827, %v1827
        %v1898 = vmul.f32 %v1828, %v1828
        %v1899 = vmul.f32 %v1829, %v1829
        %v1900 = vmul.f32 %v1830, %v1830
        %v1901 = vmul.f32 %v1831, %v1831
        %v1902 = vmul.f32 %v1832, %v1832
        %v1903 = vmul.f32 %v1833, %v1833
        %v1904 = vmul.f32 %v1834, %v1834
        %v1905 = vmul.f32 %v1835, %v1835
        %v1906 = vmul.f32 %v1836, %v1836
        %v1907 = vmul.f32 %v1837, %v1837
        %v1908 = vmul.f32 %v1838, %v1838
        %v1909 = vmul.f32 %v1839, %v1839
        %v1910 = vmul.f32 %v1840, %v1840
        %v1911 = vmul.f32 %v1841, %v1841
        %v1912 = vmul.f32 %v1842, %v1842
        %v1913 = vmul.f32 %v1843, %v1843
        %v1914 = vmul.f32 %v1844, %v1844
        %v1915 = vmul.f32 %v1845, %v1845
        %v1916 = vmul.f32 %v1846, %v1846
        %v1917 = vmul.f32 %v1847, %v1847
        %v1918 = vmul.f32 %v1848, %v1848
        %v1919 = vadd.f32 %v1887, %v1888
        %v1920 = vadd.f32 %v1919, %v1889
        %v1921 = vadd.f32 %v1920, %v1890
        %v1922 = vadd.f32 %v1921, %v1891
        %v1923 = vadd.f32 %v1922, %v1892
        %v1924 = vadd.f32 %v1923, %v1893
        %v1925 = vadd.f32 %v1924, %v1894
        %v1926 = vadd.f32 %v1925, %v1895
        %v1927 = vadd.f32 %v1926, %v1896
        %v1928 = vadd.f32 %v1927, %v1897
        %v1929 = vadd.f32 %v1928, %v1898
        %v1930 = vadd.f32 %v1929, %v1899
        %v1931 = vadd.f32 %v1930, %v1900
        %v1932 = vadd.f32 %v1931, %v1901
        %v1933 = vadd.f32 %v1932, %v1902
        %v1934 = vadd.f32 %v1933, %v1903
        %v1935 = vadd.f32 %v1934, %v1904
        %v1936 = vadd.f32 %v1935, %v1905
        %v1937 = vadd.f32 %v1936, %v1906
        %v1938 = vadd.f32 %v1937, %v1907
        %v1939 = vadd.f32 %v1938, %v1908
        %v1940 = vadd.f32 %v1939, %v1909
        %v1941 = vadd.f32 %v1940, %v1910
        %v1942 = vadd.f32 %v1941, %v1911
        %v1943 = vadd.f32 %v1942, %v1912
        %v1944 = vadd.f32 %v1943, %v1913
        %v1945 = vadd.f32 %v1944, %v1914
        %v1946 = vadd.f32 %v1945, %v1915
        %v1947 = vadd.f32 %v1946, %v1916
        %v1948 = vadd.f32 %v1947, %v1917
        %v1949 = vadd.f32 %v1948, %v1918
        %v1950 = vrot.slane %v1949, 4
        %v1951 = vadd.f32 %v1949, %v1950
        %v1952 = vrot.slane %v1951, 2
        %v1953 = vadd.f32 %v1951, %v1952
        %v1954 = vrot.slane %v1953, 1
        %v1955 = vadd.f32 %v1953, %v1954
        %1956 = vst [vmem:[%s237 + $0x1] sm:$0x1] %v1955
        %1957 = vst [vmem:[%s237 + $0x2] sm:$0x3f] 0.0
      $region36: #{forward.14} parent=27 // pred_fallthru
        _
      %s1958 = smul.u32 32, %s19
      %p1959 = scmp.lt.s32.totalorder %s1958, 63
      %s1960 = scalar_select %p1959, %s1958, 63
      %s1961 = smul.addr %s1960, 8
      %s1962 = scalar_lea.vmem %s2, %s1961
      %p1963 = scmp.lt.s32.totalorder %s19, 1
      %s1964 = scalar_select %p1963, %s19, 1
      %s1965 = smul.addr %s1964, 8
      %s1966 = scalar_lea.vmem %s3, %s1965
      // Predicated region
      $region37: #{forward.14} parent=27 // pred_check
        %p1967 = pneg %p99
      $region38: #{forward.14} parent=27 // pred_check_branch
        %1969 = sbr.rel (%p1967) target = $region40
      $region39: #{forward.14} parent=27 // pred_region
        %s1970 = smul.u32 32, %s19
      $region40: #{forward.14} parent=27 // pred_fallthru
        _
      // Predicated region
      $region41: #{forward.14} parent=27 // pred_check
        %p1971 = pneg %p125
      $region42: #{forward.14} parent=27 // pred_check_branch
        %1973 = sbr.rel (%p1971) target = $region44
      $region43: #{forward.14} parent=27 // pred_region
        _
      $region44: #{forward.14} parent=27 // pred_fallthru
        _
    $region28: #{forward.14} parent=5 // pred_fallthru
      _
    %p1974 = scmp.le.s32.totalorder 2, %s10
    // Predicated region
    $region45: #{forward.14} parent=5 // pred_check
      %p1975 = pneg %p1974
    $region46: #{forward.14} parent=5 // pred_check_branch
      %1977 = sbr.rel (%p1975) target = $region48
    $region47: #{forward.14} parent=5 // pred_region
      %s1978 = ssub.s32 %s10, 2
      // Predicated region
      $region49: #{forward.14} parent=47 // pred_check
        %p1979 = pneg %p105
      $region50: #{forward.14} parent=47 // pred_check_branch
        %1981 = sbr.rel (%p1979) target = $region52
      $region51: #{forward.14} parent=47 // pred_region
        %s1982 = smul.u32 32, %s21
        %p1983 = scmp.lt.s32.totalorder %s1982, 63
        %s1984 = scalar_select %p1983, %s1982, 63
        %s1985 = smul.addr %s1984, 8
        %s1986 = scalar_lea.vmem %s2, %s1985
      $region52: #{forward.14} parent=47 // pred_fallthru
        _
      // Predicated region
      $region53: #{forward.14} parent=47 // pred_check
        %p1987 = pneg %p131
      $region54: #{forward.14} parent=47 // pred_check_branch
        %1989 = sbr.rel (%p1987) target = $region56
      $region55: #{forward.14} parent=47 // pred_region
        %p1990 = scmp.lt.s32.totalorder %s21, 1
        %s1991 = scalar_select %p1990, %s21, 1
        %s1992 = smul.addr %s1991, 8
        %s1993 = scalar_lea.vmem %s3, %s1992
      $region56: #{forward.14} parent=47 // pred_fallthru
        _
    $region48: #{forward.14} parent=5 // pred_fallthru
      _
  $region6: #{forward.14} parent=0 // loop_footer
    %s14 = sadd.s32 1, %s10
  $region7: #{forward.14} parent=0 // loop_footer_branch
    %9 = sbr.rel target = $region3
  $region8: #{forward.14} parent=0 // loop_exit
    _

// kernel: forward.16
$region0: #{forward.16}
  #allocation0 [shape = 'u32[]', space=smem, size = 0x4, offset = 0x4, fixed_abs, tag = 'smem constant byte address 0x4 - core index']
  #allocation1 [shape = 'u32[144,128]{1,0:T(1,128)}', space=vmem, size = 0x12000, scoped, tag = 'internal scratch']
  %s0 = inlined_call_operand.vmem [shape: bf16[64,22016], index: 0, kind: input, shape index: {}]
  %s1 = inlined_call_operand.vmem [shape: bf16[22016,128], index: 1, kind: input, shape index: {}]
  %s2 = inlined_call_operand.vmem [shape: f32[64,128], index: 2, kind: output, shape index: {0}]
  %s3 = inlined_call_operand.vmem [shape: f32[8,128], index: 3, kind: output, shape index: {1}]
  %4 = xla_tuple %s2, %s3
  %s5 = sld [smem:[#allocation0]]
  $region80: #{forward.16} parent=0
    _
  %s7 = ssub.s32 1, %s5
  %s8 = scalar_select 0, %s7, %s5
  $region1: #{forward.16} parent=0
    #allocation2 [shape = 'u8[131072]{0}', space=vmem, size = 0x20000, scoped, tag = 'input window, operand 0']
    loop: start=0, step=1, limit=45
    $region2: #{forward.16} parent=1 // loop_pre_header
      _
    $region3: #{forward.16} parent=1 // loop_header
      %s10 = sphi 0, %s14
      %p11 = scmp.ge.s32.totalorder %s10, 45
      %s17 = sphi 0, %s29
      %s18 = sphi 0, %s25
      %s19 = sphi 0, %s17
      %s20 = sphi 0, %s18
      %s21 = sphi 0, %s19
      %s22 = sphi 0, %s20
      %s34 = sphi 0, %s36
      %s37 = sphi 0, %s34
      %s38 = sphi 0, %s37
      %s54 = sphi 0, %s38
      %s60 = sphi 0, %s62
      %s63 = sphi 0, %s60
      %s64 = sphi 0, %s63
      %s80 = sphi 0, %s64
      %s86 = sphi 0, %s88
      %s89 = sphi 0, %s86
      %s90 = sphi 0, %s89
      %s106 = sphi 0, %s90
      %s112 = sphi 0, %s114
      %s115 = sphi 0, %s112
      %s116 = sphi 0, %s115
      %s132 = sphi 0, %s116
    $region4: #{forward.16} parent=1 // loop_header_branch
      %13 = sbr.rel (%p11) target = $region8
    $region5: #{forward.16} parent=1 // loop_body
      %s15 = ssub.s32 %s10, 1
      %s16 = ssub.s32 %s10, 2
      %s23 = sadd.s32 1, %s18
      %p24 = scmp.ge.s32.totalorder %s23, 43
      %s25 = scalar_select %p24, 0, %s23
      %s26 = sadd.s32 1, %s17
      %s27 = scalar_select %p24, %s26, %s17
      %p28 = scmp.ge.s32.totalorder %s27, 1
      %s29 = scalar_select %p28, 0, %s27
      %s30 = ssub.s32 %s17, %s29
      %s31 = ssub.s32 %s18, %s25
      %s32 = sor.u32 %s30, %s31
      %p33 = scmp.eq.s32.totalorder %s32, 0
      %s35 = sadd.s32 %s34, 1
      %s36 = scalar_select %p33, %s34, %s35
      %p39 = pneg %p33
      %p40 = scmp.eq.s32.totalorder %s10, 42
      %p41 = por %p39, %p40
      %p42 = scmp.ne.s32.totalorder %s34, %s37
      %p43 = scmp.eq.s32.totalorder %s10, 0
      %p44 = por %p42, %p43
      %p45 = scmp.ne.s32.totalorder %s34, %s37
      %p46 = scmp.eq.s32.totalorder %s15, 42
      %p47 = por %p45, %p46
      %p48 = scmp.ne.s32.totalorder %s37, %s38
      %p49 = scmp.eq.s32.totalorder %s15, 0
      %p50 = por %p48, %p49
      %p51 = scmp.ne.s32.totalorder %s37, %s38
      %p52 = scmp.eq.s32.totalorder %s16, 42
      %p53 = por %p51, %p52
      %p55 = scmp.ne.s32.totalorder %s38, %s54
      %p56 = scmp.eq.s32.totalorder %s16, 0
      %p57 = por %p55, %p56
      %s58 = ssub.s32 %s18, %s25
      %p59 = scmp.eq.s32.totalorder %s58, 0
      %s61 = sadd.s32 %s60, 1
      %s62 = scalar_select %p59, %s60, %s61
      %p65 = pneg %p59
      %p66 = scmp.eq.s32.totalorder %s10, 42
      %p67 = por %p65, %p66
      %p68 = scmp.ne.s32.totalorder %s60, %s63
      %p69 = scmp.eq.s32.totalorder %s10, 0
      %p70 = por %p68, %p69
      %p71 = scmp.ne.s32.totalorder %s60, %s63
      %p72 = scmp.eq.s32.totalorder %s15, 42
      %p73 = por %p71, %p72
      %p74 = scmp.ne.s32.totalorder %s63, %s64
      %p75 = scmp.eq.s32.totalorder %s15, 0
      %p76 = por %p74, %p75
      %p77 = scmp.ne.s32.totalorder %s63, %s64
      %p78 = scmp.eq.s32.totalorder %s16, 42
      %p79 = por %p77, %p78
      %p81 = scmp.ne.s32.totalorder %s64, %s80
      %p82 = scmp.eq.s32.totalorder %s16, 0
      %p83 = por %p81, %p82
      %s84 = ssub.s32 %s17, %s29
      %p85 = scmp.eq.s32.totalorder %s84, 0
      %s87 = sadd.s32 %s86, 1
      %s88 = scalar_select %p85, %s86, %s87
      %p91 = pneg %p85
      %p92 = scmp.eq.s32.totalorder %s10, 42
      %p93 = por %p91, %p92
      %p94 = scmp.ne.s32.totalorder %s86, %s89
      %p95 = scmp.eq.s32.totalorder %s10, 0
      %p96 = por %p94, %p95
      %p97 = scmp.ne.s32.totalorder %s86, %s89
      %p98 = scmp.eq.s32.totalorder %s15, 42
      %p99 = por %p97, %p98
      %p100 = scmp.ne.s32.totalorder %s89, %s90
      %p101 = scmp.eq.s32.totalorder %s15, 0
      %p102 = por %p100, %p101
      %p103 = scmp.ne.s32.totalorder %s89, %s90
      %p104 = scmp.eq.s32.totalorder %s16, 42
      %p105 = por %p103, %p104
      %p107 = scmp.ne.s32.totalorder %s90, %s106
      %p108 = scmp.eq.s32.totalorder %s16, 0
      %p109 = por %p107, %p108
      %s110 = ssub.s32 %s17, %s29
      %p111 = scmp.eq.s32.totalorder %s110, 0
      %s113 = sadd.s32 %s112, 1
      %s114 = scalar_select %p111, %s112, %s113
      %p117 = pneg %p111
      %p118 = scmp.eq.s32.totalorder %s10, 42
      %p119 = por %p117, %p118
      %p120 = scmp.ne.s32.totalorder %s112, %s115
      %p121 = scmp.eq.s32.totalorder %s10, 0
      %p122 = por %p120, %p121
      %p123 = scmp.ne.s32.totalorder %s112, %s115
      %p124 = scmp.eq.s32.totalorder %s15, 42
      %p125 = por %p123, %p124
      %p126 = scmp.ne.s32.totalorder %s115, %s116
      %p127 = scmp.eq.s32.totalorder %s15, 0
      %p128 = por %p126, %p127
      %p129 = scmp.ne.s32.totalorder %s115, %s116
      %p130 = scmp.eq.s32.totalorder %s16, 42
      %p131 = por %p129, %p130
      %p133 = scmp.ne.s32.totalorder %s116, %s132
      %p134 = scmp.eq.s32.totalorder %s16, 0
      %p135 = por %p133, %p134
      %p136 = scmp.le.s32.totalorder 1, %s10
      %p137 = scmp.lt.s32.totalorder %s10, 44
      %p138 = pnand %p136, %p137
      %p139 = pneg %p138
      // Predicated region
      $region9: #{forward.16} parent=5 // pred_check
        _
      $region10: #{forward.16} parent=5 // pred_check_branch
        %141 = sbr.rel (%p138) target = $region12
      $region11: #{forward.16} parent=5 // pred_region
        %s142 = ssub.s32 %s10, 1
      $region12: #{forward.16} parent=5 // pred_fallthru
        _
      %p143 = scmp.lt.s32.totalorder %s10, 43
      // Predicated region
      $region13: #{forward.16} parent=5 // pred_check
        %p144 = pneg %p143
      $region14: #{forward.16} parent=5 // pred_check_branch
        %146 = sbr.rel (%p144) target = $region16
      $region15: #{forward.16} parent=5 // pred_region
        // Predicated region
        $region17: #{forward.16} parent=15 // pred_check
          %p147 = pneg %p44
        $region18: #{forward.16} parent=15 // pred_check_branch
          %149 = sbr.rel (%p147) target = $region20
        $region19: #{forward.16} parent=15 // pred_region
          %s150 = sand.u32 %s34, 1
          %s151 = sand.u32 %s34, 1
          %s152 = smul.addr %s151, 128
          %s153 = scalar_lea.vmem [#allocation2], %s152
          %s154 = smul.u32 8, %s17
          %s155 = smul.u32 4, %s18
          %s156 = smul.addr %s154, 172
          %s157 = sadd.s32 %s155, %s156
          %s158 = smul.addr %s157, 4
          %s159 = scalar_lea.vmem %s0, %s158
          // Predicated region
          $region21: #{forward.16} parent=19 // pred_check
            _
          $region22: #{forward.16} parent=19 // pred_check_branch
            %161 = sbr.rel (0) target = $region24
          $region23: #{forward.16} parent=19 // pred_region
            // Predicated region
            $region25: #{forward.16} parent=23 // pred_check
              _
            $region26: #{forward.16} parent=23 // pred_check_branch
              %163 = sbr.rel (0) target = $region28
            $region27: #{forward.16} parent=23 // pred_region
              loop: start=0, step=1, limit=1
              $region29: #{forward.16} parent=27 // loop_pre_header
                _
              $region30: #{forward.16} parent=27 // loop_header
                %s165 = sphi 0, %s169
                %p166 = scmp.ge.s32.totalorder %s165, 1
                %s170 = sphi %s159, %s159
                %s171 = sphi %s153, %s153
              $region31: #{forward.16} parent=27 // loop_header_branch
                %168 = sbr.rel (%p166) target = $region35
              $region32: #{forward.16} parent=27 // loop_body
                %v172 = vld [vmem:[%s170] sm:$0xff]
                %173 = vst [vmem:[%s171] sm:$0xff] %v172
                %v174 = vld [vmem:[%s170 + $0x8] sm:$0xff]
                %175 = vst [vmem:[%s171 + $0x8] sm:$0xff] %v174
                %v176 = vld [vmem:[%s170 + $0x2b0] sm:$0xff]
                %177 = vst [vmem:[%s171 + $0x10] sm:$0xff] %v176
                %v178 = vld [vmem:[%s170 + $0x2b8] sm:$0xff]
                %179 = vst [vmem:[%s171 + $0x18] sm:$0xff] %v178
                %v180 = vld [vmem:[%s170 + $0x560] sm:$0xff]
                %181 = vst [vmem:[%s171 + $0x20] sm:$0xff] %v180
                %v182 = vld [vmem:[%s170 + $0x568] sm:$0xff]
                %183 = vst [vmem:[%s171 + $0x28] sm:$0xff] %v182
                %v184 = vld [vmem:[%s170 + $0x810] sm:$0xff]
                %185 = vst [vmem:[%s171 + $0x30] sm:$0xff] %v184
                %v186 = vld [vmem:[%s170 + $0x818] sm:$0xff]
                %187 = vst [vmem:[%s171 + $0x38] sm:$0xff] %v186
                %v188 = vld [vmem:[%s170 + $0xac0] sm:$0xff]
                %189 = vst [vmem:[%s171 + $0x40] sm:$0xff] %v188
                %v190 = vld [vmem:[%s170 + $0xac8] sm:$0xff]
                %191 = vst [vmem:[%s171 + $0x48] sm:$0xff] %v190
                %v192 = vld [vmem:[%s170 + $0xd70] sm:$0xff]
                %193 = vst [vmem:[%s171 + $0x50] sm:$0xff] %v192
                %v194 = vld [vmem:[%s170 + $0xd78] sm:$0xff]
                %195 = vst [vmem:[%s171 + $0x58] sm:$0xff] %v194
                %v196 = vld [vmem:[%s170 + $0x1020] sm:$0xff]
                %197 = vst [vmem:[%s171 + $0x60] sm:$0xff] %v196
                %v198 = vld [vmem:[%s170 + $0x1028] sm:$0xff]
                %199 = vst [vmem:[%s171 + $0x68] sm:$0xff] %v198
                %v200 = vld [vmem:[%s170 + $0x12d0] sm:$0xff]
                %201 = vst [vmem:[%s171 + $0x70] sm:$0xff] %v200
                %v202 = vld [vmem:[%s170 + $0x12d8] sm:$0xff]
                %203 = vst [vmem:[%s171 + $0x78] sm:$0xff] %v202
              $region33: #{forward.16} parent=27 // loop_footer
                %s169 = sadd.s32 1, %s165
              $region34: #{forward.16} parent=27 // loop_footer_branch
                %164 = sbr.rel target = $region30
              $region35: #{forward.16} parent=27 // loop_exit
                _
            $region28: #{forward.16} parent=23 // pred_fallthru
              _
            // Predicated region
            $region36: #{forward.16} parent=23 // pred_check
              _
            $region37: #{forward.16} parent=23 // pred_check_branch
              %205 = sbr.rel target = $region39
            $region38: #{forward.16} parent=23 // pred_region
              _
            $region39: #{forward.16} parent=23 // pred_fallthru
              _
          $region24: #{forward.16} parent=19 // pred_fallthru
            _
          %206 = vnop
        $region20: #{forward.16} parent=15 // pred_fallthru
          _
        // Predicated region
        $region40: #{forward.16} parent=15 // pred_check
          %p207 = pneg %p70
        $region41: #{forward.16} parent=15 // pred_check_branch
          %209 = sbr.rel (%p207) target = $region43
        $region42: #{forward.16} parent=15 // pred_region
          %s210 = smul.u32 64, %s18
          %p211 = scmp.lt.s32.totalorder %s210, 2751
          %s212 = scalar_select %p211, %s210, 2751
          %s213 = smul.addr %s212, 4
          %s214 = scalar_lea.vmem %s1, %s213
          %s215 = smul.u32 64, %s18
        $region43: #{forward.16} parent=15 // pred_fallthru
          _
      $region16: #{forward.16} parent=5 // pred_fallthru
        _
      %p216 = scmp.le.s32.totalorder 1, %s10
      %p217 = scmp.lt.s32.totalorder %s10, 44
      %p218 = pnand %p216, %p217
      %p219 = pneg %p218
      // Predicated region
      $region44: #{forward.16} parent=5 // pred_check
        _
      $region45: #{forward.16} parent=5 // pred_check_branch
        %221 = sbr.rel (%p218) target = $region47
      $region46: #{forward.16} parent=5 // pred_region
        %s222 = ssub.s32 %s10, 1
        %s223 = sand.u32 %s37, 1
        %s224 = sand.u32 %s37, 1
        %s225 = smul.addr %s224, 128
        %s226 = scalar_lea.vmem [#allocation2], %s225
        // Predicated region
        $region48: #{forward.16} parent=46 // pred_check
          %p227 = pneg %p50
        $region49: #{forward.16} parent=46 // pred_check_branch
          %229 = sbr.rel (%p227) target = $region51
        $region50: #{forward.16} parent=46 // pred_region
          _
        $region51: #{forward.16} parent=46 // pred_fallthru
          _
        %s230 = sand.u32 %s37, 1
        %s231 = sand.u32 %s37, 1
        %s232 = smul.addr %s231, 128
        %s233 = scalar_lea.vmem [#allocation2], %s232
        %p234 = pneg %p50
        %p235 = pneg %p47
        %s236 = smul.u32 64, %s20
        %p237 = scmp.lt.s32.totalorder %s236, 2751
        %s238 = scalar_select %p237, %s236, 2751
        %s239 = smul.addr %s238, 4
        %s240 = scalar_lea.vmem %s1, %s239
        %p241 = pneg %p76
        %p242 = pneg %p73
        %p243 = pneg %p102
        %p244 = pneg %p99
        %s245 = smul.u32 8, %s19
        %p246 = scmp.lt.s32.totalorder %s245, 7
        %s247 = scalar_select %p246, %s245, 7
        %s248 = smul.addr %s247, 8
        %s249 = scalar_lea.vmem %s2, %s248
        %p250 = pneg %p128
        %p251 = pneg %p125
        %p252 = scmp.lt.s32.totalorder %s19, 0
        %s253 = scalar_select %p252, %s19, 0
        %s254 = smul.addr %s253, 8
        %s255 = scalar_lea.vmem %s3, %s254
        %s256 = smul.u32 8, %s19
        %s257 = smul.u32 4, %s20
        %s258 = smul.u32 64, %s20
        %p259 = scmp.lt.s32.totalorder %s258, 2751
        %s260 = scalar_select %p259, %s258, 2751
        %s261 = smul.addr %s260, 4
        %s262 = scalar_lea.vmem %s1, %s261
        %s263 = smul.u32 64, %s20
        %s264 = smul.u32 8, %s19
        %p265 = scmp.lt.s32.totalorder %s264, 7
        %s266 = scalar_select %p265, %s264, 7
        %s267 = smul.addr %s266, 8
        %s268 = scalar_lea.vmem %s2, %s267
        %s269 = smul.u32 8, %s19
        %p270 = scmp.lt.s32.totalorder %s19, 0
        %s271 = scalar_select %p270, %s19, 0
        %s272 = smul.addr %s271, 8
        %s273 = scalar_lea.vmem %s3, %s272
        %p275 = scmp.eq.s32.totalorder %s20, 0
        // Predicated region
        $region52: #{forward.16} parent=46 // pred_check
          %p276 = pneg %p275
        $region53: #{forward.16} parent=46 // pred_check_branch
          %278 = sbr.rel (%p276) target = $region55
        $region54: #{forward.16} parent=46 // pred_region
          %279 = vst [vmem:[%s268] sm:$0xff] 0.0
          %280 = vst [vmem:[%s268 + $0x8] sm:$0xff] 0.0
          %281 = vst [vmem:[%s268 + $0x10] sm:$0xff] 0.0
          %282 = vst [vmem:[%s268 + $0x18] sm:$0xff] 0.0
          %283 = vst [vmem:[%s268 + $0x20] sm:$0xff] 0.0
          %284 = vst [vmem:[%s268 + $0x28] sm:$0xff] 0.0
          %285 = vst [vmem:[%s268 + $0x30] sm:$0xff] 0.0
          %286 = vst [vmem:[%s268 + $0x38] sm:$0xff] 0.0
        $region55: #{forward.16} parent=46 // pred_fallthru
          _
        %v287 = vld [vmem:[%s268] sm:$0xff]
        %v288 = vld [vmem:[%s268 + $0x8] sm:$0xff]
        %v289 = vld [vmem:[%s268 + $0x10] sm:$0xff]
        %v290 = vld [vmem:[%s268 + $0x18] sm:$0xff]
        %v291 = vld [vmem:[%s268 + $0x20] sm:$0xff]
        %v292 = vld [vmem:[%s268 + $0x28] sm:$0xff]
        %v293 = vld [vmem:[%s268 + $0x30] sm:$0xff]
        %v294 = vld [vmem:[%s268 + $0x38] sm:$0xff]
        %v295 = vld [vmem:[%s226] sm:$0xff]
        %v296 = vld [vmem:[%s226 + $0x8] sm:$0xff]
        %v297 = vld [vmem:[%s226 + $0x10] sm:$0xff]
        %v298 = vld [vmem:[%s226 + $0x18] sm:$0xff]
        %v299 = vld [vmem:[%s226 + $0x20] sm:$0xff]
        %v300 = vld [vmem:[%s226 + $0x28] sm:$0xff]
        %v301 = vld [vmem:[%s226 + $0x30] sm:$0xff]
        %v302 = vld [vmem:[%s226 + $0x38] sm:$0xff]
        %v303 = vld [vmem:[%s226 + $0x40] sm:$0xff]
        %v304 = vld [vmem:[%s226 + $0x48] sm:$0xff]
        %v305 = vld [vmem:[%s226 + $0x50] sm:$0xff]
        %v306 = vld [vmem:[%s226 + $0x58] sm:$0xff]
        %v307 = vld [vmem:[%s226 + $0x60] sm:$0xff]
        %v308 = vld [vmem:[%s226 + $0x68] sm:$0xff]
        %v309 = vld [vmem:[%s226 + $0x70] sm:$0xff]
        %v310 = vld [vmem:[%s226 + $0x78] sm:$0xff]
        %v311 = vld [vmem:[%s262] sm:$0xf]
        %v312 = vld [vmem:[%s262 + $0x4] sm:$0xf]
        %v313 = vld [vmem:[%s262 + $0x8] sm:$0xf]
        %v314 = vld [vmem:[%s262 + $0xc] sm:$0xf]
        %v315 = vld [vmem:[%s262 + $0x10] sm:$0xf]
        %v316 = vld [vmem:[%s262 + $0x14] sm:$0xf]
        %v317 = vld [vmem:[%s262 + $0x18] sm:$0xf]
        %v318 = vld [vmem:[%s262 + $0x1c] sm:$0xf]
        %v319 = vld [vmem:[%s262 + $0x20] sm:$0xf]
        %v320 = vld [vmem:[%s262 + $0x24] sm:$0xf]
        %v321 = vld [vmem:[%s262 + $0x28] sm:$0xf]
        %v322 = vld [vmem:[%s262 + $0x2c] sm:$0xf]
        %v323 = vld [vmem:[%s262 + $0x30] sm:$0xf]
        %v324 = vld [vmem:[%s262 + $0x34] sm:$0xf]
        %v325 = vld [vmem:[%s262 + $0x38] sm:$0xf]
        %v326 = vld [vmem:[%s262 + $0x3c] sm:$0xf]
        %v327 = vld [vmem:[%s262 + $0x40] sm:$0xf]
        %v328 = vld [vmem:[%s262 + $0x44] sm:$0xf]
        %v329 = vld [vmem:[%s262 + $0x48] sm:$0xf]
        %v330 = vld [vmem:[%s262 + $0x4c] sm:$0xf]
        %v331 = vld [vmem:[%s262 + $0x50] sm:$0xf]
        %v332 = vld [vmem:[%s262 + $0x54] sm:$0xf]
        %v333 = vld [vmem:[%s262 + $0x58] sm:$0xf]
        %v334 = vld [vmem:[%s262 + $0x5c] sm:$0xf]
        %v335 = vld [vmem:[%s262 + $0x60] sm:$0xf]
        %v336 = vld [vmem:[%s262 + $0x64] sm:$0xf]
        %v337 = vld [vmem:[%s262 + $0x68] sm:$0xf]
        %v338 = vld [vmem:[%s262 + $0x6c] sm:$0xf]
        %v339 = vld [vmem:[%s262 + $0x70] sm:$0xf]
        %v340 = vld [vmem:[%s262 + $0x74] sm:$0xf]
        %v341 = vld [vmem:[%s262 + $0x78] sm:$0xf]
        %v342 = vld [vmem:[%s262 + $0x7c] sm:$0xf]
        %v343 = vld [vmem:[%s262 + $0x80] sm:$0xf]
        %v344 = vld [vmem:[%s262 + $0x84] sm:$0xf]
        %v345 = vld [vmem:[%s262 + $0x88] sm:$0xf]
        %v346 = vld [vmem:[%s262 + $0x8c] sm:$0xf]
        %v347 = vld [vmem:[%s262 + $0x90] sm:$0xf]
        %v348 = vld [vmem:[%s262 + $0x94] sm:$0xf]
        %v349 = vld [vmem:[%s262 + $0x98] sm:$0xf]
        %v350 = vld [vmem:[%s262 + $0x9c] sm:$0xf]
        %v351 = vld [vmem:[%s262 + $0xa0] sm:$0xf]
        %v352 = vld [vmem:[%s262 + $0xa4] sm:$0xf]
        %v353 = vld [vmem:[%s262 + $0xa8] sm:$0xf]
        %v354 = vld [vmem:[%s262 + $0xac] sm:$0xf]
        %v355 = vld [vmem:[%s262 + $0xb0] sm:$0xf]
        %v356 = vld [vmem:[%s262 + $0xb4] sm:$0xf]
        %v357 = vld [vmem:[%s262 + $0xb8] sm:$0xf]
        %v358 = vld [vmem:[%s262 + $0xbc] sm:$0xf]
        %v359 = vld [vmem:[%s262 + $0xc0] sm:$0xf]
        %v360 = vld [vmem:[%s262 + $0xc4] sm:$0xf]
        %v361 = vld [vmem:[%s262 + $0xc8] sm:$0xf]
        %v362 = vld [vmem:[%s262 + $0xcc] sm:$0xf]
        %v363 = vld [vmem:[%s262 + $0xd0] sm:$0xf]
        %v364 = vld [vmem:[%s262 + $0xd4] sm:$0xf]
        %v365 = vld [vmem:[%s262 + $0xd8] sm:$0xf]
        %v366 = vld [vmem:[%s262 + $0xdc] sm:$0xf]
        %v367 = vld [vmem:[%s262 + $0xe0] sm:$0xf]
        %v368 = vld [vmem:[%s262 + $0xe4] sm:$0xf]
        %v369 = vld [vmem:[%s262 + $0xe8] sm:$0xf]
        %v370 = vld [vmem:[%s262 + $0xec] sm:$0xf]
        %v371 = vld [vmem:[%s262 + $0xf0] sm:$0xf]
        %v372 = vld [vmem:[%s262 + $0xf4] sm:$0xf]
        %v373 = vld [vmem:[%s262 + $0xf8] sm:$0xf]
        %v374 = vld [vmem:[%s262 + $0xfc] sm:$0xf]
        %v391 = vunpack.c.l.b16 %v295
        %v392 = vunpack.c.h.b16 %v295
        %v393 = vunpack.c.l.b16 %v296
        %v394 = vunpack.c.h.b16 %v296
        %v395 = vunpack.c.l.b16 %v297
        %v396 = vunpack.c.h.b16 %v297
        %v397 = vunpack.c.l.b16 %v298
        %v398 = vunpack.c.h.b16 %v298
        %v399 = vunpack.c.l.b16 %v299
        %v400 = vunpack.c.h.b16 %v299
        %v401 = vunpack.c.l.b16 %v300
        %v402 = vunpack.c.h.b16 %v300
        %v403 = vunpack.c.l.b16 %v301
        %v404 = vunpack.c.h.b16 %v301
        %v405 = vunpack.c.l.b16 %v302
        %v406 = vunpack.c.h.b16 %v302
        %v407 = vunpack.c.l.b16 %v303
        %v408 = vunpack.c.h.b16 %v303
        %v409 = vunpack.c.l.b16 %v304
        %v410 = vunpack.c.h.b16 %v304
        %v411 = vunpack.c.l.b16 %v305
        %v412 = vunpack.c.h.b16 %v305
        %v413 = vunpack.c.l.b16 %v306
        %v414 = vunpack.c.h.b16 %v306
        %v415 = vunpack.c.l.b16 %v307
        %v416 = vunpack.c.h.b16 %v307
        %v417 = vunpack.c.l.b16 %v308
        %v418 = vunpack.c.h.b16 %v308
        %v419 = vunpack.c.l.b16 %v309
        %v420 = vunpack.c.h.b16 %v309
        %v421 = vunpack.c.l.b16 %v310
        %v422 = vunpack.c.h.b16 %v310
        %v423 = vpack.c.b16 %v395, %v391
        %v424 = vpack.c.b16 %v396, %v392
        %v425 = vpack.c.b16 %v397, %v393
        %v426 = vpack.c.b16 %v398, %v394
        %v427 = vpack.c.b16 %v403, %v399
        %v428 = vpack.c.b16 %v404, %v400
        %v429 = vpack.c.b16 %v405, %v401
        %v430 = vpack.c.b16 %v406, %v402
        %v431 = vpack.c.b16 %v411, %v407
        %v432 = vpack.c.b16 %v412, %v408
        %v433 = vpack.c.b16 %v413, %v409
        %v434 = vpack.c.b16 %v414, %v410
        %v435 = vpack.c.b16 %v419, %v415
        %v436 = vpack.c.b16 %v420, %v416
        %v437 = vpack.c.b16 %v421, %v417
        %v438 = vpack.c.b16 %v422, %v418
        %v519 = vunpack.c.l.b16 %v311
        %v520 = vunpack.c.l.b16 %v312
        %v521 = vunpack.c.l.b16 %v313
        %v522 = vunpack.c.l.b16 %v314
        %v523 = vunpack.c.l.b16 %v315
        %v524 = vunpack.c.l.b16 %v316
        %v525 = vunpack.c.l.b16 %v317
        %v526 = vunpack.c.l.b16 %v318
        %v527 = vunpack.c.l.b16 %v319
        %v528 = vunpack.c.l.b16 %v320
        %v529 = vunpack.c.l.b16 %v321
        %v530 = vunpack.c.l.b16 %v322
        %v531 = vunpack.c.l.b16 %v323
        %v532 = vunpack.c.l.b16 %v324
        %v533 = vunpack.c.l.b16 %v325
        %v534 = vunpack.c.l.b16 %v326
        %v535 = vunpack.c.l.b16 %v327
        %v536 = vunpack.c.l.b16 %v328
        %v537 = vunpack.c.l.b16 %v329
        %v538 = vunpack.c.l.b16 %v330
        %v539 = vunpack.c.l.b16 %v331
        %v540 = vunpack.c.l.b16 %v332
        %v541 = vunpack.c.l.b16 %v333
        %v542 = vunpack.c.l.b16 %v334
        %v543 = vunpack.c.l.b16 %v335
        %v544 = vunpack.c.l.b16 %v336
        %v545 = vunpack.c.l.b16 %v337
        %v546 = vunpack.c.l.b16 %v338
        %v547 = vunpack.c.l.b16 %v339
        %v548 = vunpack.c.l.b16 %v340
        %v549 = vunpack.c.l.b16 %v341
        %v550 = vunpack.c.l.b16 %v342
        %v551 = vunpack.c.l.b16 %v343
        %v552 = vunpack.c.l.b16 %v344
        %v553 = vunpack.c.l.b16 %v345
        %v554 = vunpack.c.l.b16 %v346
        %v555 = vunpack.c.l.b16 %v347
        %v556 = vunpack.c.l.b16 %v348
        %v557 = vunpack.c.l.b16 %v349
        %v558 = vunpack.c.l.b16 %v350
        %v559 = vunpack.c.l.b16 %v351
        %v560 = vunpack.c.l.b16 %v352
        %v561 = vunpack.c.l.b16 %v353
        %v562 = vunpack.c.l.b16 %v354
        %v563 = vunpack.c.l.b16 %v355
        %v564 = vunpack.c.l.b16 %v356
        %v565 = vunpack.c.l.b16 %v357
        %v566 = vunpack.c.l.b16 %v358
        %v567 = vunpack.c.l.b16 %v359
        %v568 = vunpack.c.l.b16 %v360
        %v569 = vunpack.c.l.b16 %v361
        %v570 = vunpack.c.l.b16 %v362
        %v571 = vunpack.c.l.b16 %v363
        %v572 = vunpack.c.l.b16 %v364
        %v573 = vunpack.c.l.b16 %v365
        %v574 = vunpack.c.l.b16 %v366
        %v575 = vunpack.c.l.b16 %v367
        %v576 = vunpack.c.l.b16 %v368
        %v577 = vunpack.c.l.b16 %v369
        %v578 = vunpack.c.l.b16 %v370
        %v579 = vunpack.c.l.b16 %v371
        %v580 = vunpack.c.l.b16 %v372
        %v581 = vunpack.c.l.b16 %v373
        %v582 = vunpack.c.l.b16 %v374
        %v583 = vpack.c.b16 %v520, %v519
        %v584 = vpack.c.b16 %v522, %v521
        %v585 = vpack.c.b16 %v524, %v523
        %v586 = vpack.c.b16 %v526, %v525
        %v587 = vpack.c.b16 %v528, %v527
        %v588 = vpack.c.b16 %v530, %v529
        %v589 = vpack.c.b16 %v532, %v531
        %v590 = vpack.c.b16 %v534, %v533
        %v591 = vpack.c.b16 %v536, %v535
        %v592 = vpack.c.b16 %v538, %v537
        %v593 = vpack.c.b16 %v540, %v539
        %v594 = vpack.c.b16 %v542, %v541
        %v595 = vpack.c.b16 %v544, %v543
        %v596 = vpack.c.b16 %v546, %v545
        %v597 = vpack.c.b16 %v548, %v547
        %v598 = vpack.c.b16 %v550, %v549
        %v599 = vpack.c.b16 %v552, %v551
        %v600 = vpack.c.b16 %v554, %v553
        %v601 = vpack.c.b16 %v556, %v555
        %v602 = vpack.c.b16 %v558, %v557
        %v603 = vpack.c.b16 %v560, %v559
        %v604 = vpack.c.b16 %v562, %v561
        %v605 = vpack.c.b16 %v564, %v563
        %v606 = vpack.c.b16 %v566, %v565
        %v607 = vpack.c.b16 %v568, %v567
        %v608 = vpack.c.b16 %v570, %v569
        %v609 = vpack.c.b16 %v572, %v571
        %v610 = vpack.c.b16 %v574, %v573
        %v611 = vpack.c.b16 %v576, %v575
        %v612 = vpack.c.b16 %v578, %v577
        %v613 = vpack.c.b16 %v580, %v579
        %v614 = vpack.c.b16 %v582, %v581
        %647 = vmatprep.subr.bf16.mxu0 0
        %648 = vmatpush1.bf16.msra.mxu0 %v590
        %649 = vmatprep.subr.bf16.mxu0 0
        %650 = vmatpush1.bf16.msra.mxu0 %v589
        %651 = vmatprep.subr.bf16.mxu0 0
        %652 = vmatpush1.bf16.msra.mxu0 %v588
        %653 = vmatprep.subr.bf16.mxu0 0
        %654 = vmatpush1.bf16.msra.mxu0 %v587
        %655 = vmatprep.subr.bf16.mxu0 0
        %656 = vmatpush1.bf16.msra.mxu0 %v586
        %657 = vmatprep.subr.bf16.mxu0 0
        %658 = vmatpush1.bf16.msra.mxu0 %v585
        %659 = vmatprep.subr.bf16.mxu0 0
        %660 = vmatpush1.bf16.msra.mxu0 %v584
        %661 = vmatprep.subr.bf16.mxu0 0
        %662 = vmatpush1.bf16.msra.mxu0 %v583
        %663 = vmatprep.subr.bf16.mxu0 0
        %664 = vmatpush2.bf16.msra.mxu0 %v598
        %665 = vmatprep.subr.bf16.mxu0 0
        %666 = vmatpush2.bf16.msra.mxu0 %v597
        %667 = vmatprep.subr.bf16.mxu0 0
        %668 = vmatpush2.bf16.msra.mxu0 %v596
        %669 = vmatprep.subr.bf16.mxu0 0
        %670 = vmatpush2.bf16.msra.mxu0 %v595
        %671 = vmatprep.subr.bf16.mxu0 0
        %672 = vmatpush2.bf16.msra.mxu0 %v594
        %673 = vmatprep.subr.bf16.mxu0 0
        %674 = vmatpush2.bf16.msra.mxu0 %v593
        %675 = vmatprep.subr.bf16.mxu0 0
        %676 = vmatpush2.bf16.msra.mxu0 %v592
        %677 = vmatprep.subr.bf16.mxu0 0
        %678 = vmatpush2.bf16.msra.mxu0 %v591
        %679 = vmatprep.mubr.bf16.mxu0 %v424
        %680 = vmatmul.mubr.bf16.gmra.mxu0 %v423
        %v681 = vpop.f32.mrf.mxu0
        %v682 = vadd.f32 0.0, %v681
        %v683 = vpop.f32.mrf.mxu0
        %v684 = vpop.f32.mrf.mxu0
        %v685 = vadd.f32 0.0, %v684
        %v686 = vpop.f32.mrf.mxu0
        %687 = vmatprep.mubr.bf16.mxu0 %v428
        %688 = vmatmul.mubr.bf16.gmra.mxu0 %v427
        %v689 = vpop.f32.mrf.mxu0
        %v690 = vadd.f32 0.0, %v689
        %v691 = vpop.f32.mrf.mxu0
        %v692 = vpop.f32.mrf.mxu0
        %v693 = vadd.f32 0.0, %v692
        %v694 = vpop.f32.mrf.mxu0
        %695 = vmatprep.mubr.bf16.mxu0 %v432
        %696 = vmatmul.mubr.bf16.gmra.mxu0 %v431
        %v697 = vpop.f32.mrf.mxu0
        %v698 = vadd.f32 0.0, %v697
        %v699 = vpop.f32.mrf.mxu0
        %v700 = vpop.f32.mrf.mxu0
        %v701 = vadd.f32 0.0, %v700
        %v702 = vpop.f32.mrf.mxu0
        %703 = vmatprep.mubr.bf16.mxu0 %v436
        %704 = vmatmul.mubr.bf16.gmra.mxu0 %v435
        %v705 = vpop.f32.mrf.mxu0
        %v706 = vadd.f32 0.0, %v705
        %v707 = vpop.f32.mrf.mxu0
        %v708 = vpop.f32.mrf.mxu0
        %v709 = vadd.f32 0.0, %v708
        %v710 = vpop.f32.mrf.mxu0
        %711 = vdwg.mxu0
        %712 = vmatprep.subr.bf16.mxu0 0
        %713 = vmatpush1.bf16.msra.mxu0 %v606
        %714 = vmatprep.subr.bf16.mxu0 0
        %715 = vmatpush1.bf16.msra.mxu0 %v605
        %716 = vmatprep.subr.bf16.mxu0 0
        %717 = vmatpush1.bf16.msra.mxu0 %v604
        %718 = vmatprep.subr.bf16.mxu0 0
        %719 = vmatpush1.bf16.msra.mxu0 %v603
        %720 = vmatprep.subr.bf16.mxu0 0
        %721 = vmatpush1.bf16.msra.mxu0 %v602
        %722 = vmatprep.subr.bf16.mxu0 0
        %723 = vmatpush1.bf16.msra.mxu0 %v601
        %724 = vmatprep.subr.bf16.mxu0 0
        %725 = vmatpush1.bf16.msra.mxu0 %v600
        %726 = vmatprep.subr.bf16.mxu0 0
        %727 = vmatpush1.bf16.msra.mxu0 %v599
        %728 = vmatprep.subr.bf16.mxu0 0
        %729 = vmatpush2.bf16.msra.mxu0 %v614
        %730 = vmatprep.subr.bf16.mxu0 0
        %731 = vmatpush2.bf16.msra.mxu0 %v613
        %732 = vmatprep.subr.bf16.mxu0 0
        %733 = vmatpush2.bf16.msra.mxu0 %v612
        %734 = vmatprep.subr.bf16.mxu0 0
        %735 = vmatpush2.bf16.msra.mxu0 %v611
        %736 = vmatprep.subr.bf16.mxu0 0
        %737 = vmatpush2.bf16.msra.mxu0 %v610
        %738 = vmatprep.subr.bf16.mxu0 0
        %739 = vmatpush2.bf16.msra.mxu0 %v609
        %740 = vmatprep.subr.bf16.mxu0 0
        %741 = vmatpush2.bf16.msra.mxu0 %v608
        %742 = vmatprep.subr.bf16.mxu0 0
        %743 = vmatpush2.bf16.msra.mxu0 %v607
        %744 = vmatprep.mubr.bf16.mxu0 %v426
        %745 = vmatmul.mubr.bf16.gmra.mxu0 %v425
        %v746 = vpop.f32.mrf.mxu0
        %v747 = vadd.f32 %v682, %v746
        %v748 = vpop.f32.mrf.mxu0
        %v749 = vpop.f32.mrf.mxu0
        %v750 = vadd.f32 %v685, %v749
        %v751 = vpop.f32.mrf.mxu0
        %752 = vmatprep.mubr.bf16.mxu0 %v430
        %753 = vmatmul.mubr.bf16.gmra.mxu0 %v429
        %v754 = vpop.f32.mrf.mxu0
        %v755 = vadd.f32 %v690, %v754
        %v756 = vpop.f32.mrf.mxu0
        %v757 = vpop.f32.mrf.mxu0
        %v758 = vadd.f32 %v693, %v757
        %v759 = vpop.f32.mrf.mxu0
        %760 = vmatprep.mubr.bf16.mxu0 %v434
        %761 = vmatmul.mubr.bf16.gmra.mxu0 %v433
        %v762 = vpop.f32.mrf.mxu0
        %v763 = vadd.f32 %v698, %v762
        %v764 = vpop.f32.mrf.mxu0
        %v765 = vpop.f32.mrf.mxu0
        %v766 = vadd.f32 %v701, %v765
        %v767 = vpop.f32.mrf.mxu0
        %768 = vmatprep.mubr.bf16.mxu0 %v438
        %769 = vmatmul.mubr.bf16.gmra.mxu0 %v437
        %v770 = vpop.f32.mrf.mxu0
        %v771 = vadd.f32 %v706, %v770
        %v772 = vpop.f32.mrf.mxu0
        %v773 = vpop.f32.mrf.mxu0
        %v774 = vadd.f32 %v709, %v773
        %v775 = vpop.f32.mrf.mxu0
        %776 = vdwg.mxu0
        %v777 = vadd.f32 %v287, %v747
        %v778 = vadd.f32 %v288, %v750
        %v779 = vadd.f32 %v289, %v755
        %v780 = vadd.f32 %v290, %v758
        %v781 = vadd.f32 %v291, %v763
        %v782 = vadd.f32 %v292, %v766
        %v783 = vadd.f32 %v293, %v771
        %v784 = vadd.f32 %v294, %v774
        %785 = vst [vmem:[%s268] sm:$0xff] %v777
        %786 = vst [vmem:[%s268 + $0x8] sm:$0xff] %v778
        %787 = vst [vmem:[%s268 + $0x10] sm:$0xff] %v779
        %788 = vst [vmem:[%s268 + $0x18] sm:$0xff] %v780
        %789 = vst [vmem:[%s268 + $0x20] sm:$0xff] %v781
        %790 = vst [vmem:[%s268 + $0x28] sm:$0xff] %v782
        %791 = vst [vmem:[%s268 + $0x30] sm:$0xff] %v783
        %792 = vst [vmem:[%s268 + $0x38] sm:$0xff] %v784
        %p793 = scmp.eq.s32.totalorder %s20, 42
        // Predicated region
        $region56: #{forward.16} parent=46 // pred_check
          %p794 = pneg %p793
        $region57: #{forward.16} parent=46 // pred_check_branch
          %796 = sbr.rel (%p794) target = $region59
        $region58: #{forward.16} parent=46 // pred_region
          %v797 = vld [vmem:[%s268] sm:$0xff]
          %v798 = vld [vmem:[%s268 + $0x8] sm:$0xff]
          %v799 = vld [vmem:[%s268 + $0x10] sm:$0xff]
          %v800 = vld [vmem:[%s268 + $0x18] sm:$0xff]
          %v801 = vld [vmem:[%s268 + $0x20] sm:$0xff]
          %v802 = vld [vmem:[%s268 + $0x28] sm:$0xff]
          %v803 = vld [vmem:[%s268 + $0x30] sm:$0xff]
          %v804 = vld [vmem:[%s268 + $0x38] sm:$0xff]
          %v805 = vadd.f32 %v797, %v798
          %v806 = vadd.f32 %v805, %v799
          %v807 = vadd.f32 %v806, %v800
          %v808 = vadd.f32 %v807, %v801
          %v809 = vadd.f32 %v808, %v802
          %v810 = vadd.f32 %v809, %v803
          %v811 = vadd.f32 %v810, %v804
          %v812 = vrot.slane %v811, 4
          %v813 = vadd.f32 %v811, %v812
          %v814 = vrot.slane %v813, 2
          %v815 = vadd.f32 %v813, %v814
          %v816 = vrot.slane %v815, 1
          %v817 = vadd.f32 %v815, %v816
          %818 = vst [vmem:[%s273] sm:$0x1] %v817
          %v819 = vmul.f32 %v797, %v797
          %v820 = vmul.f32 %v798, %v798
          %v821 = vmul.f32 %v799, %v799
          %v822 = vmul.f32 %v800, %v800
          %v823 = vmul.f32 %v801, %v801
          %v824 = vmul.f32 %v802, %v802
          %v825 = vmul.f32 %v803, %v803
          %v826 = vmul.f32 %v804, %v804
          %v827 = vadd.f32 %v819, %v820
          %v828 = vadd.f32 %v827, %v821
          %v829 = vadd.f32 %v828, %v822
          %v830 = vadd.f32 %v829, %v823
          %v831 = vadd.f32 %v830, %v824
          %v832 = vadd.f32 %v831, %v825
          %v833 = vadd.f32 %v832, %v826
          %v834 = vrot.slane %v833, 4
          %v835 = vadd.f32 %v833, %v834
          %v836 = vrot.slane %v835, 2
          %v837 = vadd.f32 %v835, %v836
          %v838 = vrot.slane %v837, 1
          %v839 = vadd.f32 %v837, %v838
          %840 = vst [vmem:[%s273 + $0x1] sm:$0x1] %v839
          %841 = vst [vmem:[%s273 + $0x2] sm:$0x3f] 0.0
        $region59: #{forward.16} parent=46 // pred_fallthru
          _
        %s842 = smul.u32 8, %s19
        %p843 = scmp.lt.s32.totalorder %s842, 7
        %s844 = scalar_select %p843, %s842, 7
        %s845 = smul.addr %s844, 8
        %s846 = scalar_lea.vmem %s2, %s845
        %p847 = scmp.lt.s32.totalorder %s19, 0
        %s848 = scalar_select %p847, %s19, 0
        %s849 = smul.addr %s848, 8
        %s850 = scalar_lea.vmem %s3, %s849
        // Predicated region
        $region60: #{forward.16} parent=46 // pred_check
          %p851 = pneg %p99
        $region61: #{forward.16} parent=46 // pred_check_branch
          %853 = sbr.rel (%p851) target = $region63
        $region62: #{forward.16} parent=46 // pred_region
          %s854 = smul.u32 8, %s19
        $region63: #{forward.16} parent=46 // pred_fallthru
          _
        // Predicated region
        $region64: #{forward.16} parent=46 // pred_check
          %p855 = pneg %p125
        $region65: #{forward.16} parent=46 // pred_check_branch
          %857 = sbr.rel (%p855) target = $region67
        $region66: #{forward.16} parent=46 // pred_region
          _
        $region67: #{forward.16} parent=46 // pred_fallthru
          _
        // Predicated region
        $region68: #{forward.16} parent=46 // pred_check
          %p858 = pneg %p99
        $region69: #{forward.16} parent=46 // pred_check_branch
          %860 = sbr.rel (%p858) target = $region71
        $region70: #{forward.16} parent=46 // pred_region
          %s861 = smul.u32 8, %s19
          %p862 = scmp.lt.s32.totalorder %s861, 7
          %s863 = scalar_select %p862, %s861, 7
          %s864 = smul.addr %s863, 8
          %s865 = scalar_lea.vmem %s2, %s864
        $region71: #{forward.16} parent=46 // pred_fallthru
          _
        // Predicated region
        $region72: #{forward.16} parent=46 // pred_check
          %p866 = pneg %p125
        $region73: #{forward.16} parent=46 // pred_check_branch
          %868 = sbr.rel (%p866) target = $region75
        $region74: #{forward.16} parent=46 // pred_region
          %p869 = scmp.lt.s32.totalorder %s19, 0
          %s870 = scalar_select %p869, %s19, 0
          %s871 = smul.addr %s870, 8
          %s872 = scalar_lea.vmem %s3, %s871
        $region75: #{forward.16} parent=46 // pred_fallthru
          _
      $region47: #{forward.16} parent=5 // pred_fallthru
        _
      %p873 = scmp.le.s32.totalorder 2, %s10
      // Predicated region
      $region76: #{forward.16} parent=5 // pred_check
        %p874 = pneg %p873
      $region77: #{forward.16} parent=5 // pred_check_branch
        %876 = sbr.rel (%p874) target = $region79
      $region78: #{forward.16} parent=5 // pred_region
        %s877 = ssub.s32 %s10, 2
      $region79: #{forward.16} parent=5 // pred_fallthru
        _
    $region6: #{forward.16} parent=1 // loop_footer
      %s14 = sadd.s32 1, %s10
    $region7: #{forward.16} parent=1 // loop_footer_branch
      %9 = sbr.rel target = $region3
    $region8: #{forward.16} parent=1 // loop_exit
      _

// kernel: forward.17
$region0: #{forward.17}
  #allocation0 [shape = 'u32[]', space=smem, size = 0x4, offset = 0x4, fixed_abs, tag = 'smem constant byte address 0x4 - core index']
  #allocation1 [shape = 'u32[144,128]{1,0:T(1,128)}', space=vmem, size = 0x12000, scoped, tag = 'internal scratch']
  %s0 = inlined_call_operand.vmem [shape: f32[64,128], index: 0, kind: input, shape index: {}]
  %s1 = inlined_call_operand.vmem [shape: f32[1,128], index: 1, kind: input, shape index: {}]
  %s2 = inlined_call_operand.vmem [shape: f32[1,128], index: 2, kind: input, shape index: {}]
  %s3 = inlined_call_operand.vmem [shape: bf16[64,128], index: 3, kind: output, shape index: {}]
  %s4 = sld [smem:[#allocation0]]
  $region22: #{forward.17} parent=0
    _
  %s6 = ssub.s32 1, %s4
  %s7 = scalar_select 0, %s6, %s4
  // Predicated region
  $region2: #{forward.17} parent=0 // pred_check
    _
  $region3: #{forward.17} parent=0 // pred_check_branch
    %9 = sbr.rel (0) target = $region5
  $region4: #{forward.17} parent=0 // pred_region
    _
  $region5: #{forward.17} parent=0 // pred_fallthru
    _
  // Predicated region
  $region6: #{forward.17} parent=0 // pred_check
    _
  $region7: #{forward.17} parent=0 // pred_check_branch
    %11 = sbr.rel (0) target = $region9
  $region8: #{forward.17} parent=0 // pred_region
    _
  $region9: #{forward.17} parent=0 // pred_fallthru
    _
  // Predicated region
  $region10: #{forward.17} parent=0 // pred_check
    _
  $region11: #{forward.17} parent=0 // pred_check_branch
    %13 = sbr.rel (0) target = $region13
  $region12: #{forward.17} parent=0 // pred_region
    _
  $region13: #{forward.17} parent=0 // pred_fallthru
    _
  %v14 = vld [vmem:[%s0] sm:$0xff]
  %v15 = vld [vmem:[%s0 + $0x8] sm:$0xff]
  %v16 = vld [vmem:[%s0 + $0x10] sm:$0xff]
  %v17 = vld [vmem:[%s0 + $0x18] sm:$0xff]
  %v18 = vld [vmem:[%s0 + $0x20] sm:$0xff]
  %v19 = vld [vmem:[%s0 + $0x28] sm:$0xff]
  %v20 = vld [vmem:[%s0 + $0x30] sm:$0xff]
  %v21 = vld [vmem:[%s0 + $0x38] sm:$0xff]
  %v22 = vld [vmem:[%s1] sm:$0x1]
  %v24 = vlaneseq
  %v25 = vshrl.u32 %v24, 7
  %v26 = vsub.s32 0, %v25
  %v27 = vrot.slane %v22, %v26
  %v29 = vmul.f32 %v14, %v27
  %v30 = vmul.f32 %v15, %v27
  %v31 = vmul.f32 %v16, %v27
  %v32 = vmul.f32 %v17, %v27
  %v33 = vmul.f32 %v18, %v27
  %v34 = vmul.f32 %v19, %v27
  %v35 = vmul.f32 %v20, %v27
  %v36 = vmul.f32 %v21, %v27
  %v37 = vld [vmem:[%s2] sm:$0x1]
  %v39 = vlaneseq
  %v40 = vshrl.u32 %v39, 7
  %v41 = vsub.s32 0, %v40
  %v42 = vrot.slane %v37, %v41
  %v44 = vadd.f32 %v29, %v42
  %v45 = vadd.f32 %v30, %v42
  %v46 = vadd.f32 %v31, %v42
  %v47 = vadd.f32 %v32, %v42
  %v48 = vadd.f32 %v33, %v42
  %v49 = vadd.f32 %v34, %v42
  %v50 = vadd.f32 %v35, %v42
  %v51 = vadd.f32 %v36, %v42
  %v52 = vmax.f32 %v44, 0.0
  %v53 = vmax.f32 %v45, 0.0
  %v54 = vmax.f32 %v46, 0.0
  %v55 = vmax.f32 %v47, 0.0
  %v56 = vmax.f32 %v48, 0.0
  %v57 = vmax.f32 %v49, 0.0
  %v58 = vmax.f32 %v50, 0.0
  %v59 = vmax.f32 %v51, 0.0
  %v60 = vpack.c.bf16 %v53, %v52
  %v61 = vpack.c.bf16 %v55, %v54
  %v62 = vpack.c.bf16 %v57, %v56
  %v63 = vpack.c.bf16 %v59, %v58
  %v68 = vunpack.c.l.b16 %v60
  %v69 = vunpack.c.h.b16 %v60
  %v70 = vunpack.c.l.b16 %v61
  %v71 = vunpack.c.h.b16 %v61
  %v72 = vunpack.c.l.b16 %v62
  %v73 = vunpack.c.h.b16 %v62
  %v74 = vunpack.c.l.b16 %v63
  %v75 = vunpack.c.h.b16 %v63
  %v76 = vpack.c.b16 %v68, %v68
  %v77 = vpack.c.b16 %v69, %v69
  %v78 = vpack.c.b16 %v70, %v70
  %v79 = vpack.c.b16 %v71, %v71
  %v80 = vpack.c.b16 %v72, %v72
  %v81 = vpack.c.b16 %v73, %v73
  %v82 = vpack.c.b16 %v74, %v74
  %v83 = vpack.c.b16 %v75, %v75
  %92 = vst [vmem:[%s3] sm:$0xf] %v76
  %93 = vst [vmem:[%s3 + $0x4] sm:$0xf] %v77
  %94 = vst [vmem:[%s3 + $0x8] sm:$0xf] %v78
  %95 = vst [vmem:[%s3 + $0xc] sm:$0xf] %v79
  %96 = vst [vmem:[%s3 + $0x10] sm:$0xf] %v80
  %97 = vst [vmem:[%s3 + $0x14] sm:$0xf] %v81
  %98 = vst [vmem:[%s3 + $0x18] sm:$0xf] %v82
  %99 = vst [vmem:[%s3 + $0x1c] sm:$0xf] %v83
  // Predicated region
  $region14: #{forward.17} parent=0 // pred_check
    _
  $region15: #{forward.17} parent=0 // pred_check_branch
    %101 = sbr.rel (0) target = $region17
  $region16: #{forward.17} parent=0 // pred_region
    _
  $region17: #{forward.17} parent=0 // pred_fallthru
    _
  // Predicated region
  $region18: #{forward.17} parent=0 // pred_check
    _
  $region19: #{forward.17} parent=0 // pred_check_branch
    %103 = sbr.rel (0) target = $region21
  $region20: #{forward.17} parent=0 // pred_region
    _
  $region21: #{forward.17} parent=0 // pred_fallthru
    _

// kernel: forward.19
$region0: #{forward.19}
  #allocation0 [shape = 'u32[]', space=smem, size = 0x4, offset = 0x4, fixed_abs, tag = 'smem constant byte address 0x4 - core index']
  #allocation1 [shape = 'u32[144,128]{1,0:T(1,128)}', space=vmem, size = 0x12000, scoped, tag = 'internal scratch']
  %s0 = inlined_call_operand.vmem [shape: f32[64,128], index: 0, kind: input, shape index: {}]
  %s1 = inlined_call_operand.vmem [shape: f32[1,128], index: 1, kind: input, shape index: {}]
  %s2 = inlined_call_operand.vmem [shape: f32[1,128], index: 2, kind: input, shape index: {}]
  %s3 = inlined_call_operand.vmem [shape: bf16[64,128], index: 3, kind: output, shape index: {}]
  %s4 = sld [smem:[#allocation0]]
  $region22: #{forward.19} parent=0
    _
  %s6 = ssub.s32 1, %s4
  %s7 = scalar_select 0, %s6, %s4
  // Predicated region
  $region2: #{forward.19} parent=0 // pred_check
    _
  $region3: #{forward.19} parent=0 // pred_check_branch
    %9 = sbr.rel (0) target = $region5
  $region4: #{forward.19} parent=0 // pred_region
    _
  $region5: #{forward.19} parent=0 // pred_fallthru
    _
  // Predicated region
  $region6: #{forward.19} parent=0 // pred_check
    _
  $region7: #{forward.19} parent=0 // pred_check_branch
    %11 = sbr.rel (0) target = $region9
  $region8: #{forward.19} parent=0 // pred_region
    _
  $region9: #{forward.19} parent=0 // pred_fallthru
    _
  // Predicated region
  $region10: #{forward.19} parent=0 // pred_check
    _
  $region11: #{forward.19} parent=0 // pred_check_branch
    %13 = sbr.rel (0) target = $region13
  $region12: #{forward.19} parent=0 // pred_region
    _
  $region13: #{forward.19} parent=0 // pred_fallthru
    _
  %v14 = vld [vmem:[%s0] sm:$0xff]
  %v15 = vld [vmem:[%s0 + $0x8] sm:$0xff]
  %v16 = vld [vmem:[%s0 + $0x10] sm:$0xff]
  %v17 = vld [vmem:[%s0 + $0x18] sm:$0xff]
  %v18 = vld [vmem:[%s0 + $0x20] sm:$0xff]
  %v19 = vld [vmem:[%s0 + $0x28] sm:$0xff]
  %v20 = vld [vmem:[%s0 + $0x30] sm:$0xff]
  %v21 = vld [vmem:[%s0 + $0x38] sm:$0xff]
  %v22 = vld [vmem:[%s1] sm:$0x1]
  %v24 = vlaneseq
  %v25 = vshrl.u32 %v24, 7
  %v26 = vsub.s32 0, %v25
  %v27 = vrot.slane %v22, %v26
  %v29 = vmul.f32 %v14, %v27
  %v30 = vmul.f32 %v15, %v27
  %v31 = vmul.f32 %v16, %v27
  %v32 = vmul.f32 %v17, %v27
  %v33 = vmul.f32 %v18, %v27
  %v34 = vmul.f32 %v19, %v27
  %v35 = vmul.f32 %v20, %v27
  %v36 = vmul.f32 %v21, %v27
  %v37 = vld [vmem:[%s2] sm:$0x1]
  %v39 = vlaneseq
  %v40 = vshrl.u32 %v39, 7
  %v41 = vsub.s32 0, %v40
  %v42 = vrot.slane %v37, %v41
  %v44 = vadd.f32 %v29, %v42
  %v45 = vadd.f32 %v30, %v42
  %v46 = vadd.f32 %v31, %v42
  %v47 = vadd.f32 %v32, %v42
  %v48 = vadd.f32 %v33, %v42
  %v49 = vadd.f32 %v34, %v42
  %v50 = vadd.f32 %v35, %v42
  %v51 = vadd.f32 %v36, %v42
  %v52 = vpack.c.bf16 %v45, %v44
  %v53 = vpack.c.bf16 %v47, %v46
  %v54 = vpack.c.bf16 %v49, %v48
  %v55 = vpack.c.bf16 %v51, %v50
  %v60 = vunpack.c.l.b16 %v52
  %v61 = vunpack.c.h.b16 %v52
  %v62 = vunpack.c.l.b16 %v53
  %v63 = vunpack.c.h.b16 %v53
  %v64 = vunpack.c.l.b16 %v54
  %v65 = vunpack.c.h.b16 %v54
  %v66 = vunpack.c.l.b16 %v55
  %v67 = vunpack.c.h.b16 %v55
  %v68 = vpack.c.b16 %v60, %v60
  %v69 = vpack.c.b16 %v61, %v61
  %v70 = vpack.c.b16 %v62, %v62
  %v71 = vpack.c.b16 %v63, %v63
  %v72 = vpack.c.b16 %v64, %v64
  %v73 = vpack.c.b16 %v65, %v65
  %v74 = vpack.c.b16 %v66, %v66
  %v75 = vpack.c.b16 %v67, %v67
  %84 = vst [vmem:[%s3] sm:$0xf] %v68
  %85 = vst [vmem:[%s3 + $0x4] sm:$0xf] %v69
  %86 = vst [vmem:[%s3 + $0x8] sm:$0xf] %v70
  %87 = vst [vmem:[%s3 + $0xc] sm:$0xf] %v71
  %88 = vst [vmem:[%s3 + $0x10] sm:$0xf] %v72
  %89 = vst [vmem:[%s3 + $0x14] sm:$0xf] %v73
  %90 = vst [vmem:[%s3 + $0x18] sm:$0xf] %v74
  %91 = vst [vmem:[%s3 + $0x1c] sm:$0xf] %v75
  // Predicated region
  $region14: #{forward.19} parent=0 // pred_check
    _
  $region15: #{forward.19} parent=0 // pred_check_branch
    %93 = sbr.rel (0) target = $region17
  $region16: #{forward.19} parent=0 // pred_region
    _
  $region17: #{forward.19} parent=0 // pred_fallthru
    _
  // Predicated region
  $region18: #{forward.19} parent=0 // pred_check
    _
  $region19: #{forward.19} parent=0 // pred_check_branch
    %95 = sbr.rel (0) target = $region21
  $region20: #{forward.19} parent=0 // pred_region
    _
  $region21: #{forward.19} parent=0 // pred_fallthru
    _

// kernel: forward.18
$region0: #{forward.18}
  #allocation0 [shape = 'u32[]', space=smem, size = 0x4, offset = 0x4, fixed_abs, tag = 'smem constant byte address 0x4 - core index']
  #allocation1 [shape = 'u32[144,128]{1,0:T(1,128)}', space=vmem, size = 0x12000, scoped, tag = 'internal scratch']
  %s0 = inlined_call_operand.vmem [shape: bf16[64,44032], index: 0, kind: input, shape index: {}]
  %s1 = inlined_call_operand.vmem [shape: bf16[44032,128], index: 1, kind: input, shape index: {}]
  %s2 = inlined_call_operand.vmem [shape: f32[64,128], index: 2, kind: output, shape index: {0}]
  %s3 = inlined_call_operand.vmem [shape: f32[8,128], index: 3, kind: output, shape index: {1}]
  %4 = xla_tuple %s2, %s3
  %s5 = sld [smem:[#allocation0]]
  $region80: #{forward.18} parent=0
    _
  %s7 = ssub.s32 1, %s5
  %s8 = scalar_select 0, %s7, %s5
  $region1: #{forward.18} parent=0
    #allocation2 [shape = 'u8[131072]{0}', space=vmem, size = 0x20000, scoped, tag = 'input window, operand 0']
    loop: start=0, step=1, limit=88
    $region2: #{forward.18} parent=1 // loop_pre_header
      _
    $region3: #{forward.18} parent=1 // loop_header
      %s10 = sphi 0, %s14
      %p11 = scmp.ge.s32.totalorder %s10, 88
      %s17 = sphi 0, %s29
      %s18 = sphi 0, %s25
      %s19 = sphi 0, %s17
      %s20 = sphi 0, %s18
      %s21 = sphi 0, %s19
      %s22 = sphi 0, %s20
      %s34 = sphi 0, %s36
      %s37 = sphi 0, %s34
      %s38 = sphi 0, %s37
      %s54 = sphi 0, %s38
      %s60 = sphi 0, %s62
      %s63 = sphi 0, %s60
      %s64 = sphi 0, %s63
      %s80 = sphi 0, %s64
      %s86 = sphi 0, %s88
      %s89 = sphi 0, %s86
      %s90 = sphi 0, %s89
      %s106 = sphi 0, %s90
      %s112 = sphi 0, %s114
      %s115 = sphi 0, %s112
      %s116 = sphi 0, %s115
      %s132 = sphi 0, %s116
    $region4: #{forward.18} parent=1 // loop_header_branch
      %13 = sbr.rel (%p11) target = $region8
    $region5: #{forward.18} parent=1 // loop_body
      %s15 = ssub.s32 %s10, 1
      %s16 = ssub.s32 %s10, 2
      %s23 = sadd.s32 1, %s18
      %p24 = scmp.ge.s32.totalorder %s23, 86
      %s25 = scalar_select %p24, 0, %s23
      %s26 = sadd.s32 1, %s17
      %s27 = scalar_select %p24, %s26, %s17
      %p28 = scmp.ge.s32.totalorder %s27, 1
      %s29 = scalar_select %p28, 0, %s27
      %s30 = ssub.s32 %s17, %s29
      %s31 = ssub.s32 %s18, %s25
      %s32 = sor.u32 %s30, %s31
      %p33 = scmp.eq.s32.totalorder %s32, 0
      %s35 = sadd.s32 %s34, 1
      %s36 = scalar_select %p33, %s34, %s35
      %p39 = pneg %p33
      %p40 = scmp.eq.s32.totalorder %s10, 85
      %p41 = por %p39, %p40
      %p42 = scmp.ne.s32.totalorder %s34, %s37
      %p43 = scmp.eq.s32.totalorder %s10, 0
      %p44 = por %p42, %p43
      %p45 = scmp.ne.s32.totalorder %s34, %s37
      %p46 = scmp.eq.s32.totalorder %s15, 85
      %p47 = por %p45, %p46
      %p48 = scmp.ne.s32.totalorder %s37, %s38
      %p49 = scmp.eq.s32.totalorder %s15, 0
      %p50 = por %p48, %p49
      %p51 = scmp.ne.s32.totalorder %s37, %s38
      %p52 = scmp.eq.s32.totalorder %s16, 85
      %p53 = por %p51, %p52
      %p55 = scmp.ne.s32.totalorder %s38, %s54
      %p56 = scmp.eq.s32.totalorder %s16, 0
      %p57 = por %p55, %p56
      %s58 = ssub.s32 %s18, %s25
      %p59 = scmp.eq.s32.totalorder %s58, 0
      %s61 = sadd.s32 %s60, 1
      %s62 = scalar_select %p59, %s60, %s61
      %p65 = pneg %p59
      %p66 = scmp.eq.s32.totalorder %s10, 85
      %p67 = por %p65, %p66
      %p68 = scmp.ne.s32.totalorder %s60, %s63
      %p69 = scmp.eq.s32.totalorder %s10, 0
      %p70 = por %p68, %p69
      %p71 = scmp.ne.s32.totalorder %s60, %s63
      %p72 = scmp.eq.s32.totalorder %s15, 85
      %p73 = por %p71, %p72
      %p74 = scmp.ne.s32.totalorder %s63, %s64
      %p75 = scmp.eq.s32.totalorder %s15, 0
      %p76 = por %p74, %p75
      %p77 = scmp.ne.s32.totalorder %s63, %s64
      %p78 = scmp.eq.s32.totalorder %s16, 85
      %p79 = por %p77, %p78
      %p81 = scmp.ne.s32.totalorder %s64, %s80
      %p82 = scmp.eq.s32.totalorder %s16, 0
      %p83 = por %p81, %p82
      %s84 = ssub.s32 %s17, %s29
      %p85 = scmp.eq.s32.totalorder %s84, 0
      %s87 = sadd.s32 %s86, 1
      %s88 = scalar_select %p85, %s86, %s87
      %p91 = pneg %p85
      %p92 = scmp.eq.s32.totalorder %s10, 85
      %p93 = por %p91, %p92
      %p94 = scmp.ne.s32.totalorder %s86, %s89
      %p95 = scmp.eq.s32.totalorder %s10, 0
      %p96 = por %p94, %p95
      %p97 = scmp.ne.s32.totalorder %s86, %s89
      %p98 = scmp.eq.s32.totalorder %s15, 85
      %p99 = por %p97, %p98
      %p100 = scmp.ne.s32.totalorder %s89, %s90
      %p101 = scmp.eq.s32.totalorder %s15, 0
      %p102 = por %p100, %p101
      %p103 = scmp.ne.s32.totalorder %s89, %s90
      %p104 = scmp.eq.s32.totalorder %s16, 85
      %p105 = por %p103, %p104
      %p107 = scmp.ne.s32.totalorder %s90, %s106
      %p108 = scmp.eq.s32.totalorder %s16, 0
      %p109 = por %p107, %p108
      %s110 = ssub.s32 %s17, %s29
      %p111 = scmp.eq.s32.totalorder %s110, 0
      %s113 = sadd.s32 %s112, 1
      %s114 = scalar_select %p111, %s112, %s113
      %p117 = pneg %p111
      %p118 = scmp.eq.s32.totalorder %s10, 85
      %p119 = por %p117, %p118
      %p120 = scmp.ne.s32.totalorder %s112, %s115
      %p121 = scmp.eq.s32.totalorder %s10, 0
      %p122 = por %p120, %p121
      %p123 = scmp.ne.s32.totalorder %s112, %s115
      %p124 = scmp.eq.s32.totalorder %s15, 85
      %p125 = por %p123, %p124
      %p126 = scmp.ne.s32.totalorder %s115, %s116
      %p127 = scmp.eq.s32.totalorder %s15, 0
      %p128 = por %p126, %p127
      %p129 = scmp.ne.s32.totalorder %s115, %s116
      %p130 = scmp.eq.s32.totalorder %s16, 85
      %p131 = por %p129, %p130
      %p133 = scmp.ne.s32.totalorder %s116, %s132
      %p134 = scmp.eq.s32.totalorder %s16, 0
      %p135 = por %p133, %p134
      %p136 = scmp.le.s32.totalorder 1, %s10
      %p137 = scmp.lt.s32.totalorder %s10, 87
      %p138 = pnand %p136, %p137
      %p139 = pneg %p138
      // Predicated region
      $region9: #{forward.18} parent=5 // pred_check
        _
      $region10: #{forward.18} parent=5 // pred_check_branch
        %141 = sbr.rel (%p138) target = $region12
      $region11: #{forward.18} parent=5 // pred_region
        %s142 = ssub.s32 %s10, 1
      $region12: #{forward.18} parent=5 // pred_fallthru
        _
      %p143 = scmp.lt.s32.totalorder %s10, 86
      // Predicated region
      $region13: #{forward.18} parent=5 // pred_check
        %p144 = pneg %p143
      $region14: #{forward.18} parent=5 // pred_check_branch
        %146 = sbr.rel (%p144) target = $region16
      $region15: #{forward.18} parent=5 // pred_region
        // Predicated region
        $region17: #{forward.18} parent=15 // pred_check
          %p147 = pneg %p44
        $region18: #{forward.18} parent=15 // pred_check_branch
          %149 = sbr.rel (%p147) target = $region20
        $region19: #{forward.18} parent=15 // pred_region
          %s150 = sand.u32 %s34, 1
          %s151 = sand.u32 %s34, 1
          %s152 = smul.addr %s151, 128
          %s153 = scalar_lea.vmem [#allocation2], %s152
          %s154 = smul.u32 8, %s17
          %s155 = smul.u32 4, %s18
          %s156 = smul.addr %s154, 344
          %s157 = sadd.s32 %s155, %s156
          %s158 = smul.addr %s157, 4
          %s159 = scalar_lea.vmem %s0, %s158
          // Predicated region
          $region21: #{forward.18} parent=19 // pred_check
            _
          $region22: #{forward.18} parent=19 // pred_check_branch
            %161 = sbr.rel (0) target = $region24
          $region23: #{forward.18} parent=19 // pred_region
            // Predicated region
            $region25: #{forward.18} parent=23 // pred_check
              _
            $region26: #{forward.18} parent=23 // pred_check_branch
              %163 = sbr.rel (0) target = $region28
            $region27: #{forward.18} parent=23 // pred_region
              loop: start=0, step=1, limit=1
              $region29: #{forward.18} parent=27 // loop_pre_header
                _
              $region30: #{forward.18} parent=27 // loop_header
                %s165 = sphi 0, %s169
                %p166 = scmp.ge.s32.totalorder %s165, 1
                %s170 = sphi %s159, %s159
                %s171 = sphi %s153, %s153
              $region31: #{forward.18} parent=27 // loop_header_branch
                %168 = sbr.rel (%p166) target = $region35
              $region32: #{forward.18} parent=27 // loop_body
                %v172 = vld [vmem:[%s170] sm:$0xff]
                %173 = vst [vmem:[%s171] sm:$0xff] %v172
                %v174 = vld [vmem:[%s170 + $0x8] sm:$0xff]
                %175 = vst [vmem:[%s171 + $0x8] sm:$0xff] %v174
                %v176 = vld [vmem:[%s170 + $0x560] sm:$0xff]
                %177 = vst [vmem:[%s171 + $0x10] sm:$0xff] %v176
                %v178 = vld [vmem:[%s170 + $0x568] sm:$0xff]
                %179 = vst [vmem:[%s171 + $0x18] sm:$0xff] %v178
                %v180 = vld [vmem:[%s170 + $0xac0] sm:$0xff]
                %181 = vst [vmem:[%s171 + $0x20] sm:$0xff] %v180
                %v182 = vld [vmem:[%s170 + $0xac8] sm:$0xff]
                %183 = vst [vmem:[%s171 + $0x28] sm:$0xff] %v182
                %v184 = vld [vmem:[%s170 + $0x1020] sm:$0xff]
                %185 = vst [vmem:[%s171 + $0x30] sm:$0xff] %v184
                %v186 = vld [vmem:[%s170 + $0x1028] sm:$0xff]
                %187 = vst [vmem:[%s171 + $0x38] sm:$0xff] %v186
                %v188 = vld [vmem:[%s170 + $0x1580] sm:$0xff]
                %189 = vst [vmem:[%s171 + $0x40] sm:$0xff] %v188
                %v190 = vld [vmem:[%s170 + $0x1588] sm:$0xff]
                %191 = vst [vmem:[%s171 + $0x48] sm:$0xff] %v190
                %v192 = vld [vmem:[%s170 + $0x1ae0] sm:$0xff]
                %193 = vst [vmem:[%s171 + $0x50] sm:$0xff] %v192
                %v194 = vld [vmem:[%s170 + $0x1ae8] sm:$0xff]
                %195 = vst [vmem:[%s171 + $0x58] sm:$0xff] %v194
                %v196 = vld [vmem:[%s170 + $0x2040] sm:$0xff]
                %197 = vst [vmem:[%s171 + $0x60] sm:$0xff] %v196
                %v198 = vld [vmem:[%s170 + $0x2048] sm:$0xff]
                %199 = vst [vmem:[%s171 + $0x68] sm:$0xff] %v198
                %v200 = vld [vmem:[%s170 + $0x25a0] sm:$0xff]
                %201 = vst [vmem:[%s171 + $0x70] sm:$0xff] %v200
                %v202 = vld [vmem:[%s170 + $0x25a8] sm:$0xff]
                %203 = vst [vmem:[%s171 + $0x78] sm:$0xff] %v202
              $region33: #{forward.18} parent=27 // loop_footer
                %s169 = sadd.s32 1, %s165
              $region34: #{forward.18} parent=27 // loop_footer_branch
                %164 = sbr.rel target = $region30
              $region35: #{forward.18} parent=27 // loop_exit
                _
            $region28: #{forward.18} parent=23 // pred_fallthru
              _
            // Predicated region
            $region36: #{forward.18} parent=23 // pred_check
              _
            $region37: #{forward.18} parent=23 // pred_check_branch
              %205 = sbr.rel target = $region39
            $region38: #{forward.18} parent=23 // pred_region
              _
            $region39: #{forward.18} parent=23 // pred_fallthru
              _
          $region24: #{forward.18} parent=19 // pred_fallthru
            _
          %206 = vnop
        $region20: #{forward.18} parent=15 // pred_fallthru
          _
        // Predicated region
        $region40: #{forward.18} parent=15 // pred_check
          %p207 = pneg %p70
        $region41: #{forward.18} parent=15 // pred_check_branch
          %209 = sbr.rel (%p207) target = $region43
        $region42: #{forward.18} parent=15 // pred_region
          %s210 = smul.u32 64, %s18
          %p211 = scmp.lt.s32.totalorder %s210, 5503
          %s212 = scalar_select %p211, %s210, 5503
          %s213 = smul.addr %s212, 4
          %s214 = scalar_lea.vmem %s1, %s213
          %s215 = smul.u32 64, %s18
        $region43: #{forward.18} parent=15 // pred_fallthru
          _
      $region16: #{forward.18} parent=5 // pred_fallthru
        _
      %p216 = scmp.le.s32.totalorder 1, %s10
      %p217 = scmp.lt.s32.totalorder %s10, 87
      %p218 = pnand %p216, %p217
      %p219 = pneg %p218
      // Predicated region
      $region44: #{forward.18} parent=5 // pred_check
        _
      $region45: #{forward.18} parent=5 // pred_check_branch
        %221 = sbr.rel (%p218) target = $region47
      $region46: #{forward.18} parent=5 // pred_region
        %s222 = ssub.s32 %s10, 1
        %s223 = sand.u32 %s37, 1
        %s224 = sand.u32 %s37, 1
        %s225 = smul.addr %s224, 128
        %s226 = scalar_lea.vmem [#allocation2], %s225
        // Predicated region
        $region48: #{forward.18} parent=46 // pred_check
          %p227 = pneg %p50
        $region49: #{forward.18} parent=46 // pred_check_branch
          %229 = sbr.rel (%p227) target = $region51
        $region50: #{forward.18} parent=46 // pred_region
          _
        $region51: #{forward.18} parent=46 // pred_fallthru
          _
        %s230 = sand.u32 %s37, 1
        %s231 = sand.u32 %s37, 1
        %s232 = smul.addr %s231, 128
        %s233 = scalar_lea.vmem [#allocation2], %s232
        %p234 = pneg %p50
        %p235 = pneg %p47
        %s236 = smul.u32 64, %s20
        %p237 = scmp.lt.s32.totalorder %s236, 5503
        %s238 = scalar_select %p237, %s236, 5503
        %s239 = smul.addr %s238, 4
        %s240 = scalar_lea.vmem %s1, %s239
        %p241 = pneg %p76
        %p242 = pneg %p73
        %p243 = pneg %p102
        %p244 = pneg %p99
        %s245 = smul.u32 8, %s19
        %p246 = scmp.lt.s32.totalorder %s245, 7
        %s247 = scalar_select %p246, %s245, 7
        %s248 = smul.addr %s247, 8
        %s249 = scalar_lea.vmem %s2, %s248
        %p250 = pneg %p128
        %p251 = pneg %p125
        %p252 = scmp.lt.s32.totalorder %s19, 0
        %s253 = scalar_select %p252, %s19, 0
        %s254 = smul.addr %s253, 8
        %s255 = scalar_lea.vmem %s3, %s254
        %s256 = smul.u32 8, %s19
        %s257 = smul.u32 4, %s20
        %s258 = smul.u32 64, %s20
        %p259 = scmp.lt.s32.totalorder %s258, 5503
        %s260 = scalar_select %p259, %s258, 5503
        %s261 = smul.addr %s260, 4
        %s262 = scalar_lea.vmem %s1, %s261
        %s263 = smul.u32 64, %s20
        %s264 = smul.u32 8, %s19
        %p265 = scmp.lt.s32.totalorder %s264, 7
        %s266 = scalar_select %p265, %s264, 7
        %s267 = smul.addr %s266, 8
        %s268 = scalar_lea.vmem %s2, %s267
        %s269 = smul.u32 8, %s19
        %p270 = scmp.lt.s32.totalorder %s19, 0
        %s271 = scalar_select %p270, %s19, 0
        %s272 = smul.addr %s271, 8
        %s273 = scalar_lea.vmem %s3, %s272
        %p275 = scmp.eq.s32.totalorder %s20, 0
        // Predicated region
        $region52: #{forward.18} parent=46 // pred_check
          %p276 = pneg %p275
        $region53: #{forward.18} parent=46 // pred_check_branch
          %278 = sbr.rel (%p276) target = $region55
        $region54: #{forward.18} parent=46 // pred_region
          %279 = vst [vmem:[%s268] sm:$0xff] 0.0
          %280 = vst [vmem:[%s268 + $0x8] sm:$0xff] 0.0
          %281 = vst [vmem:[%s268 + $0x10] sm:$0xff] 0.0
          %282 = vst [vmem:[%s268 + $0x18] sm:$0xff] 0.0
          %283 = vst [vmem:[%s268 + $0x20] sm:$0xff] 0.0
          %284 = vst [vmem:[%s268 + $0x28] sm:$0xff] 0.0
          %285 = vst [vmem:[%s268 + $0x30] sm:$0xff] 0.0
          %286 = vst [vmem:[%s268 + $0x38] sm:$0xff] 0.0
        $region55: #{forward.18} parent=46 // pred_fallthru
          _
        %v287 = vld [vmem:[%s268] sm:$0xff]
        %v288 = vld [vmem:[%s268 + $0x8] sm:$0xff]
        %v289 = vld [vmem:[%s268 + $0x10] sm:$0xff]
        %v290 = vld [vmem:[%s268 + $0x18] sm:$0xff]
        %v291 = vld [vmem:[%s268 + $0x20] sm:$0xff]
        %v292 = vld [vmem:[%s268 + $0x28] sm:$0xff]
        %v293 = vld [vmem:[%s268 + $0x30] sm:$0xff]
        %v294 = vld [vmem:[%s268 + $0x38] sm:$0xff]
        %v295 = vld [vmem:[%s226] sm:$0xff]
        %v296 = vld [vmem:[%s226 + $0x8] sm:$0xff]
        %v297 = vld [vmem:[%s226 + $0x10] sm:$0xff]
        %v298 = vld [vmem:[%s226 + $0x18] sm:$0xff]
        %v299 = vld [vmem:[%s226 + $0x20] sm:$0xff]
        %v300 = vld [vmem:[%s226 + $0x28] sm:$0xff]
        %v301 = vld [vmem:[%s226 + $0x30] sm:$0xff]
        %v302 = vld [vmem:[%s226 + $0x38] sm:$0xff]
        %v303 = vld [vmem:[%s226 + $0x40] sm:$0xff]
        %v304 = vld [vmem:[%s226 + $0x48] sm:$0xff]
        %v305 = vld [vmem:[%s226 + $0x50] sm:$0xff]
        %v306 = vld [vmem:[%s226 + $0x58] sm:$0xff]
        %v307 = vld [vmem:[%s226 + $0x60] sm:$0xff]
        %v308 = vld [vmem:[%s226 + $0x68] sm:$0xff]
        %v309 = vld [vmem:[%s226 + $0x70] sm:$0xff]
        %v310 = vld [vmem:[%s226 + $0x78] sm:$0xff]
        %v311 = vld [vmem:[%s262] sm:$0xf]
        %v312 = vld [vmem:[%s262 + $0x4] sm:$0xf]
        %v313 = vld [vmem:[%s262 + $0x8] sm:$0xf]
        %v314 = vld [vmem:[%s262 + $0xc] sm:$0xf]
        %v315 = vld [vmem:[%s262 + $0x10] sm:$0xf]
        %v316 = vld [vmem:[%s262 + $0x14] sm:$0xf]
        %v317 = vld [vmem:[%s262 + $0x18] sm:$0xf]
        %v318 = vld [vmem:[%s262 + $0x1c] sm:$0xf]
        %v319 = vld [vmem:[%s262 + $0x20] sm:$0xf]
        %v320 = vld [vmem:[%s262 + $0x24] sm:$0xf]
        %v321 = vld [vmem:[%s262 + $0x28] sm:$0xf]
        %v322 = vld [vmem:[%s262 + $0x2c] sm:$0xf]
        %v323 = vld [vmem:[%s262 + $0x30] sm:$0xf]
        %v324 = vld [vmem:[%s262 + $0x34] sm:$0xf]
        %v325 = vld [vmem:[%s262 + $0x38] sm:$0xf]
        %v326 = vld [vmem:[%s262 + $0x3c] sm:$0xf]
        %v327 = vld [vmem:[%s262 + $0x40] sm:$0xf]
        %v328 = vld [vmem:[%s262 + $0x44] sm:$0xf]
        %v329 = vld [vmem:[%s262 + $0x48] sm:$0xf]
        %v330 = vld [vmem:[%s262 + $0x4c] sm:$0xf]
        %v331 = vld [vmem:[%s262 + $0x50] sm:$0xf]
        %v332 = vld [vmem:[%s262 + $0x54] sm:$0xf]
        %v333 = vld [vmem:[%s262 + $0x58] sm:$0xf]
        %v334 = vld [vmem:[%s262 + $0x5c] sm:$0xf]
        %v335 = vld [vmem:[%s262 + $0x60] sm:$0xf]
        %v336 = vld [vmem:[%s262 + $0x64] sm:$0xf]
        %v337 = vld [vmem:[%s262 + $0x68] sm:$0xf]
        %v338 = vld [vmem:[%s262 + $0x6c] sm:$0xf]
        %v339 = vld [vmem:[%s262 + $0x70] sm:$0xf]
        %v340 = vld [vmem:[%s262 + $0x74] sm:$0xf]
        %v341 = vld [vmem:[%s262 + $0x78] sm:$0xf]
        %v342 = vld [vmem:[%s262 + $0x7c] sm:$0xf]
        %v343 = vld [vmem:[%s262 + $0x80] sm:$0xf]
        %v344 = vld [vmem:[%s262 + $0x84] sm:$0xf]
        %v345 = vld [vmem:[%s262 + $0x88] sm:$0xf]
        %v346 = vld [vmem:[%s262 + $0x8c] sm:$0xf]
        %v347 = vld [vmem:[%s262 + $0x90] sm:$0xf]
        %v348 = vld [vmem:[%s262 + $0x94] sm:$0xf]
        %v349 = vld [vmem:[%s262 + $0x98] sm:$0xf]
        %v350 = vld [vmem:[%s262 + $0x9c] sm:$0xf]
        %v351 = vld [vmem:[%s262 + $0xa0] sm:$0xf]
        %v352 = vld [vmem:[%s262 + $0xa4] sm:$0xf]
        %v353 = vld [vmem:[%s262 + $0xa8] sm:$0xf]
        %v354 = vld [vmem:[%s262 + $0xac] sm:$0xf]
        %v355 = vld [vmem:[%s262 + $0xb0] sm:$0xf]
        %v356 = vld [vmem:[%s262 + $0xb4] sm:$0xf]
        %v357 = vld [vmem:[%s262 + $0xb8] sm:$0xf]
        %v358 = vld [vmem:[%s262 + $0xbc] sm:$0xf]
        %v359 = vld [vmem:[%s262 + $0xc0] sm:$0xf]
        %v360 = vld [vmem:[%s262 + $0xc4] sm:$0xf]
        %v361 = vld [vmem:[%s262 + $0xc8] sm:$0xf]
        %v362 = vld [vmem:[%s262 + $0xcc] sm:$0xf]
        %v363 = vld [vmem:[%s262 + $0xd0] sm:$0xf]
        %v364 = vld [vmem:[%s262 + $0xd4] sm:$0xf]
        %v365 = vld [vmem:[%s262 + $0xd8] sm:$0xf]
        %v366 = vld [vmem:[%s262 + $0xdc] sm:$0xf]
        %v367 = vld [vmem:[%s262 + $0xe0] sm:$0xf]
        %v368 = vld [vmem:[%s262 + $0xe4] sm:$0xf]
        %v369 = vld [vmem:[%s262 + $0xe8] sm:$0xf]
        %v370 = vld [vmem:[%s262 + $0xec] sm:$0xf]
        %v371 = vld [vmem:[%s262 + $0xf0] sm:$0xf]
        %v372 = vld [vmem:[%s262 + $0xf4] sm:$0xf]
        %v373 = vld [vmem:[%s262 + $0xf8] sm:$0xf]
        %v374 = vld [vmem:[%s262 + $0xfc] sm:$0xf]
        %v391 = vunpack.c.l.b16 %v295
        %v392 = vunpack.c.h.b16 %v295
        %v393 = vunpack.c.l.b16 %v296
        %v394 = vunpack.c.h.b16 %v296
        %v395 = vunpack.c.l.b16 %v297
        %v396 = vunpack.c.h.b16 %v297
        %v397 = vunpack.c.l.b16 %v298
        %v398 = vunpack.c.h.b16 %v298
        %v399 = vunpack.c.l.b16 %v299
        %v400 = vunpack.c.h.b16 %v299
        %v401 = vunpack.c.l.b16 %v300
        %v402 = vunpack.c.h.b16 %v300
        %v403 = vunpack.c.l.b16 %v301
        %v404 = vunpack.c.h.b16 %v301
        %v405 = vunpack.c.l.b16 %v302
        %v406 = vunpack.c.h.b16 %v302
        %v407 = vunpack.c.l.b16 %v303
        %v408 = vunpack.c.h.b16 %v303
        %v409 = vunpack.c.l.b16 %v304
        %v410 = vunpack.c.h.b16 %v304
        %v411 = vunpack.c.l.b16 %v305
        %v412 = vunpack.c.h.b16 %v305
        %v413 = vunpack.c.l.b16 %v306
        %v414 = vunpack.c.h.b16 %v306
        %v415 = vunpack.c.l.b16 %v307
        %v416 = vunpack.c.h.b16 %v307
        %v417 = vunpack.c.l.b16 %v308
        %v418 = vunpack.c.h.b16 %v308
        %v419 = vunpack.c.l.b16 %v309
        %v420 = vunpack.c.h.b16 %v309
        %v421 = vunpack.c.l.b16 %v310
        %v422 = vunpack.c.h.b16 %v310
        %v423 = vpack.c.b16 %v395, %v391
        %v424 = vpack.c.b16 %v396, %v392
        %v425 = vpack.c.b16 %v397, %v393
        %v426 = vpack.c.b16 %v398, %v394
        %v427 = vpack.c.b16 %v403, %v399
        %v428 = vpack.c.b16 %v404, %v400
        %v429 = vpack.c.b16 %v405, %v401
        %v430 = vpack.c.b16 %v406, %v402
        %v431 = vpack.c.b16 %v411, %v407
        %v432 = vpack.c.b16 %v412, %v408
        %v433 = vpack.c.b16 %v413, %v409
        %v434 = vpack.c.b16 %v414, %v410
        %v435 = vpack.c.b16 %v419, %v415
        %v436 = vpack.c.b16 %v420, %v416
        %v437 = vpack.c.b16 %v421, %v417
        %v438 = vpack.c.b16 %v422, %v418
        %v519 = vunpack.c.l.b16 %v311
        %v520 = vunpack.c.l.b16 %v312
        %v521 = vunpack.c.l.b16 %v313
        %v522 = vunpack.c.l.b16 %v314
        %v523 = vunpack.c.l.b16 %v315
        %v524 = vunpack.c.l.b16 %v316
        %v525 = vunpack.c.l.b16 %v317
        %v526 = vunpack.c.l.b16 %v318
        %v527 = vunpack.c.l.b16 %v319
        %v528 = vunpack.c.l.b16 %v320
        %v529 = vunpack.c.l.b16 %v321
        %v530 = vunpack.c.l.b16 %v322
        %v531 = vunpack.c.l.b16 %v323
        %v532 = vunpack.c.l.b16 %v324
        %v533 = vunpack.c.l.b16 %v325
        %v534 = vunpack.c.l.b16 %v326
        %v535 = vunpack.c.l.b16 %v327
        %v536 = vunpack.c.l.b16 %v328
        %v537 = vunpack.c.l.b16 %v329
        %v538 = vunpack.c.l.b16 %v330
        %v539 = vunpack.c.l.b16 %v331
        %v540 = vunpack.c.l.b16 %v332
        %v541 = vunpack.c.l.b16 %v333
        %v542 = vunpack.c.l.b16 %v334
        %v543 = vunpack.c.l.b16 %v335
        %v544 = vunpack.c.l.b16 %v336
        %v545 = vunpack.c.l.b16 %v337
        %v546 = vunpack.c.l.b16 %v338
        %v547 = vunpack.c.l.b16 %v339
        %v548 = vunpack.c.l.b16 %v340
        %v549 = vunpack.c.l.b16 %v341
        %v550 = vunpack.c.l.b16 %v342
        %v551 = vunpack.c.l.b16 %v343
        %v552 = vunpack.c.l.b16 %v344
        %v553 = vunpack.c.l.b16 %v345
        %v554 = vunpack.c.l.b16 %v346
        %v555 = vunpack.c.l.b16 %v347
        %v556 = vunpack.c.l.b16 %v348
        %v557 = vunpack.c.l.b16 %v349
        %v558 = vunpack.c.l.b16 %v350
        %v559 = vunpack.c.l.b16 %v351
        %v560 = vunpack.c.l.b16 %v352
        %v561 = vunpack.c.l.b16 %v353
        %v562 = vunpack.c.l.b16 %v354
        %v563 = vunpack.c.l.b16 %v355
        %v564 = vunpack.c.l.b16 %v356
        %v565 = vunpack.c.l.b16 %v357
        %v566 = vunpack.c.l.b16 %v358
        %v567 = vunpack.c.l.b16 %v359
        %v568 = vunpack.c.l.b16 %v360
        %v569 = vunpack.c.l.b16 %v361
        %v570 = vunpack.c.l.b16 %v362
        %v571 = vunpack.c.l.b16 %v363
        %v572 = vunpack.c.l.b16 %v364
        %v573 = vunpack.c.l.b16 %v365
        %v574 = vunpack.c.l.b16 %v366
        %v575 = vunpack.c.l.b16 %v367
        %v576 = vunpack.c.l.b16 %v368
        %v577 = vunpack.c.l.b16 %v369
        %v578 = vunpack.c.l.b16 %v370
        %v579 = vunpack.c.l.b16 %v371
        %v580 = vunpack.c.l.b16 %v372
        %v581 = vunpack.c.l.b16 %v373
        %v582 = vunpack.c.l.b16 %v374
        %v583 = vpack.c.b16 %v520, %v519
        %v584 = vpack.c.b16 %v522, %v521
        %v585 = vpack.c.b16 %v524, %v523
        %v586 = vpack.c.b16 %v526, %v525
        %v587 = vpack.c.b16 %v528, %v527
        %v588 = vpack.c.b16 %v530, %v529
        %v589 = vpack.c.b16 %v532, %v531
        %v590 = vpack.c.b16 %v534, %v533
        %v591 = vpack.c.b16 %v536, %v535
        %v592 = vpack.c.b16 %v538, %v537
        %v593 = vpack.c.b16 %v540, %v539
        %v594 = vpack.c.b16 %v542, %v541
        %v595 = vpack.c.b16 %v544, %v543
        %v596 = vpack.c.b16 %v546, %v545
        %v597 = vpack.c.b16 %v548, %v547
        %v598 = vpack.c.b16 %v550, %v549
        %v599 = vpack.c.b16 %v552, %v551
        %v600 = vpack.c.b16 %v554, %v553
        %v601 = vpack.c.b16 %v556, %v555
        %v602 = vpack.c.b16 %v558, %v557
        %v603 = vpack.c.b16 %v560, %v559
        %v604 = vpack.c.b16 %v562, %v561
        %v605 = vpack.c.b16 %v564, %v563
        %v606 = vpack.c.b16 %v566, %v565
        %v607 = vpack.c.b16 %v568, %v567
        %v608 = vpack.c.b16 %v570, %v569
        %v609 = vpack.c.b16 %v572, %v571
        %v610 = vpack.c.b16 %v574, %v573
        %v611 = vpack.c.b16 %v576, %v575
        %v612 = vpack.c.b16 %v578, %v577
        %v613 = vpack.c.b16 %v580, %v579
        %v614 = vpack.c.b16 %v582, %v581
        %647 = vmatprep.subr.bf16.mxu0 0
        %648 = vmatpush1.bf16.msra.mxu0 %v590
        %649 = vmatprep.subr.bf16.mxu0 0
        %650 = vmatpush1.bf16.msra.mxu0 %v589
        %651 = vmatprep.subr.bf16.mxu0 0
        %652 = vmatpush1.bf16.msra.mxu0 %v588
        %653 = vmatprep.subr.bf16.mxu0 0
        %654 = vmatpush1.bf16.msra.mxu0 %v587
        %655 = vmatprep.subr.bf16.mxu0 0
        %656 = vmatpush1.bf16.msra.mxu0 %v586
        %657 = vmatprep.subr.bf16.mxu0 0
        %658 = vmatpush1.bf16.msra.mxu0 %v585
        %659 = vmatprep.subr.bf16.mxu0 0
        %660 = vmatpush1.bf16.msra.mxu0 %v584
        %661 = vmatprep.subr.bf16.mxu0 0
        %662 = vmatpush1.bf16.msra.mxu0 %v583
        %663 = vmatprep.subr.bf16.mxu0 0
        %664 = vmatpush2.bf16.msra.mxu0 %v598
        %665 = vmatprep.subr.bf16.mxu0 0
        %666 = vmatpush2.bf16.msra.mxu0 %v597
        %667 = vmatprep.subr.bf16.mxu0 0
        %668 = vmatpush2.bf16.msra.mxu0 %v596
        %669 = vmatprep.subr.bf16.mxu0 0
        %670 = vmatpush2.bf16.msra.mxu0 %v595
        %671 = vmatprep.subr.bf16.mxu0 0
        %672 = vmatpush2.bf16.msra.mxu0 %v594
        %673 = vmatprep.subr.bf16.mxu0 0
        %674 = vmatpush2.bf16.msra.mxu0 %v593
        %675 = vmatprep.subr.bf16.mxu0 0
        %676 = vmatpush2.bf16.msra.mxu0 %v592
        %677 = vmatprep.subr.bf16.mxu0 0
        %678 = vmatpush2.bf16.msra.mxu0 %v591
        %679 = vmatprep.mubr.bf16.mxu0 %v424
        %680 = vmatmul.mubr.bf16.gmra.mxu0 %v423
        %v681 = vpop.f32.mrf.mxu0
        %v682 = vadd.f32 0.0, %v681
        %v683 = vpop.f32.mrf.mxu0
        %v684 = vpop.f32.mrf.mxu0
        %v685 = vadd.f32 0.0, %v684
        %v686 = vpop.f32.mrf.mxu0
        %687 = vmatprep.mubr.bf16.mxu0 %v428
        %688 = vmatmul.mubr.bf16.gmra.mxu0 %v427
        %v689 = vpop.f32.mrf.mxu0
        %v690 = vadd.f32 0.0, %v689
        %v691 = vpop.f32.mrf.mxu0
        %v692 = vpop.f32.mrf.mxu0
        %v693 = vadd.f32 0.0, %v692
        %v694 = vpop.f32.mrf.mxu0
        %695 = vmatprep.mubr.bf16.mxu0 %v432
        %696 = vmatmul.mubr.bf16.gmra.mxu0 %v431
        %v697 = vpop.f32.mrf.mxu0
        %v698 = vadd.f32 0.0, %v697
        %v699 = vpop.f32.mrf.mxu0
        %v700 = vpop.f32.mrf.mxu0
        %v701 = vadd.f32 0.0, %v700
        %v702 = vpop.f32.mrf.mxu0
        %703 = vmatprep.mubr.bf16.mxu0 %v436
        %704 = vmatmul.mubr.bf16.gmra.mxu0 %v435
        %v705 = vpop.f32.mrf.mxu0
        %v706 = vadd.f32 0.0, %v705
        %v707 = vpop.f32.mrf.mxu0
        %v708 = vpop.f32.mrf.mxu0
        %v709 = vadd.f32 0.0, %v708
        %v710 = vpop.f32.mrf.mxu0
        %711 = vdwg.mxu0
        %712 = vmatprep.subr.bf16.mxu0 0
        %713 = vmatpush1.bf16.msra.mxu0 %v606
        %714 = vmatprep.subr.bf16.mxu0 0
        %715 = vmatpush1.bf16.msra.mxu0 %v605
        %716 = vmatprep.subr.bf16.mxu0 0
        %717 = vmatpush1.bf16.msra.mxu0 %v604
        %718 = vmatprep.subr.bf16.mxu0 0
        %719 = vmatpush1.bf16.msra.mxu0 %v603
        %720 = vmatprep.subr.bf16.mxu0 0
        %721 = vmatpush1.bf16.msra.mxu0 %v602
        %722 = vmatprep.subr.bf16.mxu0 0
        %723 = vmatpush1.bf16.msra.mxu0 %v601
        %724 = vmatprep.subr.bf16.mxu0 0
        %725 = vmatpush1.bf16.msra.mxu0 %v600
        %726 = vmatprep.subr.bf16.mxu0 0
        %727 = vmatpush1.bf16.msra.mxu0 %v599
        %728 = vmatprep.subr.bf16.mxu0 0
        %729 = vmatpush2.bf16.msra.mxu0 %v614
        %730 = vmatprep.subr.bf16.mxu0 0
        %731 = vmatpush2.bf16.msra.mxu0 %v613
        %732 = vmatprep.subr.bf16.mxu0 0
        %733 = vmatpush2.bf16.msra.mxu0 %v612
        %734 = vmatprep.subr.bf16.mxu0 0
        %735 = vmatpush2.bf16.msra.mxu0 %v611
        %736 = vmatprep.subr.bf16.mxu0 0
        %737 = vmatpush2.bf16.msra.mxu0 %v610
        %738 = vmatprep.subr.bf16.mxu0 0
        %739 = vmatpush2.bf16.msra.mxu0 %v609
        %740 = vmatprep.subr.bf16.mxu0 0
        %741 = vmatpush2.bf16.msra.mxu0 %v608
        %742 = vmatprep.subr.bf16.mxu0 0
        %743 = vmatpush2.bf16.msra.mxu0 %v607
        %744 = vmatprep.mubr.bf16.mxu0 %v426
        %745 = vmatmul.mubr.bf16.gmra.mxu0 %v425
        %v746 = vpop.f32.mrf.mxu0
        %v747 = vadd.f32 %v682, %v746
        %v748 = vpop.f32.mrf.mxu0
        %v749 = vpop.f32.mrf.mxu0
        %v750 = vadd.f32 %v685, %v749
        %v751 = vpop.f32.mrf.mxu0
        %752 = vmatprep.mubr.bf16.mxu0 %v430
        %753 = vmatmul.mubr.bf16.gmra.mxu0 %v429
        %v754 = vpop.f32.mrf.mxu0
        %v755 = vadd.f32 %v690, %v754
        %v756 = vpop.f32.mrf.mxu0
        %v757 = vpop.f32.mrf.mxu0
        %v758 = vadd.f32 %v693, %v757
        %v759 = vpop.f32.mrf.mxu0
        %760 = vmatprep.mubr.bf16.mxu0 %v434
        %761 = vmatmul.mubr.bf16.gmra.mxu0 %v433
        %v762 = vpop.f32.mrf.mxu0
        %v763 = vadd.f32 %v698, %v762
        %v764 = vpop.f32.mrf.mxu0
        %v765 = vpop.f32.mrf.mxu0
        %v766 = vadd.f32 %v701, %v765
        %v767 = vpop.f32.mrf.mxu0
        %768 = vmatprep.mubr.bf16.mxu0 %v438
        %769 = vmatmul.mubr.bf16.gmra.mxu0 %v437
        %v770 = vpop.f32.mrf.mxu0
        %v771 = vadd.f32 %v706, %v770
        %v772 = vpop.f32.mrf.mxu0
        %v773 = vpop.f32.mrf.mxu0
        %v774 = vadd.f32 %v709, %v773
        %v775 = vpop.f32.mrf.mxu0
        %776 = vdwg.mxu0
        %v777 = vadd.f32 %v287, %v747
        %v778 = vadd.f32 %v288, %v750
        %v779 = vadd.f32 %v289, %v755
        %v780 = vadd.f32 %v290, %v758
        %v781 = vadd.f32 %v291, %v763
        %v782 = vadd.f32 %v292, %v766
        %v783 = vadd.f32 %v293, %v771
        %v784 = vadd.f32 %v294, %v774
        %785 = vst [vmem:[%s268] sm:$0xff] %v777
        %786 = vst [vmem:[%s268 + $0x8] sm:$0xff] %v778
        %787 = vst [vmem:[%s268 + $0x10] sm:$0xff] %v779
        %788 = vst [vmem:[%s268 + $0x18] sm:$0xff] %v780
        %789 = vst [vmem:[%s268 + $0x20] sm:$0xff] %v781
        %790 = vst [vmem:[%s268 + $0x28] sm:$0xff] %v782
        %791 = vst [vmem:[%s268 + $0x30] sm:$0xff] %v783
        %792 = vst [vmem:[%s268 + $0x38] sm:$0xff] %v784
        %p793 = scmp.eq.s32.totalorder %s20, 85
        // Predicated region
        $region56: #{forward.18} parent=46 // pred_check
          %p794 = pneg %p793
        $region57: #{forward.18} parent=46 // pred_check_branch
          %796 = sbr.rel (%p794) target = $region59
        $region58: #{forward.18} parent=46 // pred_region
          %v797 = vld [vmem:[%s268] sm:$0xff]
          %v798 = vld [vmem:[%s268 + $0x8] sm:$0xff]
          %v799 = vld [vmem:[%s268 + $0x10] sm:$0xff]
          %v800 = vld [vmem:[%s268 + $0x18] sm:$0xff]
          %v801 = vld [vmem:[%s268 + $0x20] sm:$0xff]
          %v802 = vld [vmem:[%s268 + $0x28] sm:$0xff]
          %v803 = vld [vmem:[%s268 + $0x30] sm:$0xff]
          %v804 = vld [vmem:[%s268 + $0x38] sm:$0xff]
          %v805 = vadd.f32 %v797, %v798
          %v806 = vadd.f32 %v805, %v799
          %v807 = vadd.f32 %v806, %v800
          %v808 = vadd.f32 %v807, %v801
          %v809 = vadd.f32 %v808, %v802
          %v810 = vadd.f32 %v809, %v803
          %v811 = vadd.f32 %v810, %v804
          %v812 = vrot.slane %v811, 4
          %v813 = vadd.f32 %v811, %v812
          %v814 = vrot.slane %v813, 2
          %v815 = vadd.f32 %v813, %v814
          %v816 = vrot.slane %v815, 1
          %v817 = vadd.f32 %v815, %v816
          %818 = vst [vmem:[%s273] sm:$0x1] %v817
          %v819 = vmul.f32 %v797, %v797
          %v820 = vmul.f32 %v798, %v798
          %v821 = vmul.f32 %v799, %v799
          %v822 = vmul.f32 %v800, %v800
          %v823 = vmul.f32 %v801, %v801
          %v824 = vmul.f32 %v802, %v802
          %v825 = vmul.f32 %v803, %v803
          %v826 = vmul.f32 %v804, %v804
          %v827 = vadd.f32 %v819, %v820
          %v828 = vadd.f32 %v827, %v821
          %v829 = vadd.f32 %v828, %v822
          %v830 = vadd.f32 %v829, %v823
          %v831 = vadd.f32 %v830, %v824
          %v832 = vadd.f32 %v831, %v825
          %v833 = vadd.f32 %v832, %v826
          %v834 = vrot.slane %v833, 4
          %v835 = vadd.f32 %v833, %v834
          %v836 = vrot.slane %v835, 2
          %v837 = vadd.f32 %v835, %v836
          %v838 = vrot.slane %v837, 1
          %v839 = vadd.f32 %v837, %v838
          %840 = vst [vmem:[%s273 + $0x1] sm:$0x1] %v839
          %841 = vst [vmem:[%s273 + $0x2] sm:$0x3f] 0.0
        $region59: #{forward.18} parent=46 // pred_fallthru
          _
        %s842 = smul.u32 8, %s19
        %p843 = scmp.lt.s32.totalorder %s842, 7
        %s844 = scalar_select %p843, %s842, 7
        %s845 = smul.addr %s844, 8
        %s846 = scalar_lea.vmem %s2, %s845
        %p847 = scmp.lt.s32.totalorder %s19, 0
        %s848 = scalar_select %p847, %s19, 0
        %s849 = smul.addr %s848, 8
        %s850 = scalar_lea.vmem %s3, %s849
        // Predicated region
        $region60: #{forward.18} parent=46 // pred_check
          %p851 = pneg %p99
        $region61: #{forward.18} parent=46 // pred_check_branch
          %853 = sbr.rel (%p851) target = $region63
        $region62: #{forward.18} parent=46 // pred_region
          %s854 = smul.u32 8, %s19
        $region63: #{forward.18} parent=46 // pred_fallthru
          _
        // Predicated region
        $region64: #{forward.18} parent=46 // pred_check
          %p855 = pneg %p125
        $region65: #{forward.18} parent=46 // pred_check_branch
          %857 = sbr.rel (%p855) target = $region67
        $region66: #{forward.18} parent=46 // pred_region
          _
        $region67: #{forward.18} parent=46 // pred_fallthru
          _
        // Predicated region
        $region68: #{forward.18} parent=46 // pred_check
          %p858 = pneg %p99
        $region69: #{forward.18} parent=46 // pred_check_branch
          %860 = sbr.rel (%p858) target = $region71
        $region70: #{forward.18} parent=46 // pred_region
          %s861 = smul.u32 8, %s19
          %p862 = scmp.lt.s32.totalorder %s861, 7
          %s863 = scalar_select %p862, %s861, 7
          %s864 = smul.addr %s863, 8
          %s865 = scalar_lea.vmem %s2, %s864
        $region71: #{forward.18} parent=46 // pred_fallthru
          _
        // Predicated region
        $region72: #{forward.18} parent=46 // pred_check
          %p866 = pneg %p125
        $region73: #{forward.18} parent=46 // pred_check_branch
          %868 = sbr.rel (%p866) target = $region75
        $region74: #{forward.18} parent=46 // pred_region
          %p869 = scmp.lt.s32.totalorder %s19, 0
          %s870 = scalar_select %p869, %s19, 0
          %s871 = smul.addr %s870, 8
          %s872 = scalar_lea.vmem %s3, %s871
        $region75: #{forward.18} parent=46 // pred_fallthru
          _
      $region47: #{forward.18} parent=5 // pred_fallthru
        _
      %p873 = scmp.le.s32.totalorder 2, %s10
      // Predicated region
      $region76: #{forward.18} parent=5 // pred_check
        %p874 = pneg %p873
      $region77: #{forward.18} parent=5 // pred_check_branch
        %876 = sbr.rel (%p874) target = $region79
      $region78: #{forward.18} parent=5 // pred_region
        %s877 = ssub.s32 %s10, 2
      $region79: #{forward.18} parent=5 // pred_fallthru
        _
    $region6: #{forward.18} parent=1 // loop_footer
      %s14 = sadd.s32 1, %s10
    $region7: #{forward.18} parent=1 // loop_footer_branch
      %9 = sbr.rel target = $region3
    $region8: #{forward.18} parent=1 // loop_exit
      _

// kernel: forward.21
$region0: #{forward.21}
  #allocation0 [shape = 'u32[]', space=smem, size = 0x4, offset = 0x4, fixed_abs, tag = 'smem constant byte address 0x4 - core index']
  #allocation1 [shape = 'u32[144,128]{1,0:T(1,128)}', space=vmem, size = 0x12000, scoped, tag = 'internal scratch']
  %s0 = inlined_call_operand.vmem [shape: f32[8,128], index: 0, kind: input, shape index: {}]
  %s1 = inlined_call_operand.vmem [shape: f32[1,128], index: 1, kind: input, shape index: {}]
  %s2 = inlined_call_operand.vmem [shape: f32[1,128], index: 2, kind: input, shape index: {}]
  %s3 = inlined_call_operand.vmem [shape: bf16[8,128], index: 3, kind: output, shape index: {}]
  %s4 = sld [smem:[#allocation0]]
  $region22: #{forward.21} parent=0
    _
  %s6 = ssub.s32 1, %s4
  %s7 = scalar_select 0, %s6, %s4
  // Predicated region
  $region2: #{forward.21} parent=0 // pred_check
    _
  $region3: #{forward.21} parent=0 // pred_check_branch
    %9 = sbr.rel (0) target = $region5
  $region4: #{forward.21} parent=0 // pred_region
    _
  $region5: #{forward.21} parent=0 // pred_fallthru
    _
  // Predicated region
  $region6: #{forward.21} parent=0 // pred_check
    _
  $region7: #{forward.21} parent=0 // pred_check_branch
    %11 = sbr.rel (0) target = $region9
  $region8: #{forward.21} parent=0 // pred_region
    _
  $region9: #{forward.21} parent=0 // pred_fallthru
    _
  // Predicated region
  $region10: #{forward.21} parent=0 // pred_check
    _
  $region11: #{forward.21} parent=0 // pred_check_branch
    %13 = sbr.rel (0) target = $region13
  $region12: #{forward.21} parent=0 // pred_region
    _
  $region13: #{forward.21} parent=0 // pred_fallthru
    _
  %v14 = vld [vmem:[%s0] sm:$0xff]
  %v15 = vld [vmem:[%s1] sm:$0x1]
  %v17 = vlaneseq
  %v18 = vshrl.u32 %v17, 7
  %v19 = vsub.s32 0, %v18
  %v20 = vrot.slane %v15, %v19
  %v22 = vmul.f32 %v14, %v20
  %v23 = vld [vmem:[%s2] sm:$0x1]
  %v25 = vlaneseq
  %v26 = vshrl.u32 %v25, 7
  %v27 = vsub.s32 0, %v26
  %v28 = vrot.slane %v23, %v27
  %v30 = vadd.f32 %v22, %v28
  %v31 = vmax.f32 %v30, 0.0
  %v32 = vpack.c.bf16 %v31, %v31
  %33 = vst [vmem:[%s3] sm:$0xf] %v32
  // Predicated region
  $region14: #{forward.21} parent=0 // pred_check
    _
  $region15: #{forward.21} parent=0 // pred_check_branch
    %35 = sbr.rel (0) target = $region17
  $region16: #{forward.21} parent=0 // pred_region
    _
  $region17: #{forward.21} parent=0 // pred_fallthru
    _
  // Predicated region
  $region18: #{forward.21} parent=0 // pred_check
    _
  $region19: #{forward.21} parent=0 // pred_check_branch
    %37 = sbr.rel (0) target = $region21
  $region20: #{forward.21} parent=0 // pred_region
    _
  $region21: #{forward.21} parent=0 // pred_fallthru
    _

// kernel: forward.20
$region0: #{forward.20}
  #allocation0 [shape = 'u32[]', space=smem, size = 0x4, offset = 0x4, fixed_abs, tag = 'smem constant byte address 0x4 - core index']
  #allocation1 [shape = 'u32[144,128]{1,0:T(1,128)}', space=vmem, size = 0x12000, scoped, tag = 'internal scratch']
  %s0 = inlined_call_operand.vmem [shape: bf16[8,44032], index: 0, kind: input, shape index: {}]
  %s1 = inlined_call_operand.vmem [shape: bf16[44032,128], index: 1, kind: input, shape index: {}]
  %s2 = inlined_call_operand.vmem [shape: f32[8,128], index: 2, kind: output, shape index: {0}]
  %s3 = inlined_call_operand.vmem [shape: f32[8,128], index: 3, kind: output, shape index: {1}]
  %4 = xla_tuple %s2, %s3
  %s5 = sld [smem:[#allocation0]]
  $region57: #{forward.20} parent=0
    _
  %s7 = ssub.s32 1, %s5
  %s8 = scalar_select 0, %s7, %s5
  loop: start=0, step=1, limit=88
  $region2: #{forward.20} parent=0 // loop_pre_header
    _
  $region3: #{forward.20} parent=0 // loop_header
    %s10 = sphi 0, %s14
    %p11 = scmp.ge.s32.totalorder %s10, 88
    %s17 = sphi 0, %s29
    %s18 = sphi 0, %s25
    %s19 = sphi 0, %s17
    %s20 = sphi 0, %s18
    %s21 = sphi 0, %s19
    %s22 = sphi 0, %s20
    %s34 = sphi 0, %s36
    %s37 = sphi 0, %s34
    %s38 = sphi 0, %s37
    %s54 = sphi 0, %s38
    %s60 = sphi 0, %s62
    %s63 = sphi 0, %s60
    %s64 = sphi 0, %s63
    %s80 = sphi 0, %s64
    %s86 = sphi 0, %s88
    %s89 = sphi 0, %s86
    %s90 = sphi 0, %s89
    %s106 = sphi 0, %s90
    %s112 = sphi 0, %s114
    %s115 = sphi 0, %s112
    %s116 = sphi 0, %s115
    %s132 = sphi 0, %s116
  $region4: #{forward.20} parent=0 // loop_header_branch
    %13 = sbr.rel (%p11) target = $region8
  $region5: #{forward.20} parent=0 // loop_body
    %s15 = ssub.s32 %s10, 1
    %s16 = ssub.s32 %s10, 2
    %s23 = sadd.s32 1, %s18
    %p24 = scmp.ge.s32.totalorder %s23, 86
    %s25 = scalar_select %p24, 0, %s23
    %s26 = sadd.s32 1, %s17
    %s27 = scalar_select %p24, %s26, %s17
    %p28 = scmp.ge.s32.totalorder %s27, 1
    %s29 = scalar_select %p28, 0, %s27
    %s30 = ssub.s32 %s17, %s29
    %s31 = ssub.s32 %s18, %s25
    %s32 = sor.u32 %s30, %s31
    %p33 = scmp.eq.s32.totalorder %s32, 0
    %s35 = sadd.s32 %s34, 1
    %s36 = scalar_select %p33, %s34, %s35
    %p39 = pneg %p33
    %p40 = scmp.eq.s32.totalorder %s10, 85
    %p41 = por %p39, %p40
    %p42 = scmp.ne.s32.totalorder %s34, %s37
    %p43 = scmp.eq.s32.totalorder %s10, 0
    %p44 = por %p42, %p43
    %p45 = scmp.ne.s32.totalorder %s34, %s37
    %p46 = scmp.eq.s32.totalorder %s15, 85
    %p47 = por %p45, %p46
    %p48 = scmp.ne.s32.totalorder %s37, %s38
    %p49 = scmp.eq.s32.totalorder %s15, 0
    %p50 = por %p48, %p49
    %p51 = scmp.ne.s32.totalorder %s37, %s38
    %p52 = scmp.eq.s32.totalorder %s16, 85
    %p53 = por %p51, %p52
    %p55 = scmp.ne.s32.totalorder %s38, %s54
    %p56 = scmp.eq.s32.totalorder %s16, 0
    %p57 = por %p55, %p56
    %s58 = ssub.s32 %s18, %s25
    %p59 = scmp.eq.s32.totalorder %s58, 0
    %s61 = sadd.s32 %s60, 1
    %s62 = scalar_select %p59, %s60, %s61
    %p65 = pneg %p59
    %p66 = scmp.eq.s32.totalorder %s10, 85
    %p67 = por %p65, %p66
    %p68 = scmp.ne.s32.totalorder %s60, %s63
    %p69 = scmp.eq.s32.totalorder %s10, 0
    %p70 = por %p68, %p69
    %p71 = scmp.ne.s32.totalorder %s60, %s63
    %p72 = scmp.eq.s32.totalorder %s15, 85
    %p73 = por %p71, %p72
    %p74 = scmp.ne.s32.totalorder %s63, %s64
    %p75 = scmp.eq.s32.totalorder %s15, 0
    %p76 = por %p74, %p75
    %p77 = scmp.ne.s32.totalorder %s63, %s64
    %p78 = scmp.eq.s32.totalorder %s16, 85
    %p79 = por %p77, %p78
    %p81 = scmp.ne.s32.totalorder %s64, %s80
    %p82 = scmp.eq.s32.totalorder %s16, 0
    %p83 = por %p81, %p82
    %s84 = ssub.s32 %s17, %s29
    %p85 = scmp.eq.s32.totalorder %s84, 0
    %s87 = sadd.s32 %s86, 1
    %s88 = scalar_select %p85, %s86, %s87
    %p91 = pneg %p85
    %p92 = scmp.eq.s32.totalorder %s10, 85
    %p93 = por %p91, %p92
    %p94 = scmp.ne.s32.totalorder %s86, %s89
    %p95 = scmp.eq.s32.totalorder %s10, 0
    %p96 = por %p94, %p95
    %p97 = scmp.ne.s32.totalorder %s86, %s89
    %p98 = scmp.eq.s32.totalorder %s15, 85
    %p99 = por %p97, %p98
    %p100 = scmp.ne.s32.totalorder %s89, %s90
    %p101 = scmp.eq.s32.totalorder %s15, 0
    %p102 = por %p100, %p101
    %p103 = scmp.ne.s32.totalorder %s89, %s90
    %p104 = scmp.eq.s32.totalorder %s16, 85
    %p105 = por %p103, %p104
    %p107 = scmp.ne.s32.totalorder %s90, %s106
    %p108 = scmp.eq.s32.totalorder %s16, 0
    %p109 = por %p107, %p108
    %s110 = ssub.s32 %s17, %s29
    %p111 = scmp.eq.s32.totalorder %s110, 0
    %s113 = sadd.s32 %s112, 1
    %s114 = scalar_select %p111, %s112, %s113
    %p117 = pneg %p111
    %p118 = scmp.eq.s32.totalorder %s10, 85
    %p119 = por %p117, %p118
    %p120 = scmp.ne.s32.totalorder %s112, %s115
    %p121 = scmp.eq.s32.totalorder %s10, 0
    %p122 = por %p120, %p121
    %p123 = scmp.ne.s32.totalorder %s112, %s115
    %p124 = scmp.eq.s32.totalorder %s15, 85
    %p125 = por %p123, %p124
    %p126 = scmp.ne.s32.totalorder %s115, %s116
    %p127 = scmp.eq.s32.totalorder %s15, 0
    %p128 = por %p126, %p127
    %p129 = scmp.ne.s32.totalorder %s115, %s116
    %p130 = scmp.eq.s32.totalorder %s16, 85
    %p131 = por %p129, %p130
    %p133 = scmp.ne.s32.totalorder %s116, %s132
    %p134 = scmp.eq.s32.totalorder %s16, 0
    %p135 = por %p133, %p134
    %p136 = scmp.le.s32.totalorder 1, %s10
    %p137 = scmp.lt.s32.totalorder %s10, 87
    %p138 = pnand %p136, %p137
    %p139 = pneg %p138
    // Predicated region
    $region9: #{forward.20} parent=5 // pred_check
      _
    $region10: #{forward.20} parent=5 // pred_check_branch
      %141 = sbr.rel (%p138) target = $region12
    $region11: #{forward.20} parent=5 // pred_region
      %s142 = ssub.s32 %s10, 1
    $region12: #{forward.20} parent=5 // pred_fallthru
      _
    %p143 = scmp.lt.s32.totalorder %s10, 86
    // Predicated region
    $region13: #{forward.20} parent=5 // pred_check
      %p144 = pneg %p143
    $region14: #{forward.20} parent=5 // pred_check_branch
      %146 = sbr.rel (%p144) target = $region16
    $region15: #{forward.20} parent=5 // pred_region
      // Predicated region
      $region17: #{forward.20} parent=15 // pred_check
        %p147 = pneg %p44
      $region18: #{forward.20} parent=15 // pred_check_branch
        %149 = sbr.rel (%p147) target = $region20
      $region19: #{forward.20} parent=15 // pred_region
        %s150 = smul.u32 4, %s18
        %p151 = scmp.lt.s32.totalorder %s17, 0
        %s152 = scalar_select %p151, %s17, 0
        %p153 = scmp.lt.s32.totalorder %s150, 343
        %s154 = scalar_select %p153, %s150, 343
        %s155 = smul.addr %s152, 344
        %s156 = sadd.s32 %s154, %s155
        %s157 = smul.addr %s156, 4
        %s158 = scalar_lea.vmem %s0, %s157
        %s159 = smul.u32 4, %s18
      $region20: #{forward.20} parent=15 // pred_fallthru
        _
      // Predicated region
      $region21: #{forward.20} parent=15 // pred_check
        %p160 = pneg %p70
      $region22: #{forward.20} parent=15 // pred_check_branch
        %162 = sbr.rel (%p160) target = $region24
      $region23: #{forward.20} parent=15 // pred_region
        %s163 = smul.u32 64, %s18
        %p164 = scmp.lt.s32.totalorder %s163, 5503
        %s165 = scalar_select %p164, %s163, 5503
        %s166 = smul.addr %s165, 4
        %s167 = scalar_lea.vmem %s1, %s166
        %s168 = smul.u32 64, %s18
      $region24: #{forward.20} parent=15 // pred_fallthru
        _
    $region16: #{forward.20} parent=5 // pred_fallthru
      _
    %p169 = scmp.le.s32.totalorder 1, %s10
    %p170 = scmp.lt.s32.totalorder %s10, 87
    %p171 = pnand %p169, %p170
    %p172 = pneg %p171
    // Predicated region
    $region25: #{forward.20} parent=5 // pred_check
      _
    $region26: #{forward.20} parent=5 // pred_check_branch
      %174 = sbr.rel (%p171) target = $region28
    $region27: #{forward.20} parent=5 // pred_region
      %s175 = ssub.s32 %s10, 1
      %s176 = smul.u32 4, %s20
      %p177 = scmp.lt.s32.totalorder %s19, 0
      %s178 = scalar_select %p177, %s19, 0
      %p179 = scmp.lt.s32.totalorder %s176, 343
      %s180 = scalar_select %p179, %s176, 343
      %s181 = smul.addr %s178, 344
      %s182 = sadd.s32 %s180, %s181
      %s183 = smul.addr %s182, 4
      %s184 = scalar_lea.vmem %s0, %s183
      %p185 = pneg %p50
      %p186 = pneg %p47
      %s187 = smul.u32 64, %s20
      %p188 = scmp.lt.s32.totalorder %s187, 5503
      %s189 = scalar_select %p188, %s187, 5503
      %s190 = smul.addr %s189, 4
      %s191 = scalar_lea.vmem %s1, %s190
      %p192 = pneg %p76
      %p193 = pneg %p73
      %p194 = pneg %p102
      %p195 = pneg %p99
      %p196 = scmp.lt.s32.totalorder %s19, 0
      %s197 = scalar_select %p196, %s19, 0
      %s198 = smul.addr %s197, 8
      %s199 = scalar_lea.vmem %s2, %s198
      %p200 = pneg %p128
      %p201 = pneg %p125
      %p202 = scmp.lt.s32.totalorder %s19, 0
      %s203 = scalar_select %p202, %s19, 0
      %s204 = smul.addr %s203, 8
      %s205 = scalar_lea.vmem %s3, %s204
      %s206 = smul.u32 4, %s20
      %p207 = scmp.lt.s32.totalorder %s19, 0
      %s208 = scalar_select %p207, %s19, 0
      %p209 = scmp.lt.s32.totalorder %s206, 343
      %s210 = scalar_select %p209, %s206, 343
      %s211 = smul.addr %s208, 344
      %s212 = sadd.s32 %s210, %s211
      %s213 = smul.addr %s212, 4
      %s214 = scalar_lea.vmem %s0, %s213
      %s215 = smul.u32 4, %s20
      %s216 = smul.u32 64, %s20
      %p217 = scmp.lt.s32.totalorder %s216, 5503
      %s218 = scalar_select %p217, %s216, 5503
      %s219 = smul.addr %s218, 4
      %s220 = scalar_lea.vmem %s1, %s219
      %s221 = smul.u32 64, %s20
      %p222 = scmp.lt.s32.totalorder %s19, 0
      %s223 = scalar_select %p222, %s19, 0
      %s224 = smul.addr %s223, 8
      %s225 = scalar_lea.vmem %s2, %s224
      %p226 = scmp.lt.s32.totalorder %s19, 0
      %s227 = scalar_select %p226, %s19, 0
      %s228 = smul.addr %s227, 8
      %s229 = scalar_lea.vmem %s3, %s228
      %p231 = scmp.eq.s32.totalorder %s20, 0
      // Predicated region
      $region29: #{forward.20} parent=27 // pred_check
        %p232 = pneg %p231
      $region30: #{forward.20} parent=27 // pred_check_branch
        %234 = sbr.rel (%p232) target = $region32
      $region31: #{forward.20} parent=27 // pred_region
        %235 = vst [vmem:[%s225] sm:$0xff] 0.0
      $region32: #{forward.20} parent=27 // pred_fallthru
        _
      %v236 = vld [vmem:[%s225] sm:$0xff]
      %v237 = vld [vmem:[%s214] sm:$0xff]
      %v238 = vld [vmem:[%s214 + $0x8] sm:$0xff]
      %v239 = vld [vmem:[%s220] sm:$0xf]
      %v240 = vld [vmem:[%s220 + $0x4] sm:$0xf]
      %v241 = vld [vmem:[%s220 + $0x8] sm:$0xf]
      %v242 = vld [vmem:[%s220 + $0xc] sm:$0xf]
      %v243 = vld [vmem:[%s220 + $0x10] sm:$0xf]
      %v244 = vld [vmem:[%s220 + $0x14] sm:$0xf]
      %v245 = vld [vmem:[%s220 + $0x18] sm:$0xf]
      %v246 = vld [vmem:[%s220 + $0x1c] sm:$0xf]
      %v247 = vld [vmem:[%s220 + $0x20] sm:$0xf]
      %v248 = vld [vmem:[%s220 + $0x24] sm:$0xf]
      %v249 = vld [vmem:[%s220 + $0x28] sm:$0xf]
      %v250 = vld [vmem:[%s220 + $0x2c] sm:$0xf]
      %v251 = vld [vmem:[%s220 + $0x30] sm:$0xf]
      %v252 = vld [vmem:[%s220 + $0x34] sm:$0xf]
      %v253 = vld [vmem:[%s220 + $0x38] sm:$0xf]
      %v254 = vld [vmem:[%s220 + $0x3c] sm:$0xf]
      %v255 = vld [vmem:[%s220 + $0x40] sm:$0xf]
      %v256 = vld [vmem:[%s220 + $0x44] sm:$0xf]
      %v257 = vld [vmem:[%s220 + $0x48] sm:$0xf]
      %v258 = vld [vmem:[%s220 + $0x4c] sm:$0xf]
      %v259 = vld [vmem:[%s220 + $0x50] sm:$0xf]
      %v260 = vld [vmem:[%s220 + $0x54] sm:$0xf]
      %v261 = vld [vmem:[%s220 + $0x58] sm:$0xf]
      %v262 = vld [vmem:[%s220 + $0x5c] sm:$0xf]
      %v263 = vld [vmem:[%s220 + $0x60] sm:$0xf]
      %v264 = vld [vmem:[%s220 + $0x64] sm:$0xf]
      %v265 = vld [vmem:[%s220 + $0x68] sm:$0xf]
      %v266 = vld [vmem:[%s220 + $0x6c] sm:$0xf]
      %v267 = vld [vmem:[%s220 + $0x70] sm:$0xf]
      %v268 = vld [vmem:[%s220 + $0x74] sm:$0xf]
      %v269 = vld [vmem:[%s220 + $0x78] sm:$0xf]
      %v270 = vld [vmem:[%s220 + $0x7c] sm:$0xf]
      %v271 = vld [vmem:[%s220 + $0x80] sm:$0xf]
      %v272 = vld [vmem:[%s220 + $0x84] sm:$0xf]
      %v273 = vld [vmem:[%s220 + $0x88] sm:$0xf]
      %v274 = vld [vmem:[%s220 + $0x8c] sm:$0xf]
      %v275 = vld [vmem:[%s220 + $0x90] sm:$0xf]
      %v276 = vld [vmem:[%s220 + $0x94] sm:$0xf]
      %v277 = vld [vmem:[%s220 + $0x98] sm:$0xf]
      %v278 = vld [vmem:[%s220 + $0x9c] sm:$0xf]
      %v279 = vld [vmem:[%s220 + $0xa0] sm:$0xf]
      %v280 = vld [vmem:[%s220 + $0xa4] sm:$0xf]
      %v281 = vld [vmem:[%s220 + $0xa8] sm:$0xf]
      %v282 = vld [vmem:[%s220 + $0xac] sm:$0xf]
      %v283 = vld [vmem:[%s220 + $0xb0] sm:$0xf]
      %v284 = vld [vmem:[%s220 + $0xb4] sm:$0xf]
      %v285 = vld [vmem:[%s220 + $0xb8] sm:$0xf]
      %v286 = vld [vmem:[%s220 + $0xbc] sm:$0xf]
      %v287 = vld [vmem:[%s220 + $0xc0] sm:$0xf]
      %v288 = vld [vmem:[%s220 + $0xc4] sm:$0xf]
      %v289 = vld [vmem:[%s220 + $0xc8] sm:$0xf]
      %v290 = vld [vmem:[%s220 + $0xcc] sm:$0xf]
      %v291 = vld [vmem:[%s220 + $0xd0] sm:$0xf]
      %v292 = vld [vmem:[%s220 + $0xd4] sm:$0xf]
      %v293 = vld [vmem:[%s220 + $0xd8] sm:$0xf]
      %v294 = vld [vmem:[%s220 + $0xdc] sm:$0xf]
      %v295 = vld [vmem:[%s220 + $0xe0] sm:$0xf]
      %v296 = vld [vmem:[%s220 + $0xe4] sm:$0xf]
      %v297 = vld [vmem:[%s220 + $0xe8] sm:$0xf]
      %v298 = vld [vmem:[%s220 + $0xec] sm:$0xf]
      %v299 = vld [vmem:[%s220 + $0xf0] sm:$0xf]
      %v300 = vld [vmem:[%s220 + $0xf4] sm:$0xf]
      %v301 = vld [vmem:[%s220 + $0xf8] sm:$0xf]
      %v302 = vld [vmem:[%s220 + $0xfc] sm:$0xf]
      %v305 = vunpack.c.l.b16 %v237
      %v306 = vunpack.c.h.b16 %v237
      %v307 = vunpack.c.l.b16 %v238
      %v308 = vunpack.c.h.b16 %v238
      %v309 = vpack.c.b16 %v305, %v305
      %v310 = vpack.c.b16 %v306, %v306
      %v311 = vpack.c.b16 %v307, %v307
      %v312 = vpack.c.b16 %v308, %v308
      %v381 = vunpack.c.l.b16 %v239
      %v382 = vunpack.c.l.b16 %v240
      %v383 = vunpack.c.l.b16 %v241
      %v384 = vunpack.c.l.b16 %v242
      %v385 = vunpack.c.l.b16 %v243
      %v386 = vunpack.c.l.b16 %v244
      %v387 = vunpack.c.l.b16 %v245
      %v388 = vunpack.c.l.b16 %v246
      %v389 = vunpack.c.l.b16 %v247
      %v390 = vunpack.c.l.b16 %v248
      %v391 = vunpack.c.l.b16 %v249
      %v392 = vunpack.c.l.b16 %v250
      %v393 = vunpack.c.l.b16 %v251
      %v394 = vunpack.c.l.b16 %v252
      %v395 = vunpack.c.l.b16 %v253
      %v396 = vunpack.c.l.b16 %v254
      %v397 = vunpack.c.l.b16 %v255
      %v398 = vunpack.c.l.b16 %v256
      %v399 = vunpack.c.l.b16 %v257
      %v400 = vunpack.c.l.b16 %v258
      %v401 = vunpack.c.l.b16 %v259
      %v402 = vunpack.c.l.b16 %v260
      %v403 = vunpack.c.l.b16 %v261
      %v404 = vunpack.c.l.b16 %v262
      %v405 = vunpack.c.l.b16 %v263
      %v406 = vunpack.c.l.b16 %v264
      %v407 = vunpack.c.l.b16 %v265
      %v408 = vunpack.c.l.b16 %v266
      %v409 = vunpack.c.l.b16 %v267
      %v410 = vunpack.c.l.b16 %v268
      %v411 = vunpack.c.l.b16 %v269
      %v412 = vunpack.c.l.b16 %v270
      %v413 = vunpack.c.l.b16 %v271
      %v414 = vunpack.c.l.b16 %v272
      %v415 = vunpack.c.l.b16 %v273
      %v416 = vunpack.c.l.b16 %v274
      %v417 = vunpack.c.l.b16 %v275
      %v418 = vunpack.c.l.b16 %v276
      %v419 = vunpack.c.l.b16 %v277
      %v420 = vunpack.c.l.b16 %v278
      %v421 = vunpack.c.l.b16 %v279
      %v422 = vunpack.c.l.b16 %v280
      %v423 = vunpack.c.l.b16 %v281
      %v424 = vunpack.c.l.b16 %v282
      %v425 = vunpack.c.l.b16 %v283
      %v426 = vunpack.c.l.b16 %v284
      %v427 = vunpack.c.l.b16 %v285
      %v428 = vunpack.c.l.b16 %v286
      %v429 = vunpack.c.l.b16 %v287
      %v430 = vunpack.c.l.b16 %v288
      %v431 = vunpack.c.l.b16 %v289
      %v432 = vunpack.c.l.b16 %v290
      %v433 = vunpack.c.l.b16 %v291
      %v434 = vunpack.c.l.b16 %v292
      %v435 = vunpack.c.l.b16 %v293
      %v436 = vunpack.c.l.b16 %v294
      %v437 = vunpack.c.l.b16 %v295
      %v438 = vunpack.c.l.b16 %v296
      %v439 = vunpack.c.l.b16 %v297
      %v440 = vunpack.c.l.b16 %v298
      %v441 = vunpack.c.l.b16 %v299
      %v442 = vunpack.c.l.b16 %v300
      %v443 = vunpack.c.l.b16 %v301
      %v444 = vunpack.c.l.b16 %v302
      %v445 = vpack.c.b16 %v382, %v381
      %v446 = vpack.c.b16 %v384, %v383
      %v447 = vpack.c.b16 %v386, %v385
      %v448 = vpack.c.b16 %v388, %v387
      %v449 = vpack.c.b16 %v390, %v389
      %v450 = vpack.c.b16 %v392, %v391
      %v451 = vpack.c.b16 %v394, %v393
      %v452 = vpack.c.b16 %v396, %v395
      %v453 = vpack.c.b16 %v398, %v397
      %v454 = vpack.c.b16 %v400, %v399
      %v455 = vpack.c.b16 %v402, %v401
      %v456 = vpack.c.b16 %v404, %v403
      %v457 = vpack.c.b16 %v406, %v405
      %v458 = vpack.c.b16 %v408, %v407
      %v459 = vpack.c.b16 %v410, %v409
      %v460 = vpack.c.b16 %v412, %v411
      %v461 = vpack.c.b16 %v414, %v413
      %v462 = vpack.c.b16 %v416, %v415
      %v463 = vpack.c.b16 %v418, %v417
      %v464 = vpack.c.b16 %v420, %v419
      %v465 = vpack.c.b16 %v422, %v421
      %v466 = vpack.c.b16 %v424, %v423
      %v467 = vpack.c.b16 %v426, %v425
      %v468 = vpack.c.b16 %v428, %v427
      %v469 = vpack.c.b16 %v430, %v429
      %v470 = vpack.c.b16 %v432, %v431
      %v471 = vpack.c.b16 %v434, %v433
      %v472 = vpack.c.b16 %v436, %v435
      %v473 = vpack.c.b16 %v438, %v437
      %v474 = vpack.c.b16 %v440, %v439
      %v475 = vpack.c.b16 %v442, %v441
      %v476 = vpack.c.b16 %v444, %v443
      %509 = vmatprep.subr.bf16.mxu0 0
      %510 = vmatpush1.bf16.msra.mxu0 %v452
      %511 = vmatprep.subr.bf16.mxu0 0
      %512 = vmatpush1.bf16.msra.mxu0 %v451
      %513 = vmatprep.subr.bf16.mxu0 0
      %514 = vmatpush1.bf16.msra.mxu0 %v450
      %515 = vmatprep.subr.bf16.mxu0 0
      %516 = vmatpush1.bf16.msra.mxu0 %v449
      %517 = vmatprep.subr.bf16.mxu0 0
      %518 = vmatpush1.bf16.msra.mxu0 %v448
      %519 = vmatprep.subr.bf16.mxu0 0
      %520 = vmatpush1.bf16.msra.mxu0 %v447
      %521 = vmatprep.subr.bf16.mxu0 0
      %522 = vmatpush1.bf16.msra.mxu0 %v446
      %523 = vmatprep.subr.bf16.mxu0 0
      %524 = vmatpush1.bf16.msra.mxu0 %v445
      %525 = vmatprep.subr.bf16.mxu0 0
      %526 = vmatpush2.bf16.msra.mxu0 %v460
      %527 = vmatprep.subr.bf16.mxu0 0
      %528 = vmatpush2.bf16.msra.mxu0 %v459
      %529 = vmatprep.subr.bf16.mxu0 0
      %530 = vmatpush2.bf16.msra.mxu0 %v458
      %531 = vmatprep.subr.bf16.mxu0 0
      %532 = vmatpush2.bf16.msra.mxu0 %v457
      %533 = vmatprep.subr.bf16.mxu0 0
      %534 = vmatpush2.bf16.msra.mxu0 %v456
      %535 = vmatprep.subr.bf16.mxu0 0
      %536 = vmatpush2.bf16.msra.mxu0 %v455
      %537 = vmatprep.subr.bf16.mxu0 0
      %538 = vmatpush2.bf16.msra.mxu0 %v454
      %539 = vmatprep.subr.bf16.mxu0 0
      %540 = vmatpush2.bf16.msra.mxu0 %v453
      %541 = vmatprep.mubr.bf16.mxu0 %v310
      %542 = vmatmul.mubr.bf16.gmra.mxu0 %v309
      %v543 = vpop.f32.mrf.mxu0
      %v544 = vadd.f32 0.0, %v543
      %v545 = vpop.f32.mrf.mxu0
      %v546 = vpop.f32.mrf.mxu0
      %v547 = vpop.f32.mrf.mxu0
      %548 = vdwg.mxu0
      %549 = vmatprep.subr.bf16.mxu0 0
      %550 = vmatpush1.bf16.msra.mxu0 %v468
      %551 = vmatprep.subr.bf16.mxu0 0
      %552 = vmatpush1.bf16.msra.mxu0 %v467
      %553 = vmatprep.subr.bf16.mxu0 0
      %554 = vmatpush1.bf16.msra.mxu0 %v466
      %555 = vmatprep.subr.bf16.mxu0 0
      %556 = vmatpush1.bf16.msra.mxu0 %v465
      %557 = vmatprep.subr.bf16.mxu0 0
      %558 = vmatpush1.bf16.msra.mxu0 %v464
      %559 = vmatprep.subr.bf16.mxu0 0
      %560 = vmatpush1.bf16.msra.mxu0 %v463
      %561 = vmatprep.subr.bf16.mxu0 0
      %562 = vmatpush1.bf16.msra.mxu0 %v462
      %563 = vmatprep.subr.bf16.mxu0 0
      %564 = vmatpush1.bf16.msra.mxu0 %v461
      %565 = vmatprep.subr.bf16.mxu0 0
      %566 = vmatpush2.bf16.msra.mxu0 %v476
      %567 = vmatprep.subr.bf16.mxu0 0
      %568 = vmatpush2.bf16.msra.mxu0 %v475
      %569 = vmatprep.subr.bf16.mxu0 0
      %570 = vmatpush2.bf16.msra.mxu0 %v474
      %571 = vmatprep.subr.bf16.mxu0 0
      %572 = vmatpush2.bf16.msra.mxu0 %v473
      %573 = vmatprep.subr.bf16.mxu0 0
      %574 = vmatpush2.bf16.msra.mxu0 %v472
      %575 = vmatprep.subr.bf16.mxu0 0
      %576 = vmatpush2.bf16.msra.mxu0 %v471
      %577 = vmatprep.subr.bf16.mxu0 0
      %578 = vmatpush2.bf16.msra.mxu0 %v470
      %579 = vmatprep.subr.bf16.mxu0 0
      %580 = vmatpush2.bf16.msra.mxu0 %v469
      %581 = vmatprep.mubr.bf16.mxu0 %v312
      %582 = vmatmul.mubr.bf16.gmra.mxu0 %v311
      %v583 = vpop.f32.mrf.mxu0
      %v584 = vadd.f32 %v544, %v583
      %v585 = vpop.f32.mrf.mxu0
      %v586 = vpop.f32.mrf.mxu0
      %v587 = vpop.f32.mrf.mxu0
      %588 = vdwg.mxu0
      %v589 = vadd.f32 %v236, %v584
      %590 = vst [vmem:[%s225] sm:$0xff] %v589
      %p591 = scmp.eq.s32.totalorder %s20, 85
      // Predicated region
      $region33: #{forward.20} parent=27 // pred_check
        %p592 = pneg %p591
      $region34: #{forward.20} parent=27 // pred_check_branch
        %594 = sbr.rel (%p592) target = $region36
      $region35: #{forward.20} parent=27 // pred_region
        %v595 = vld [vmem:[%s225] sm:$0xff]
        %v596 = vrot.slane %v595, 4
        %v597 = vadd.f32 %v595, %v596
        %v598 = vrot.slane %v597, 2
        %v599 = vadd.f32 %v597, %v598
        %v600 = vrot.slane %v599, 1
        %v601 = vadd.f32 %v599, %v600
        %602 = vst [vmem:[%s229] sm:$0x1] %v601
        %v603 = vmul.f32 %v595, %v595
        %v604 = vrot.slane %v603, 4
        %v605 = vadd.f32 %v603, %v604
        %v606 = vrot.slane %v605, 2
        %v607 = vadd.f32 %v605, %v606
        %v608 = vrot.slane %v607, 1
        %v609 = vadd.f32 %v607, %v608
        %610 = vst [vmem:[%s229 + $0x1] sm:$0x1] %v609
        %611 = vst [vmem:[%s229 + $0x2] sm:$0x3f] 0.0
      $region36: #{forward.20} parent=27 // pred_fallthru
        _
      %p612 = scmp.lt.s32.totalorder %s19, 0
      %s613 = scalar_select %p612, %s19, 0
      %s614 = smul.addr %s613, 8
      %s615 = scalar_lea.vmem %s2, %s614
      %p616 = scmp.lt.s32.totalorder %s19, 0
      %s617 = scalar_select %p616, %s19, 0
      %s618 = smul.addr %s617, 8
      %s619 = scalar_lea.vmem %s3, %s618
      // Predicated region
      $region37: #{forward.20} parent=27 // pred_check
        %p620 = pneg %p99
      $region38: #{forward.20} parent=27 // pred_check_branch
        %622 = sbr.rel (%p620) target = $region40
      $region39: #{forward.20} parent=27 // pred_region
        _
      $region40: #{forward.20} parent=27 // pred_fallthru
        _
      // Predicated region
      $region41: #{forward.20} parent=27 // pred_check
        %p623 = pneg %p125
      $region42: #{forward.20} parent=27 // pred_check_branch
        %625 = sbr.rel (%p623) target = $region44
      $region43: #{forward.20} parent=27 // pred_region
        _
      $region44: #{forward.20} parent=27 // pred_fallthru
        _
      // Predicated region
      $region45: #{forward.20} parent=27 // pred_check
        %p626 = pneg %p99
      $region46: #{forward.20} parent=27 // pred_check_branch
        %628 = sbr.rel (%p626) target = $region48
      $region47: #{forward.20} parent=27 // pred_region
        %p629 = scmp.lt.s32.totalorder %s19, 0
        %s630 = scalar_select %p629, %s19, 0
        %s631 = smul.addr %s630, 8
        %s632 = scalar_lea.vmem %s2, %s631
      $region48: #{forward.20} parent=27 // pred_fallthru
        _
      // Predicated region
      $region49: #{forward.20} parent=27 // pred_check
        %p633 = pneg %p125
      $region50: #{forward.20} parent=27 // pred_check_branch
        %635 = sbr.rel (%p633) target = $region52
      $region51: #{forward.20} parent=27 // pred_region
        %p636 = scmp.lt.s32.totalorder %s19, 0
        %s637 = scalar_select %p636, %s19, 0
        %s638 = smul.addr %s637, 8
        %s639 = scalar_lea.vmem %s3, %s638
      $region52: #{forward.20} parent=27 // pred_fallthru
        _
    $region28: #{forward.20} parent=5 // pred_fallthru
      _
    %p640 = scmp.le.s32.totalorder 2, %s10
    // Predicated region
    $region53: #{forward.20} parent=5 // pred_check
      %p641 = pneg %p640
    $region54: #{forward.20} parent=5 // pred_check_branch
      %643 = sbr.rel (%p641) target = $region56
    $region55: #{forward.20} parent=5 // pred_region
      %s644 = ssub.s32 %s10, 2
    $region56: #{forward.20} parent=5 // pred_fallthru
      _
  $region6: #{forward.20} parent=0 // loop_footer
    %s14 = sadd.s32 1, %s10
  $region7: #{forward.20} parent=0 // loop_footer_branch
    %9 = sbr.rel target = $region3
  $region8: #{forward.20} parent=0 // loop_exit
    _

// kernel: forward.23
$region0: #{forward.23}
  #allocation0 [shape = 'u32[]', space=smem, size = 0x4, offset = 0x4, fixed_abs, tag = 'smem constant byte address 0x4 - core index']
  #allocation1 [shape = 'u32[144,128]{1,0:T(1,128)}', space=vmem, size = 0x12000, scoped, tag = 'internal scratch']
  %s0 = inlined_call_operand.vmem [shape: f32[8,128], index: 0, kind: input, shape index: {}]
  %s1 = inlined_call_operand.vmem [shape: f32[1,128], index: 1, kind: input, shape index: {}]
  %s2 = inlined_call_operand.vmem [shape: f32[1,128], index: 2, kind: input, shape index: {}]
  %s3 = inlined_call_operand.vmem [shape: bf16[8,128], index: 3, kind: output, shape index: {}]
  %s4 = sld [smem:[#allocation0]]
  $region22: #{forward.23} parent=0
    _
  %s6 = ssub.s32 1, %s4
  %s7 = scalar_select 0, %s6, %s4
  // Predicated region
  $region2: #{forward.23} parent=0 // pred_check
    _
  $region3: #{forward.23} parent=0 // pred_check_branch
    %9 = sbr.rel (0) target = $region5
  $region4: #{forward.23} parent=0 // pred_region
    _
  $region5: #{forward.23} parent=0 // pred_fallthru
    _
  // Predicated region
  $region6: #{forward.23} parent=0 // pred_check
    _
  $region7: #{forward.23} parent=0 // pred_check_branch
    %11 = sbr.rel (0) target = $region9
  $region8: #{forward.23} parent=0 // pred_region
    _
  $region9: #{forward.23} parent=0 // pred_fallthru
    _
  // Predicated region
  $region10: #{forward.23} parent=0 // pred_check
    _
  $region11: #{forward.23} parent=0 // pred_check_branch
    %13 = sbr.rel (0) target = $region13
  $region12: #{forward.23} parent=0 // pred_region
    _
  $region13: #{forward.23} parent=0 // pred_fallthru
    _
  %v14 = vld [vmem:[%s0] sm:$0xff]
  %v15 = vld [vmem:[%s1] sm:$0x1]
  %v17 = vlaneseq
  %v18 = vshrl.u32 %v17, 7
  %v19 = vsub.s32 0, %v18
  %v20 = vrot.slane %v15, %v19
  %v22 = vmul.f32 %v14, %v20
  %v23 = vld [vmem:[%s2] sm:$0x1]
  %v25 = vlaneseq
  %v26 = vshrl.u32 %v25, 7
  %v27 = vsub.s32 0, %v26
  %v28 = vrot.slane %v23, %v27
  %v30 = vadd.f32 %v22, %v28
  %v31 = vpack.c.bf16 %v30, %v30
  %32 = vst [vmem:[%s3] sm:$0xf] %v31
  // Predicated region
  $region14: #{forward.23} parent=0 // pred_check
    _
  $region15: #{forward.23} parent=0 // pred_check_branch
    %34 = sbr.rel (0) target = $region17
  $region16: #{forward.23} parent=0 // pred_region
    _
  $region17: #{forward.23} parent=0 // pred_fallthru
    _
  // Predicated region
  $region18: #{forward.23} parent=0 // pred_check
    _
  $region19: #{forward.23} parent=0 // pred_check_branch
    %36 = sbr.rel (0) target = $region21
  $region20: #{forward.23} parent=0 // pred_region
    _
  $region21: #{forward.23} parent=0 // pred_fallthru
    _

</llo_original>
